<compile_context>
chip_gen: v7x
topology: tpu7x:2x2x1
jax: 0.10.0
libtpu: 0.0.40
codegen_flags: <defaults>
</compile_context>

<pallas_src>
import functools
import math

import jax
import jax.numpy as jnp
from jax.experimental import pallas as pl
from jax.experimental.pallas import tpu as pltpu


# ----------------------------- in-kernel helpers -----------------------------

def _erf(x):
    # Abramowitz & Stegun 7.1.26 polynomial approximation of erf.
    a1, a2, a3, a4, a5 = 0.254829592, -0.284496736, 1.421413741, -1.453152027, 1.061405429
    p = 0.3275911
    s = jnp.where(x < 0.0, -1.0, 1.0)
    ax = jnp.abs(x)
    t = pl.reciprocal(1.0 + p * ax, approx=True)     # EUP, frees VALU slot
    poly = ((((a5 * t + a4) * t + a3) * t + a2) * t + a1) * t
    return s * (1.0 - poly * jnp.exp(-ax * ax))


def _gelu_exact(x):
    return 0.5 * x * (1.0 + _erf(x * (1.0 / math.sqrt(2.0))))


def _layernorm(x, w, b, eps=1e-5):
    # One pass over the lane axis: sum and sum-of-squares.
    n = x.shape[-1]
    s = jnp.sum(x, axis=-1, keepdims=True)
    ss = jnp.sum(x * x, axis=-1, keepdims=True)
    mu = s * (1.0 / n)
    var = jnp.maximum(ss * (1.0 / n) - mu * mu, 0.0)
    return (x - mu) * jax.lax.rsqrt(var + eps) * w + b


def _entropy_rows(logits):
    # Row-wise softmax entropy from one pass over z = logits - max.
    m = jnp.max(logits, axis=-1, keepdims=True)
    z = logits - m
    e = jnp.exp(z)
    s = jnp.sum(e, axis=-1, keepdims=True)
    inv_s = pl.reciprocal(s, approx=True)
    return jnp.log(s) - jnp.sum(e * z, axis=-1, keepdims=True) * inv_s   # (rows, 1)


# ----------------------------- fused transformer blocks -----------------------------
# grid = (B, n_layer); one grid program processes one batch element for one layer.
# The running activation lives in a VMEM scratch across the layer axis.

def _blocks_kernel(n_head, t_seg,
                   x_ref,
                   ln1w_ref, ln1b_ref,
                   wqkv_ref, bqkv_ref,
                   wpr_ref, bpr_ref,
                   ln2w_ref, ln2b_ref,
                   wfc_ref, bfc_ref,
                   wpj_ref, bpj_ref,
                   out_ref,
                   act_scr):
    layer = pl.program_id(1)
    n_layer = pl.num_programs(1)

    @pl.when(layer == 0)
    def _():
        act_scr[...] = x_ref[0]

    T, C = act_scr.shape
    hd = C // n_head
    scale = 1.0 / math.sqrt(hd)

    x = act_scr[...]                                        # (T, C) f32

    # ---- causal cross-conditional self-attention ----
    h = _layernorm(x, ln1w_ref[0], ln1b_ref[0]).astype(jnp.bfloat16)
    qkv = jnp.dot(h, wqkv_ref[0],
                  preferred_element_type=jnp.float32) + bqkv_ref[0]   # (T, 3C)

    # mask built on the fly: tril(t) tiled 3x3  <=>  (col % t) <= (row % t)
    row = jax.lax.broadcasted_iota(jnp.int32, (T, T), 0)
    col = jax.lax.broadcasted_iota(jnp.int32, (T, T), 1)
    allowed = (col % t_seg) <= (row % t_seg)

    attn_out = jnp.zeros((T, C), jnp.float32)
    for hh in range(n_head):                                # small static unroll over heads
        qs, ks, vs = hh * hd, C + hh * hd, 2 * C + hh * hd
        q_h = qkv[:, qs:qs + hd].astype(jnp.bfloat16)
        k_h = qkv[:, ks:ks + hd].astype(jnp.bfloat16)
        v_h = qkv[:, vs:vs + hd].astype(jnp.bfloat16)
        att = jax.lax.dot_general(q_h, k_h, (((1,), (1,)), ((), ())),
                                  preferred_element_type=jnp.float32) * scale
        att = jnp.where(allowed, att, -jnp.inf)
        att = jnp.exp(att - jnp.max(att, axis=-1, keepdims=True))
        att = att * pl.reciprocal(jnp.sum(att, axis=-1, keepdims=True), approx=True)
        y_h = jnp.dot(att.astype(jnp.bfloat16), v_h,
                      preferred_element_type=jnp.float32)    # (T, hd)
        # fold the output projection per head -> lane-dense (T, C) accumulation
        attn_out = attn_out + jnp.dot(y_h.astype(jnp.bfloat16), wpr_ref[0, hh],
                                      preferred_element_type=jnp.float32)

    x = x + attn_out + bpr_ref[0]

    # ---- MLP ----
    h2 = _layernorm(x, ln2w_ref[0], ln2b_ref[0]).astype(jnp.bfloat16)
    h2 = jnp.dot(h2, wfc_ref[0], preferred_element_type=jnp.float32) + bfc_ref[0]
    h2 = _gelu_exact(h2)
    h2 = jnp.dot(h2.astype(jnp.bfloat16), wpj_ref[0],
                 preferred_element_type=jnp.float32) + bpj_ref[0]
    x = x + h2

    act_scr[...] = x

    @pl.when(layer == n_layer - 1)
    def _():
        out_ref[0] = x


# ------------------------------- head + entropy -------------------------------
# grid = (B,); the t:2t / 2t:3t stream selection is done in the wrapper.

def _head_kernel(xup_ref, xdn_ref, lnfw_ref, lnfb_ref, wup_ref, wdn_ref,
                 lup_ref, ldn_ref, eup_ref, edn_ref):
    xu = _layernorm(xup_ref[0], lnfw_ref[...], lnfb_ref[...]).astype(jnp.bfloat16)
    xd = _layernorm(xdn_ref[0], lnfw_ref[...], lnfb_ref[...]).astype(jnp.bfloat16)

    l_up = jnp.dot(xu, wup_ref[...], preferred_element_type=jnp.float32)   # (t, Vup)
    l_dn = jnp.dot(xd, wdn_ref[...], preferred_element_type=jnp.float32)   # (t, Vdn)

    lup_ref[0] = l_up
    ldn_ref[0] = l_dn
    eup_ref[0] = _entropy_rows(l_up)
    edn_ref[0] = _entropy_rows(l_dn)


# --------------------------------- wrappers -----------------------------------

def init_params(key, cfg):
    C, L = cfg["n_embd"], cfg["n_layer"]
    H = cfg["n_head"]
    hd = C // H

    def lin(k, fan_in, fan_out):
        return jax.random.normal(k, (fan_in, fan_out), jnp.float32) * 0.02

    wqkv, wproj, wfc, wfc2 = [], [], [], []
    for _ in range(L):
        key, k1, k2, k3, k4, k5, k6 = jax.random.split(key, 7)
        # fused QKV: columns ordered [q | k | v], each head-major within a chunk
        wqkv.append(jnp.concatenate([lin(k1, C, C), lin(k2, C, C), lin(k3, C, C)], axis=1))
        # proj stored as (n_head, hd, C) so each head's slab is a leading-axis index
        wproj.append(lin(k4, C, C).reshape(H, hd, C))
        wfc.append(lin(k5, C, 4 * C))
        wfc2.append(lin(k6, 4 * C, C))
    key, ku, kd = jax.random.split(key, 3)

    params = dict(
        ln1_w=jnp.ones((L, 1, C), jnp.float32), ln1_b=jnp.zeros((L, 1, C), jnp.float32),
        w_qkv=jnp.stack(wqkv).astype(jnp.bfloat16),
        b_qkv=jnp.zeros((L, 1, 3 * C), jnp.float32),
        w_proj=jnp.stack(wproj).astype(jnp.bfloat16),
        b_proj=jnp.zeros((L, 1, C), jnp.float32),
        ln2_w=jnp.ones((L, 1, C), jnp.float32), ln2_b=jnp.zeros((L, 1, C), jnp.float32),
        w_fc=jnp.stack(wfc).astype(jnp.bfloat16),
        b_fc=jnp.zeros((L, 1, 4 * C), jnp.float32),
        w_fc2=jnp.stack(wfc2).astype(jnp.bfloat16),
        b_fc2=jnp.zeros((L, 1, C), jnp.float32),
        ln_f_w=jnp.ones((1, C), jnp.float32), ln_f_b=jnp.zeros((1, C), jnp.float32),
        w_up=lin(ku, C, cfg["vocab_size_up"]).astype(jnp.bfloat16),
        w_down=lin(kd, C, cfg["vocab_size_down"]).astype(jnp.bfloat16),
    )
    return params


def cross_cond_gpt_head_forward(params, x, n_head):
    B, T, C = x.shape
    t = T // 3
    L = params["w_qkv"].shape[0]
    H = n_head
    hd = C // H
    C4 = params["w_fc"].shape[2]

    cp = pltpu.CompilerParams(
        dimension_semantics=("parallel", "arbitrary"),
        vmem_limit_bytes=64 * 1024 * 1024)

    block_fn = pl.pallas_call(
        functools.partial(_blocks_kernel, n_head, t),
        out_shape=jax.ShapeDtypeStruct((B, T, C), jnp.float32),
        grid=(B, L),
        in_specs=[
            pl.BlockSpec((1, T, C), lambda b, l: (b, 0, 0)),          # x (fetched once per b)
            pl.BlockSpec((1, 1, C), lambda b, l: (l, 0, 0)),          # ln1_w
            pl.BlockSpec((1, 1, C), lambda b, l: (l, 0, 0)),          # ln1_b
            pl.BlockSpec((1, C, 3 * C), lambda b, l: (l, 0, 0)),      # w_qkv (bf16)
            pl.BlockSpec((1, 1, 3 * C), lambda b, l: (l, 0, 0)),      # b_qkv
            pl.BlockSpec((1, H, hd, C), lambda b, l: (l, 0, 0, 0)),   # w_proj (bf16, per-head slabs)
            pl.BlockSpec((1, 1, C), lambda b, l: (l, 0, 0)),          # b_proj
            pl.BlockSpec((1, 1, C), lambda b, l: (l, 0, 0)),          # ln2_w
            pl.BlockSpec((1, 1, C), lambda b, l: (l, 0, 0)),          # ln2_b
            pl.BlockSpec((1, C, C4), lambda b, l: (l, 0, 0)),         # w_fc (bf16)
            pl.BlockSpec((1, 1, C4), lambda b, l: (l, 0, 0)),         # b_fc
            pl.BlockSpec((1, C4, C), lambda b, l: (l, 0, 0)),         # w_fc2 (bf16)
            pl.BlockSpec((1, 1, C), lambda b, l: (l, 0, 0)),          # b_fc2
        ],
        out_specs=pl.BlockSpec((1, T, C), lambda b, l: (b, 0, 0)),
        scratch_shapes=[pltpu.VMEM((T, C), jnp.float32)],
        compiler_params=cp,
    )
    x = block_fn(x,
                 params["ln1_w"], params["ln1_b"],
                 params["w_qkv"], params["b_qkv"],
                 params["w_proj"], params["b_proj"],
                 params["ln2_w"], params["ln2_b"],
                 params["w_fc"], params["b_fc"],
                 params["w_fc2"], params["b_fc2"])

    # stream selection outside the kernel (cheap XLA slices)
    x_up = x[:, t:2 * t, :]
    x_dn = x[:, 2 * t:3 * t, :]
    v_up = params["w_up"].shape[1]
    v_dn = params["w_down"].shape[1]

    head_fn = pl.pallas_call(
        _head_kernel,
        out_shape=(jax.ShapeDtypeStruct((B, t, v_up), jnp.float32),
                   jax.ShapeDtypeStruct((B, t, v_dn), jnp.float32),
                   jax.ShapeDtypeStruct((B, t, 1), jnp.float32),
                   jax.ShapeDtypeStruct((B, t, 1), jnp.float32)),
        grid=(B,),
        in_specs=[
            pl.BlockSpec((1, t, C), lambda b: (b, 0, 0)),
            pl.BlockSpec((1, t, C), lambda b: (b, 0, 0)),
            pl.BlockSpec((1, C), lambda b: (0, 0)),
            pl.BlockSpec((1, C), lambda b: (0, 0)),
            pl.BlockSpec((C, v_up), lambda b: (0, 0)),
            pl.BlockSpec((C, v_dn), lambda b: (0, 0)),
        ],
        out_specs=(
            pl.BlockSpec((1, t, v_up), lambda b: (b, 0, 0)),
            pl.BlockSpec((1, t, v_dn), lambda b: (b, 0, 0)),
            pl.BlockSpec((1, t, 1), lambda b: (b, 0, 0)),
            pl.BlockSpec((1, t, 1), lambda b: (b, 0, 0)),
        ),
        compiler_params=pltpu.CompilerParams(
            dimension_semantics=("parallel",),
            vmem_limit_bytes=64 * 1024 * 1024),
    )
    logits_up, logits_down, ent_up, ent_dn = head_fn(
        x_up, x_dn, params["ln_f_w"], params["ln_f_b"],
        params["w_up"], params["w_down"])

    entropy_up = ent_up.reshape(B * t)
    entropy_down = ent_dn.reshape(B * t)
    # TODO(synk): cross-entropy loss branch (targets is not None) not implemented;
    # this reproduces the targets=None path where losses are returned as None.
    return logits_up, logits_down, None, None, entropy_up, entropy_down


# ----------------------------------- main --------------------------------------

if __name__ == "__main__":
    cfg = dict(n_layer=2, n_head=4, n_embd=32, block_size=24,
               vocab_size_up=16, vocab_size_down=24,
               attn_pdrop=0.1, resid_pdrop=0.1)
    key = jax.random.PRNGKey(0)
    kp, kx = jax.random.split(key)
    params = init_params(kp, cfg)

    B, T, C = 2, cfg["block_size"], cfg["n_embd"]   # T = 3 * t with t = 8
    x = jax.random.normal(kx, (B, T, C), jnp.float32)

    outs = cross_cond_gpt_head_forward(params, x, cfg["n_head"])
    jax.block_until_ready([o for o in outs if o is not None])
    print("KERNEL_OK")
</pallas_src>

<mosaic_0001>
module attributes {stable_mosaic.version = 11 : i64} {
  func.func @_blocks_kernel(%arg0: i32, %arg1: i32, %arg2: memref<1x24x32xf32, #tpu.memory_space<vmem>>, %arg3: memref<1x1x32xf32, #tpu.memory_space<vmem>>, %arg4: memref<1x1x32xf32, #tpu.memory_space<vmem>>, %arg5: memref<1x32x96xbf16, #tpu.memory_space<vmem>>, %arg6: memref<1x1x96xf32, #tpu.memory_space<vmem>>, %arg7: memref<1x4x8x32xbf16, #tpu.memory_space<vmem>>, %arg8: memref<1x1x32xf32, #tpu.memory_space<vmem>>, %arg9: memref<1x1x32xf32, #tpu.memory_space<vmem>>, %arg10: memref<1x1x32xf32, #tpu.memory_space<vmem>>, %arg11: memref<1x32x128xbf16, #tpu.memory_space<vmem>>, %arg12: memref<1x1x128xf32, #tpu.memory_space<vmem>>, %arg13: memref<1x128x32xbf16, #tpu.memory_space<vmem>>, %arg14: memref<1x1x32xf32, #tpu.memory_space<vmem>>, %arg15: memref<1x24x32xf32, #tpu.memory_space<vmem>>, %arg16: memref<24x32xf32, #tpu.memory_space<vmem>>) attributes {dimension_semantics = [#tpu.dimension_semantics<parallel>, #tpu.dimension_semantics<arbitrary>], iteration_bounds = array<i64: 2, 2>, scalar_prefetch = 0 : i64, scratch_operands = 1 : i64, tpu.core_type = #tpu.core_type<tc>, window_params = [{transform_indices = @transform_0, window_bounds = array<i64: 1, 24, 32>}, {transform_indices = @transform_1, window_bounds = array<i64: 1, 1, 32>}, {transform_indices = @transform_2, window_bounds = array<i64: 1, 1, 32>}, {transform_indices = @transform_3, window_bounds = array<i64: 1, 32, 96>}, {transform_indices = @transform_4, window_bounds = array<i64: 1, 1, 96>}, {transform_indices = @transform_5, window_bounds = array<i64: 1, 4, 8, 32>}, {transform_indices = @transform_6, window_bounds = array<i64: 1, 1, 32>}, {transform_indices = @transform_7, window_bounds = array<i64: 1, 1, 32>}, {transform_indices = @transform_8, window_bounds = array<i64: 1, 1, 32>}, {transform_indices = @transform_9, window_bounds = array<i64: 1, 32, 128>}, {transform_indices = @transform_10, window_bounds = array<i64: 1, 1, 128>}, {transform_indices = @transform_11, window_bounds = array<i64: 1, 128, 32>}, {transform_indices = @transform_12, window_bounds = array<i64: 1, 1, 32>}, {transform_indices = @transform_13, window_bounds = array<i64: 1, 24, 32>}]} {
    %c0_i32 = arith.constant 0 : i32
    %0 = arith.cmpi eq, %arg1, %c0_i32 : i32
    %1 = arith.extui %0 : i1 to i32
    %c0_i32_0 = arith.constant 0 : i32
    %2 = arith.cmpi ne, %1, %c0_i32_0 : i32
    scf.if %2 {
      %c0_120 = arith.constant 0 : index
      %c0_121 = arith.constant 0 : index
      %c0_122 = arith.constant 0 : index
      %282 = vector.load %arg2[%c0_120, %c0_121, %c0_122] : memref<1x24x32xf32, #tpu.memory_space<vmem>>, vector<1x24x32xf32>
      %283 = vector.shape_cast %282 : vector<1x24x32xf32> to vector<24x32xf32>
      %c0_123 = arith.constant 0 : index
      %c0_124 = arith.constant 0 : index
      %284 = vector.load %arg16[%c0_123, %c0_124] : memref<24x32xf32, #tpu.memory_space<vmem>>, vector<24x32xf32>
      tpu.vector_store %arg16[%c0_123, %c0_124], %283 {strides = array<i32>} : memref<24x32xf32, #tpu.memory_space<vmem>>, vector<24x32xf32>,
    } else {
    }
    %c0 = arith.constant 0 : index
    %c0_1 = arith.constant 0 : index
    %3 = vector.load %arg16[%c0, %c0_1] : memref<24x32xf32, #tpu.memory_space<vmem>>, vector<24x32xf32>
    %c0_2 = arith.constant 0 : index
    %c0_3 = arith.constant 0 : index
    %c0_4 = arith.constant 0 : index
    %4 = vector.load %arg3[%c0_2, %c0_3, %c0_4] : memref<1x1x32xf32, #tpu.memory_space<vmem>>, vector<1x1x32xf32>
    %5 = vector.shape_cast %4 : vector<1x1x32xf32> to vector<1x32xf32>
    %c0_5 = arith.constant 0 : index
    %c0_6 = arith.constant 0 : index
    %c0_7 = arith.constant 0 : index
    %6 = vector.load %arg4[%c0_5, %c0_6, %c0_7] : memref<1x1x32xf32, #tpu.memory_space<vmem>>, vector<1x1x32xf32>
    %7 = vector.shape_cast %6 : vector<1x1x32xf32> to vector<1x32xf32>
    %cst = arith.constant dense<0.000000e+00> : vector<24xf32>
    %8 = vector.multi_reduction <add>, %3, %cst [1] : vector<24x32xf32> to vector<24xf32>
    %9 = vector.shape_cast %8 : vector<24xf32> to vector<24x1xf32>
    %10 = arith.mulf %3, %3 : vector<24x32xf32>
    %cst_8 = arith.constant dense<0.000000e+00> : vector<24xf32>
    %11 = vector.multi_reduction <add>, %10, %cst_8 [1] : vector<24x32xf32> to vector<24xf32>
    %12 = vector.shape_cast %11 : vector<24xf32> to vector<24x1xf32>
    %cst_9 = arith.constant 3.125000e-02 : f32
    %13 = vector.broadcast %cst_9 : f32 to vector<24x1xf32>
    %14 = arith.mulf %9, %13 : vector<24x1xf32>
    %cst_10 = arith.constant 3.125000e-02 : f32
    %15 = vector.broadcast %cst_10 : f32 to vector<24x1xf32>
    %16 = arith.mulf %12, %15 : vector<24x1xf32>
    %17 = arith.mulf %14, %14 : vector<24x1xf32>
    %18 = arith.subf %16, %17 : vector<24x1xf32>
    %cst_11 = arith.constant 0.000000e+00 : f32
    %19 = vector.broadcast %cst_11 : f32 to vector<24x1xf32>
    %20 = arith.maximumf %18, %19 : vector<24x1xf32>
    %21 = vector.broadcast %14 : vector<24x1xf32> to vector<24x32xf32>
    %22 = arith.subf %3, %21 : vector<24x32xf32>
    %cst_12 = arith.constant 9.99999974E-6 : f32
    %23 = vector.broadcast %cst_12 : f32 to vector<24x1xf32>
    %24 = arith.addf %20, %23 : vector<24x1xf32>
    %25 = math.rsqrt %24 : vector<24x1xf32>
    %26 = vector.broadcast %25 : vector<24x1xf32> to vector<24x32xf32>
    %27 = arith.mulf %22, %26 : vector<24x32xf32>
    %28 = vector.broadcast %5 : vector<1x32xf32> to vector<24x32xf32>
    %29 = arith.mulf %27, %28 : vector<24x32xf32>
    %30 = vector.broadcast %7 : vector<1x32xf32> to vector<24x32xf32>
    %31 = arith.addf %29, %30 : vector<24x32xf32>
    %32 = arith.truncf %31 : vector<24x32xf32> to vector<24x32xbf16>
    %c0_13 = arith.constant 0 : index
    %c0_14 = arith.constant 0 : index
    %c0_15 = arith.constant 0 : index
    %33 = vector.load %arg5[%c0_13, %c0_14, %c0_15] : memref<1x32x96xbf16, #tpu.memory_space<vmem>>, vector<1x32x96xbf16>
    %34 = vector.shape_cast %33 : vector<1x32x96xbf16> to vector<32x96xbf16>
    %cst_16 = arith.constant dense<0.000000e+00> : vector<24x96xf32>
    %35 = tpu.matmul %32, %34, %cst_16 {dimension_numbers = #tpu.dot_dimension_numbers<[1], [0], [0], [1], [0, 0, 1, 1], [], []>} : vector<24x32xbf16>, vector<32x96xbf16>, vector<24x96xf32> -> vector<24x96xf32>
    %c0_17 = arith.constant 0 : index
    %c0_18 = arith.constant 0 : index
    %c0_19 = arith.constant 0 : index
    %36 = vector.load %arg6[%c0_17, %c0_18, %c0_19] : memref<1x1x96xf32, #tpu.memory_space<vmem>>, vector<1x1x96xf32>
    %37 = vector.shape_cast %36 : vector<1x1x96xf32> to vector<1x96xf32>
    %38 = vector.broadcast %37 : vector<1x96xf32> to vector<24x96xf32>
    %39 = arith.addf %35, %38 : vector<24x96xf32>
    %40 = tpu.iota {dimensions = array<i32: 0>} : vector<24x24xi32>
    %41 = tpu.iota {dimensions = array<i32: 1>} : vector<24x24xi32>
    %c8_i32 = arith.constant 8 : i32
    %c0_i32_20 = arith.constant 0 : i32
    %42 = arith.cmpi eq, %c8_i32, %c0_i32_20 : i32
    %c1_i32 = arith.constant 1 : i32
    %43 = arith.select %42, %c1_i32, %c8_i32 : i32
    %44 = vector.broadcast %43 : i32 to vector<24x24xi32>
    %45 = arith.remsi %41, %44 : vector<24x24xi32>
    %c0_i32_21 = arith.constant 0 : i32
    %46 = vector.broadcast %c0_i32_21 : i32 to vector<24x24xi32>
    %47 = arith.cmpi ne, %45, %46 : vector<24x24xi32>
    %c0_i32_22 = arith.constant 0 : i32
    %48 = vector.broadcast %c0_i32_22 : i32 to vector<24x24xi32>
    %49 = arith.cmpi slt, %45, %48 : vector<24x24xi32>
    %c0_i32_23 = arith.constant 0 : i32
    %50 = arith.cmpi slt, %43, %c0_i32_23 : i32
    %51 = vector.broadcast %50 : i1 to vector<24x24xi1>
    %52 = vector.broadcast %51 : vector<24x24xi1> to vector<24x24xi1>
    %53 = arith.xori %49, %52 : vector<24x24xi1>
    %54 = arith.andi %53, %47 : vector<24x24xi1>
    %55 = vector.broadcast %43 : i32 to vector<24x24xi32>
    %56 = arith.addi %45, %55 : vector<24x24xi32>
    %57 = arith.select %54, %56, %45 : vector<24x24xi1>, vector<24x24xi32>
    %c8_i32_24 = arith.constant 8 : i32
    %c0_i32_25 = arith.constant 0 : i32
    %58 = arith.cmpi eq, %c8_i32_24, %c0_i32_25 : i32
    %c1_i32_26 = arith.constant 1 : i32
    %59 = arith.select %58, %c1_i32_26, %c8_i32_24 : i32
    %60 = vector.broadcast %59 : i32 to vector<24x24xi32>
    %61 = arith.remsi %40, %60 : vector<24x24xi32>
    %c0_i32_27 = arith.constant 0 : i32
    %62 = vector.broadcast %c0_i32_27 : i32 to vector<24x24xi32>
    %63 = arith.cmpi ne, %61, %62 : vector<24x24xi32>
    %c0_i32_28 = arith.constant 0 : i32
    %64 = vector.broadcast %c0_i32_28 : i32 to vector<24x24xi32>
    %65 = arith.cmpi slt, %61, %64 : vector<24x24xi32>
    %c0_i32_29 = arith.constant 0 : i32
    %66 = arith.cmpi slt, %59, %c0_i32_29 : i32
    %67 = vector.broadcast %66 : i1 to vector<24x24xi1>
    %68 = vector.broadcast %67 : vector<24x24xi1> to vector<24x24xi1>
    %69 = arith.xori %65, %68 : vector<24x24xi1>
    %70 = arith.andi %69, %63 : vector<24x24xi1>
    %71 = vector.broadcast %59 : i32 to vector<24x24xi32>
    %72 = arith.addi %61, %71 : vector<24x24xi32>
    %73 = arith.select %70, %72, %61 : vector<24x24xi1>, vector<24x24xi32>
    %74 = arith.cmpi sle, %57, %73 : vector<24x24xi32>
    %cst_30 = arith.constant 0.000000e+00 : f32
    %75 = vector.broadcast %cst_30 : f32 to vector<24x32xf32>
    %76 = vector.extract_strided_slice %39 {offsets = [0, 0], sizes = [24, 8], strides = [1, 1]} : vector<24x96xf32> to vector<24x8xf32>
    %77 = arith.truncf %76 : vector<24x8xf32> to vector<24x8xbf16>
    %78 = vector.extract_strided_slice %39 {offsets = [0, 32], sizes = [24, 8], strides = [1, 1]} : vector<24x96xf32> to vector<24x8xf32>
    %79 = arith.truncf %78 : vector<24x8xf32> to vector<24x8xbf16>
    %80 = vector.extract_strided_slice %39 {offsets = [0, 64], sizes = [24, 8], strides = [1, 1]} : vector<24x96xf32> to vector<24x8xf32>
    %81 = arith.truncf %80 : vector<24x8xf32> to vector<24x8xbf16>
    %cst_31 = arith.constant dense<0.000000e+00> : vector<24x24xf32>
    %82 = tpu.matmul %77, %79, %cst_31 {dimension_numbers = #tpu.dot_dimension_numbers<[1], [1], [0], [0], [0, 0, 1, 0], [], []>} : vector<24x8xbf16>, vector<24x8xbf16>, vector<24x24xf32> -> vector<24x24xf32>
    %cst_32 = arith.constant 0.353553385 : f32
    %83 = vector.broadcast %cst_32 : f32 to vector<24x24xf32>
    %84 = arith.mulf %82, %83 : vector<24x24xf32>
    %cst_33 = arith.constant 0xFF800000 : f32
    %85 = vector.broadcast %cst_33 : f32 to vector<24x24xf32>
    %86 = arith.select %74, %84, %85 : vector<24x24xi1>, vector<24x24xf32>
    %cst_34 = arith.constant dense<0xFF800000> : vector<24xf32>
    %87 = vector.multi_reduction <maximumf>, %86, %cst_34 [1] : vector<24x24xf32> to vector<24xf32>
    %88 = vector.shape_cast %87 : vector<24xf32> to vector<24x1xf32>
    %89 = vector.broadcast %88 : vector<24x1xf32> to vector<24x24xf32>
    %90 = arith.subf %86, %89 : vector<24x24xf32>
    %91 = math.exp %90 : vector<24x24xf32>
    %cst_35 = arith.constant dense<0.000000e+00> : vector<24xf32>
    %92 = vector.multi_reduction <add>, %91, %cst_35 [1] : vector<24x24xf32> to vector<24xf32>
    %93 = vector.shape_cast %92 : vector<24xf32> to vector<24x1xf32>
    %94 = tpu.reciprocal %93 {approx = true} : vector<24x1xf32> -> vector<24x1xf32>
    %95 = vector.broadcast %94 : vector<24x1xf32> to vector<24x24xf32>
    %96 = arith.mulf %91, %95 : vector<24x24xf32>
    %97 = arith.truncf %96 : vector<24x24xf32> to vector<24x24xbf16>
    %cst_36 = arith.constant dense<0.000000e+00> : vector<24x8xf32>
    %98 = tpu.matmul %97, %81, %cst_36 {dimension_numbers = #tpu.dot_dimension_numbers<[1], [0], [0], [1], [0, 0, 1, 1], [], []>} : vector<24x24xbf16>, vector<24x8xbf16>, vector<24x8xf32> -> vector<24x8xf32>
    %99 = arith.truncf %98 : vector<24x8xf32> to vector<24x8xbf16>
    %c0_37 = arith.constant 0 : index
    %c0_38 = arith.constant 0 : index
    %c0_39 = arith.constant 0 : index
    %c0_40 = arith.constant 0 : index
    %100 = vector.load %arg7[%c0_37, %c0_38, %c0_39, %c0_40] : memref<1x4x8x32xbf16, #tpu.memory_space<vmem>>, vector<1x1x8x32xbf16>
    %101 = vector.shape_cast %100 : vector<1x1x8x32xbf16> to vector<8x32xbf16>
    %cst_41 = arith.constant dense<0.000000e+00> : vector<24x32xf32>
    %102 = tpu.matmul %99, %101, %cst_41 {dimension_numbers = #tpu.dot_dimension_numbers<[1], [0], [0], [1], [0, 0, 1, 1], [], []>} : vector<24x8xbf16>, vector<8x32xbf16>, vector<24x32xf32> -> vector<24x32xf32>
    %103 = arith.addf %75, %102 : vector<24x32xf32>
    %104 = vector.extract_strided_slice %39 {offsets = [0, 8], sizes = [24, 8], strides = [1, 1]} : vector<24x96xf32> to vector<24x8xf32>
    %105 = arith.truncf %104 : vector<24x8xf32> to vector<24x8xbf16>
    %106 = vector.extract_strided_slice %39 {offsets = [0, 40], sizes = [24, 8], strides = [1, 1]} : vector<24x96xf32> to vector<24x8xf32>
    %107 = arith.truncf %106 : vector<24x8xf32> to vector<24x8xbf16>
    %108 = vector.extract_strided_slice %39 {offsets = [0, 72], sizes = [24, 8], strides = [1, 1]} : vector<24x96xf32> to vector<24x8xf32>
    %109 = arith.truncf %108 : vector<24x8xf32> to vector<24x8xbf16>
    %cst_42 = arith.constant dense<0.000000e+00> : vector<24x24xf32>
    %110 = tpu.matmul %105, %107, %cst_42 {dimension_numbers = #tpu.dot_dimension_numbers<[1], [1], [0], [0], [0, 0, 1, 0], [], []>} : vector<24x8xbf16>, vector<24x8xbf16>, vector<24x24xf32> -> vector<24x24xf32>
    %cst_43 = arith.constant 0.353553385 : f32
    %111 = vector.broadcast %cst_43 : f32 to vector<24x24xf32>
    %112 = arith.mulf %110, %111 : vector<24x24xf32>
    %cst_44 = arith.constant 0xFF800000 : f32
    %113 = vector.broadcast %cst_44 : f32 to vector<24x24xf32>
    %114 = arith.select %74, %112, %113 : vector<24x24xi1>, vector<24x24xf32>
    %cst_45 = arith.constant dense<0xFF800000> : vector<24xf32>
    %115 = vector.multi_reduction <maximumf>, %114, %cst_45 [1] : vector<24x24xf32> to vector<24xf32>
    %116 = vector.shape_cast %115 : vector<24xf32> to vector<24x1xf32>
    %117 = vector.broadcast %116 : vector<24x1xf32> to vector<24x24xf32>
    %118 = arith.subf %114, %117 : vector<24x24xf32>
    %119 = math.exp %118 : vector<24x24xf32>
    %cst_46 = arith.constant dense<0.000000e+00> : vector<24xf32>
    %120 = vector.multi_reduction <add>, %119, %cst_46 [1] : vector<24x24xf32> to vector<24xf32>
    %121 = vector.shape_cast %120 : vector<24xf32> to vector<24x1xf32>
    %122 = tpu.reciprocal %121 {approx = true} : vector<24x1xf32> -> vector<24x1xf32>
    %123 = vector.broadcast %122 : vector<24x1xf32> to vector<24x24xf32>
    %124 = arith.mulf %119, %123 : vector<24x24xf32>
    %125 = arith.truncf %124 : vector<24x24xf32> to vector<24x24xbf16>
    %cst_47 = arith.constant dense<0.000000e+00> : vector<24x8xf32>
    %126 = tpu.matmul %125, %109, %cst_47 {dimension_numbers = #tpu.dot_dimension_numbers<[1], [0], [0], [1], [0, 0, 1, 1], [], []>} : vector<24x24xbf16>, vector<24x8xbf16>, vector<24x8xf32> -> vector<24x8xf32>
    %127 = arith.truncf %126 : vector<24x8xf32> to vector<24x8xbf16>
    %c0_48 = arith.constant 0 : index
    %c1 = arith.constant 1 : index
    %c0_49 = arith.constant 0 : index
    %c0_50 = arith.constant 0 : index
    %128 = vector.load %arg7[%c0_48, %c1, %c0_49, %c0_50] : memref<1x4x8x32xbf16, #tpu.memory_space<vmem>>, vector<1x1x8x32xbf16>
    %129 = vector.shape_cast %128 : vector<1x1x8x32xbf16> to vector<8x32xbf16>
    %cst_51 = arith.constant dense<0.000000e+00> : vector<24x32xf32>
    %130 = tpu.matmul %127, %129, %cst_51 {dimension_numbers = #tpu.dot_dimension_numbers<[1], [0], [0], [1], [0, 0, 1, 1], [], []>} : vector<24x8xbf16>, vector<8x32xbf16>, vector<24x32xf32> -> vector<24x32xf32>
    %131 = arith.addf %103, %130 : vector<24x32xf32>
    %132 = vector.extract_strided_slice %39 {offsets = [0, 16], sizes = [24, 8], strides = [1, 1]} : vector<24x96xf32> to vector<24x8xf32>
    %133 = arith.truncf %132 : vector<24x8xf32> to vector<24x8xbf16>
    %134 = vector.extract_strided_slice %39 {offsets = [0, 48], sizes = [24, 8], strides = [1, 1]} : vector<24x96xf32> to vector<24x8xf32>
    %135 = arith.truncf %134 : vector<24x8xf32> to vector<24x8xbf16>
    %136 = vector.extract_strided_slice %39 {offsets = [0, 80], sizes = [24, 8], strides = [1, 1]} : vector<24x96xf32> to vector<24x8xf32>
    %137 = arith.truncf %136 : vector<24x8xf32> to vector<24x8xbf16>
    %cst_52 = arith.constant dense<0.000000e+00> : vector<24x24xf32>
    %138 = tpu.matmul %133, %135, %cst_52 {dimension_numbers = #tpu.dot_dimension_numbers<[1], [1], [0], [0], [0, 0, 1, 0], [], []>} : vector<24x8xbf16>, vector<24x8xbf16>, vector<24x24xf32> -> vector<24x24xf32>
    %cst_53 = arith.constant 0.353553385 : f32
    %139 = vector.broadcast %cst_53 : f32 to vector<24x24xf32>
    %140 = arith.mulf %138, %139 : vector<24x24xf32>
    %cst_54 = arith.constant 0xFF800000 : f32
    %141 = vector.broadcast %cst_54 : f32 to vector<24x24xf32>
    %142 = arith.select %74, %140, %141 : vector<24x24xi1>, vector<24x24xf32>
    %cst_55 = arith.constant dense<0xFF800000> : vector<24xf32>
    %143 = vector.multi_reduction <maximumf>, %142, %cst_55 [1] : vector<24x24xf32> to vector<24xf32>
    %144 = vector.shape_cast %143 : vector<24xf32> to vector<24x1xf32>
    %145 = vector.broadcast %144 : vector<24x1xf32> to vector<24x24xf32>
    %146 = arith.subf %142, %145 : vector<24x24xf32>
    %147 = math.exp %146 : vector<24x24xf32>
    %cst_56 = arith.constant dense<0.000000e+00> : vector<24xf32>
    %148 = vector.multi_reduction <add>, %147, %cst_56 [1] : vector<24x24xf32> to vector<24xf32>
    %149 = vector.shape_cast %148 : vector<24xf32> to vector<24x1xf32>
    %150 = tpu.reciprocal %149 {approx = true} : vector<24x1xf32> -> vector<24x1xf32>
    %151 = vector.broadcast %150 : vector<24x1xf32> to vector<24x24xf32>
    %152 = arith.mulf %147, %151 : vector<24x24xf32>
    %153 = arith.truncf %152 : vector<24x24xf32> to vector<24x24xbf16>
    %cst_57 = arith.constant dense<0.000000e+00> : vector<24x8xf32>
    %154 = tpu.matmul %153, %137, %cst_57 {dimension_numbers = #tpu.dot_dimension_numbers<[1], [0], [0], [1], [0, 0, 1, 1], [], []>} : vector<24x24xbf16>, vector<24x8xbf16>, vector<24x8xf32> -> vector<24x8xf32>
    %155 = arith.truncf %154 : vector<24x8xf32> to vector<24x8xbf16>
    %c0_58 = arith.constant 0 : index
    %c2 = arith.constant 2 : index
    %c0_59 = arith.constant 0 : index
    %c0_60 = arith.constant 0 : index
    %156 = vector.load %arg7[%c0_58, %c2, %c0_59, %c0_60] : memref<1x4x8x32xbf16, #tpu.memory_space<vmem>>, vector<1x1x8x32xbf16>
    %157 = vector.shape_cast %156 : vector<1x1x8x32xbf16> to vector<8x32xbf16>
    %cst_61 = arith.constant dense<0.000000e+00> : vector<24x32xf32>
    %158 = tpu.matmul %155, %157, %cst_61 {dimension_numbers = #tpu.dot_dimension_numbers<[1], [0], [0], [1], [0, 0, 1, 1], [], []>} : vector<24x8xbf16>, vector<8x32xbf16>, vector<24x32xf32> -> vector<24x32xf32>
    %159 = arith.addf %131, %158 : vector<24x32xf32>
    %160 = vector.extract_strided_slice %39 {offsets = [0, 24], sizes = [24, 8], strides = [1, 1]} : vector<24x96xf32> to vector<24x8xf32>
    %161 = arith.truncf %160 : vector<24x8xf32> to vector<24x8xbf16>
    %162 = vector.extract_strided_slice %39 {offsets = [0, 56], sizes = [24, 8], strides = [1, 1]} : vector<24x96xf32> to vector<24x8xf32>
    %163 = arith.truncf %162 : vector<24x8xf32> to vector<24x8xbf16>
    %164 = vector.extract_strided_slice %39 {offsets = [0, 88], sizes = [24, 8], strides = [1, 1]} : vector<24x96xf32> to vector<24x8xf32>
    %165 = arith.truncf %164 : vector<24x8xf32> to vector<24x8xbf16>
    %cst_62 = arith.constant dense<0.000000e+00> : vector<24x24xf32>
    %166 = tpu.matmul %161, %163, %cst_62 {dimension_numbers = #tpu.dot_dimension_numbers<[1], [1], [0], [0], [0, 0, 1, 0], [], []>} : vector<24x8xbf16>, vector<24x8xbf16>, vector<24x24xf32> -> vector<24x24xf32>
    %cst_63 = arith.constant 0.353553385 : f32
    %167 = vector.broadcast %cst_63 : f32 to vector<24x24xf32>
    %168 = arith.mulf %166, %167 : vector<24x24xf32>
    %cst_64 = arith.constant 0xFF800000 : f32
    %169 = vector.broadcast %cst_64 : f32 to vector<24x24xf32>
    %170 = arith.select %74, %168, %169 : vector<24x24xi1>, vector<24x24xf32>
    %cst_65 = arith.constant dense<0xFF800000> : vector<24xf32>
    %171 = vector.multi_reduction <maximumf>, %170, %cst_65 [1] : vector<24x24xf32> to vector<24xf32>
    %172 = vector.shape_cast %171 : vector<24xf32> to vector<24x1xf32>
    %173 = vector.broadcast %172 : vector<24x1xf32> to vector<24x24xf32>
    %174 = arith.subf %170, %173 : vector<24x24xf32>
    %175 = math.exp %174 : vector<24x24xf32>
    %cst_66 = arith.constant dense<0.000000e+00> : vector<24xf32>
    %176 = vector.multi_reduction <add>, %175, %cst_66 [1] : vector<24x24xf32> to vector<24xf32>
    %177 = vector.shape_cast %176 : vector<24xf32> to vector<24x1xf32>
    %178 = tpu.reciprocal %177 {approx = true} : vector<24x1xf32> -> vector<24x1xf32>
    %179 = vector.broadcast %178 : vector<24x1xf32> to vector<24x24xf32>
    %180 = arith.mulf %175, %179 : vector<24x24xf32>
    %181 = arith.truncf %180 : vector<24x24xf32> to vector<24x24xbf16>
    %cst_67 = arith.constant dense<0.000000e+00> : vector<24x8xf32>
    %182 = tpu.matmul %181, %165, %cst_67 {dimension_numbers = #tpu.dot_dimension_numbers<[1], [0], [0], [1], [0, 0, 1, 1], [], []>} : vector<24x24xbf16>, vector<24x8xbf16>, vector<24x8xf32> -> vector<24x8xf32>
    %183 = arith.truncf %182 : vector<24x8xf32> to vector<24x8xbf16>
    %c0_68 = arith.constant 0 : index
    %c3 = arith.constant 3 : index
    %c0_69 = arith.constant 0 : index
    %c0_70 = arith.constant 0 : index
    %184 = vector.load %arg7[%c0_68, %c3, %c0_69, %c0_70] : memref<1x4x8x32xbf16, #tpu.memory_space<vmem>>, vector<1x1x8x32xbf16>
    %185 = vector.shape_cast %184 : vector<1x1x8x32xbf16> to vector<8x32xbf16>
    %cst_71 = arith.constant dense<0.000000e+00> : vector<24x32xf32>
    %186 = tpu.matmul %183, %185, %cst_71 {dimension_numbers = #tpu.dot_dimension_numbers<[1], [0], [0], [1], [0, 0, 1, 1], [], []>} : vector<24x8xbf16>, vector<8x32xbf16>, vector<24x32xf32> -> vector<24x32xf32>
    %187 = arith.addf %159, %186 : vector<24x32xf32>
    %188 = arith.addf %3, %187 : vector<24x32xf32>
    %c0_72 = arith.constant 0 : index
    %c0_73 = arith.constant 0 : index
    %c0_74 = arith.constant 0 : index
    %189 = vector.load %arg8[%c0_72, %c0_73, %c0_74] : memref<1x1x32xf32, #tpu.memory_space<vmem>>, vector<1x1x32xf32>
    %190 = vector.shape_cast %189 : vector<1x1x32xf32> to vector<1x32xf32>
    %191 = vector.broadcast %190 : vector<1x32xf32> to vector<24x32xf32>
    %192 = arith.addf %188, %191 : vector<24x32xf32>
    %c0_75 = arith.constant 0 : index
    %c0_76 = arith.constant 0 : index
    %c0_77 = arith.constant 0 : index
    %193 = vector.load %arg9[%c0_75, %c0_76, %c0_77] : memref<1x1x32xf32, #tpu.memory_space<vmem>>, vector<1x1x32xf32>
    %194 = vector.shape_cast %193 : vector<1x1x32xf32> to vector<1x32xf32>
    %c0_78 = arith.constant 0 : index
    %c0_79 = arith.constant 0 : index
    %c0_80 = arith.constant 0 : index
    %195 = vector.load %arg10[%c0_78, %c0_79, %c0_80] : memref<1x1x32xf32, #tpu.memory_space<vmem>>, vector<1x1x32xf32>
    %196 = vector.shape_cast %195 : vector<1x1x32xf32> to vector<1x32xf32>
    %cst_81 = arith.constant dense<0.000000e+00> : vector<24xf32>
    %197 = vector.multi_reduction <add>, %192, %cst_81 [1] : vector<24x32xf32> to vector<24xf32>
    %198 = vector.shape_cast %197 : vector<24xf32> to vector<24x1xf32>
    %199 = arith.mulf %192, %192 : vector<24x32xf32>
    %cst_82 = arith.constant dense<0.000000e+00> : vector<24xf32>
    %200 = vector.multi_reduction <add>, %199, %cst_82 [1] : vector<24x32xf32> to vector<24xf32>
    %201 = vector.shape_cast %200 : vector<24xf32> to vector<24x1xf32>
    %cst_83 = arith.constant 3.125000e-02 : f32
    %202 = vector.broadcast %cst_83 : f32 to vector<24x1xf32>
    %203 = arith.mulf %198, %202 : vector<24x1xf32>
    %cst_84 = arith.constant 3.125000e-02 : f32
    %204 = vector.broadcast %cst_84 : f32 to vector<24x1xf32>
    %205 = arith.mulf %201, %204 : vector<24x1xf32>
    %206 = arith.mulf %203, %203 : vector<24x1xf32>
    %207 = arith.subf %205, %206 : vector<24x1xf32>
    %cst_85 = arith.constant 0.000000e+00 : f32
    %208 = vector.broadcast %cst_85 : f32 to vector<24x1xf32>
    %209 = arith.maximumf %207, %208 : vector<24x1xf32>
    %210 = vector.broadcast %203 : vector<24x1xf32> to vector<24x32xf32>
    %211 = arith.subf %192, %210 : vector<24x32xf32>
    %cst_86 = arith.constant 9.99999974E-6 : f32
    %212 = vector.broadcast %cst_86 : f32 to vector<24x1xf32>
    %213 = arith.addf %209, %212 : vector<24x1xf32>
    %214 = math.rsqrt %213 : vector<24x1xf32>
    %215 = vector.broadcast %214 : vector<24x1xf32> to vector<24x32xf32>
    %216 = arith.mulf %211, %215 : vector<24x32xf32>
    %217 = vector.broadcast %194 : vector<1x32xf32> to vector<24x32xf32>
    %218 = arith.mulf %216, %217 : vector<24x32xf32>
    %219 = vector.broadcast %196 : vector<1x32xf32> to vector<24x32xf32>
    %220 = arith.addf %218, %219 : vector<24x32xf32>
    %221 = arith.truncf %220 : vector<24x32xf32> to vector<24x32xbf16>
    %c0_87 = arith.constant 0 : index
    %c0_88 = arith.constant 0 : index
    %c0_89 = arith.constant 0 : index
    %222 = vector.load %arg11[%c0_87, %c0_88, %c0_89] : memref<1x32x128xbf16, #tpu.memory_space<vmem>>, vector<1x32x128xbf16>
    %223 = vector.shape_cast %222 : vector<1x32x128xbf16> to vector<32x128xbf16>
    %cst_90 = arith.constant dense<0.000000e+00> : vector<24x128xf32>
    %224 = tpu.matmul %221, %223, %cst_90 {dimension_numbers = #tpu.dot_dimension_numbers<[1], [0], [0], [1], [0, 0, 1, 1], [], []>} : vector<24x32xbf16>, vector<32x128xbf16>, vector<24x128xf32> -> vector<24x128xf32>
    %c0_91 = arith.constant 0 : index
    %c0_92 = arith.constant 0 : index
    %c0_93 = arith.constant 0 : index
    %225 = vector.load %arg12[%c0_91, %c0_92, %c0_93] : memref<1x1x128xf32, #tpu.memory_space<vmem>>, vector<1x1x128xf32>
    %226 = vector.shape_cast %225 : vector<1x1x128xf32> to vector<1x128xf32>
    %227 = vector.broadcast %226 : vector<1x128xf32> to vector<24x128xf32>
    %228 = arith.addf %224, %227 : vector<24x128xf32>
    %cst_94 = arith.constant 5.000000e-01 : f32
    %229 = vector.broadcast %cst_94 : f32 to vector<24x128xf32>
    %230 = arith.mulf %229, %228 : vector<24x128xf32>
    %cst_95 = arith.constant 0.707106769 : f32
    %231 = vector.broadcast %cst_95 : f32 to vector<24x128xf32>
    %232 = arith.mulf %228, %231 : vector<24x128xf32>
    %cst_96 = arith.constant 0.000000e+00 : f32
    %233 = vector.broadcast %cst_96 : f32 to vector<24x128xf32>
    %234 = arith.cmpf olt, %232, %233 : vector<24x128xf32>
    %cst_97 = arith.constant -1.000000e+00 : f32
    %cst_98 = arith.constant 1.000000e+00 : f32
    %235 = vector.broadcast %cst_97 : f32 to vector<24x128xf32>
    %236 = vector.broadcast %cst_98 : f32 to vector<24x128xf32>
    %237 = arith.select %234, %235, %236 : vector<24x128xi1>, vector<24x128xf32>
    %238 = math.absf %232 : vector<24x128xf32>
    %cst_99 = arith.constant 0.327591091 : f32
    %239 = vector.broadcast %cst_99 : f32 to vector<24x128xf32>
    %240 = arith.mulf %239, %238 : vector<24x128xf32>
    %cst_100 = arith.constant 1.000000e+00 : f32
    %241 = vector.broadcast %cst_100 : f32 to vector<24x128xf32>
    %242 = arith.addf %241, %240 : vector<24x128xf32>
    %243 = tpu.reciprocal %242 {approx = true} : vector<24x128xf32> -> vector<24x128xf32>
    %cst_101 = arith.constant 1.06140542 : f32
    %244 = vector.broadcast %cst_101 : f32 to vector<24x128xf32>
    %245 = arith.mulf %244, %243 : vector<24x128xf32>
    %cst_102 = arith.constant -1.45315206 : f32
    %246 = vector.broadcast %cst_102 : f32 to vector<24x128xf32>
    %247 = arith.addf %245, %246 : vector<24x128xf32>
    %248 = arith.mulf %247, %243 : vector<24x128xf32>
    %cst_103 = arith.constant 1.42141378 : f32
    %249 = vector.broadcast %cst_103 : f32 to vector<24x128xf32>
    %250 = arith.addf %248, %249 : vector<24x128xf32>
    %251 = arith.mulf %250, %243 : vector<24x128xf32>
    %cst_104 = arith.constant -0.284496725 : f32
    %252 = vector.broadcast %cst_104 : f32 to vector<24x128xf32>
    %253 = arith.addf %251, %252 : vector<24x128xf32>
    %254 = arith.mulf %253, %243 : vector<24x128xf32>
    %cst_105 = arith.constant 0.254829586 : f32
    %255 = vector.broadcast %cst_105 : f32 to vector<24x128xf32>
    %256 = arith.addf %254, %255 : vector<24x128xf32>
    %257 = arith.mulf %256, %243 : vector<24x128xf32>
    %cst_106 = arith.constant 0.000000e+00 : f32
    %258 = vector.broadcast %cst_106 : f32 to vector<24x128xf32>
    %259 = arith.subf %258, %238 : vector<24x128xf32>
    %260 = arith.mulf %259, %238 : vector<24x128xf32>
    %261 = math.exp %260 : vector<24x128xf32>
    %262 = arith.mulf %257, %261 : vector<24x128xf32>
    %cst_107 = arith.constant 1.000000e+00 : f32
    %263 = vector.broadcast %cst_107 : f32 to vector<24x128xf32>
    %264 = arith.subf %263, %262 : vector<24x128xf32>
    %265 = arith.mulf %237, %264 : vector<24x128xf32>
    %cst_108 = arith.constant 1.000000e+00 : f32
    %266 = vector.broadcast %cst_108 : f32 to vector<24x128xf32>
    %267 = arith.addf %266, %265 : vector<24x128xf32>
    %268 = arith.mulf %230, %267 : vector<24x128xf32>
    %269 = arith.truncf %268 : vector<24x128xf32> to vector<24x128xbf16>
    %c0_109 = arith.constant 0 : index
    %c0_110 = arith.constant 0 : index
    %c0_111 = arith.constant 0 : index
    %270 = vector.load %arg13[%c0_109, %c0_110, %c0_111] : memref<1x128x32xbf16, #tpu.memory_space<vmem>>, vector<1x128x32xbf16>
    %271 = vector.shape_cast %270 : vector<1x128x32xbf16> to vector<128x32xbf16>
    %cst_112 = arith.constant dense<0.000000e+00> : vector<24x32xf32>
    %272 = tpu.matmul %269, %271, %cst_112 {dimension_numbers = #tpu.dot_dimension_numbers<[1], [0], [0], [1], [0, 0, 1, 1], [], []>} : vector<24x128xbf16>, vector<128x32xbf16>, vector<24x32xf32> -> vector<24x32xf32>
    %c0_113 = arith.constant 0 : index
    %c0_114 = arith.constant 0 : index
    %c0_115 = arith.constant 0 : index
    %273 = vector.load %arg14[%c0_113, %c0_114, %c0_115] : memref<1x1x32xf32, #tpu.memory_space<vmem>>, vector<1x1x32xf32>
    %274 = vector.shape_cast %273 : vector<1x1x32xf32> to vector<1x32xf32>
    %275 = vector.broadcast %274 : vector<1x32xf32> to vector<24x32xf32>
    %276 = arith.addf %272, %275 : vector<24x32xf32>
    %277 = arith.addf %192, %276 : vector<24x32xf32>
    %c0_116 = arith.constant 0 : index
    %c0_117 = arith.constant 0 : index
    %278 = vector.load %arg16[%c0_116, %c0_117] : memref<24x32xf32, #tpu.memory_space<vmem>>, vector<24x32xf32>
    tpu.vector_store %arg16[%c0_116, %c0_117], %277 {strides = array<i32>} : memref<24x32xf32, #tpu.memory_space<vmem>>, vector<24x32xf32>,
    %c1_i32_118 = arith.constant 1 : i32
    %279 = arith.cmpi eq, %arg1, %c1_i32_118 : i32
    %280 = arith.extui %279 : i1 to i32
    %c0_i32_119 = arith.constant 0 : i32
    %281 = arith.cmpi ne, %280, %c0_i32_119 : i32
    scf.if %281 {
      %c0_120 = arith.constant 0 : index
      %c0_121 = arith.constant 0 : index
      %c0_122 = arith.constant 0 : index
      %282 = vector.load %arg15[%c0_120, %c0_121, %c0_122] : memref<1x24x32xf32, #tpu.memory_space<vmem>>, vector<1x24x32xf32>
      %283 = vector.shape_cast %282 : vector<1x24x32xf32> to vector<24x32xf32>
      %284 = vector.shape_cast %277 : vector<24x32xf32> to vector<1x24x32xf32>
      tpu.vector_store %arg15[%c0_120, %c0_121, %c0_122], %284 {strides = array<i32>} : memref<1x24x32xf32, #tpu.memory_space<vmem>>, vector<1x24x32xf32>,
    } else {
    }
    return
  }
  func.func @transform_0(%arg0: i32, %arg1: i32) -> (i32, i32, i32) {
    %c0_i32 = arith.constant 0 : i32
    %c0_i32_0 = arith.constant 0 : i32
    %c0_i32_1 = arith.constant 0 : i32
    return %arg0, %c0_i32, %c0_i32_0 : i32, i32, i32
  }
  func.func @transform_1(%arg0: i32, %arg1: i32) -> (i32, i32, i32) {
    %c0_i32 = arith.constant 0 : i32
    %c0_i32_0 = arith.constant 0 : i32
    %c0_i32_1 = arith.constant 0 : i32
    return %arg1, %c0_i32, %c0_i32_0 : i32, i32, i32
  }
  func.func @transform_2(%arg0: i32, %arg1: i32) -> (i32, i32, i32) {
    %c0_i32 = arith.constant 0 : i32
    %c0_i32_0 = arith.constant 0 : i32
    %c0_i32_1 = arith.constant 0 : i32
    return %arg1, %c0_i32, %c0_i32_0 : i32, i32, i32
  }
  func.func @transform_3(%arg0: i32, %arg1: i32) -> (i32, i32, i32) {
    %c0_i32 = arith.constant 0 : i32
    %c0_i32_0 = arith.constant 0 : i32
    %c0_i32_1 = arith.constant 0 : i32
    return %arg1, %c0_i32, %c0_i32_0 : i32, i32, i32
  }
  func.func @transform_4(%arg0: i32, %arg1: i32) -> (i32, i32, i32) {
    %c0_i32 = arith.constant 0 : i32
    %c0_i32_0 = arith.constant 0 : i32
    %c0_i32_1 = arith.constant 0 : i32
    return %arg1, %c0_i32, %c0_i32_0 : i32, i32, i32
  }
  func.func @transform_5(%arg0: i32, %arg1: i32) -> (i32, i32, i32, i32) {
    %c0_i32 = arith.constant 0 : i32
    %c0_i32_0 = arith.constant 0 : i32
    %c0_i32_1 = arith.constant 0 : i32
    %c0_i32_2 = arith.constant 0 : i32
    return %arg1, %c0_i32, %c0_i32_0, %c0_i32_1 : i32, i32, i32, i32
  }
  func.func @transform_6(%arg0: i32, %arg1: i32) -> (i32, i32, i32) {
    %c0_i32 = arith.constant 0 : i32
    %c0_i32_0 = arith.constant 0 : i32
    %c0_i32_1 = arith.constant 0 : i32
    return %arg1, %c0_i32, %c0_i32_0 : i32, i32, i32
  }
  func.func @transform_7(%arg0: i32, %arg1: i32) -> (i32, i32, i32) {
    %c0_i32 = arith.constant 0 : i32
    %c0_i32_0 = arith.constant 0 : i32
    %c0_i32_1 = arith.constant 0 : i32
    return %arg1, %c0_i32, %c0_i32_0 : i32, i32, i32
  }
  func.func @transform_8(%arg0: i32, %arg1: i32) -> (i32, i32, i32) {
    %c0_i32 = arith.constant 0 : i32
    %c0_i32_0 = arith.constant 0 : i32
    %c0_i32_1 = arith.constant 0 : i32
    return %arg1, %c0_i32, %c0_i32_0 : i32, i32, i32
  }
  func.func @transform_9(%arg0: i32, %arg1: i32) -> (i32, i32, i32) {
    %c0_i32 = arith.constant 0 : i32
    %c0_i32_0 = arith.constant 0 : i32
    %c0_i32_1 = arith.constant 0 : i32
    return %arg1, %c0_i32, %c0_i32_0 : i32, i32, i32
  }
  func.func @transform_10(%arg0: i32, %arg1: i32) -> (i32, i32, i32) {
    %c0_i32 = arith.constant 0 : i32
    %c0_i32_0 = arith.constant 0 : i32
    %c0_i32_1 = arith.constant 0 : i32
    return %arg1, %c0_i32, %c0_i32_0 : i32, i32, i32
  }
  func.func @transform_11(%arg0: i32, %arg1: i32) -> (i32, i32, i32) {
    %c0_i32 = arith.constant 0 : i32
    %c0_i32_0 = arith.constant 0 : i32
    %c0_i32_1 = arith.constant 0 : i32
    return %arg1, %c0_i32, %c0_i32_0 : i32, i32, i32
  }
  func.func @transform_12(%arg0: i32, %arg1: i32) -> (i32, i32, i32) {
    %c0_i32 = arith.constant 0 : i32
    %c0_i32_0 = arith.constant 0 : i32
    %c0_i32_1 = arith.constant 0 : i32
    return %arg1, %c0_i32, %c0_i32_0 : i32, i32, i32
  }
  func.func @transform_13(%arg0: i32, %arg1: i32) -> (i32, i32, i32) {
    %c0_i32 = arith.constant 0 : i32
    %c0_i32_0 = arith.constant 0 : i32
    %c0_i32_1 = arith.constant 0 : i32
    return %arg0, %c0_i32, %c0_i32_0 : i32, i32, i32
  }
}

</mosaic_0001>

<llo_original>
// kernel: tpu_custom_call.1
$region0: #{tpu_custom_call.1}
  #allocation0 [shape = 'u32[]', space=smem, size = 0x4, offset = 0x4, fixed_abs, tag = 'smem constant byte address 0x4 - core index']
  #allocation1 [shape = 'u32[144,128]{1,0:T(1,128)}', space=vmem, size = 0x12000, scoped, tag = 'internal scratch']
  #allocation2 [shape = 'f32[24,32]{1,0:T(8,128)}', space=vmem, size = 0x3000, scoped, tag = 'scratch operand']
  %s0 = inlined_call_operand.hbm [shape: f32[2,24,32], index: 0, kind: input, shape index: {}]
  %s1 = inlined_call_operand.hbm [shape: f32[2,1,32], index: 1, kind: input, shape index: {}]
  %s2 = inlined_call_operand.hbm [shape: f32[2,1,32], index: 2, kind: input, shape index: {}]
  %s3 = inlined_call_operand.hbm [shape: bf16[2,32,96], index: 3, kind: input, shape index: {}]
  %s4 = inlined_call_operand.hbm [shape: f32[2,1,96], index: 4, kind: input, shape index: {}]
  %s5 = inlined_call_operand.hbm [shape: bf16[2,4,8,32], index: 5, kind: input, shape index: {}]
  %s6 = inlined_call_operand.hbm [shape: f32[2,1,32], index: 6, kind: input, shape index: {}]
  %s7 = inlined_call_operand.hbm [shape: f32[2,1,32], index: 7, kind: input, shape index: {}]
  %s8 = inlined_call_operand.hbm [shape: f32[2,1,32], index: 8, kind: input, shape index: {}]
  %s9 = inlined_call_operand.hbm [shape: bf16[2,32,128], index: 9, kind: input, shape index: {}]
  %s10 = inlined_call_operand.hbm [shape: f32[2,1,128], index: 10, kind: input, shape index: {}]
  %s11 = inlined_call_operand.hbm [shape: bf16[2,128,32], index: 11, kind: input, shape index: {}]
  %s12 = inlined_call_operand.hbm [shape: f32[2,1,32], index: 12, kind: input, shape index: {}]
  %s13 = inlined_call_operand.hbm [shape: f32[2,24,32], index: 13, kind: output, shape index: {}]
  %s14 = sld [smem:[#allocation0]]
  $region145: #{tpu_custom_call.1} parent=0
    _
  %s16 = ssub.s32 1, %s14
  %s17 = scalar_select 0, %s16, %s14
  $region1: #{tpu_custom_call.1} parent=0
    #allocation3 [shape = 'u8[24576]{0}', space=vmem, size = 0x6000, scoped, tag = 'input window, operand 0']
    #allocation4 [shape = 's32[2]{0}', space=sflag, size = 0x8, scoped, tag = 'scoped memory for tpu_custom_call.1']
    #allocation5 [shape = 's32[2]{0}', space=sflag, size = 0x8, scoped, tag = 'scoped memory for tpu_custom_call.1']
    #allocation6 [shape = 'u8[1024]{0}', space=vmem, size = 0x400, scoped, tag = 'input window, operand 1']
    #allocation7 [shape = 's32[2]{0}', space=sflag, size = 0x8, scoped, tag = 'scoped memory for tpu_custom_call.1']
    #allocation8 [shape = 'u8[1024]{0}', space=vmem, size = 0x400, scoped, tag = 'input window, operand 2']
    #allocation9 [shape = 'u8[16384]{0}', space=vmem, size = 0x4000, scoped, tag = 'input window, operand 3']
    #allocation10 [shape = 's32[2]{0}', space=sflag, size = 0x8, scoped, tag = 'scoped memory for tpu_custom_call.1']
    #allocation11 [shape = 'u8[1024]{0}', space=vmem, size = 0x400, scoped, tag = 'input window, operand 4']
    #allocation12 [shape = 'u8[16384]{0}', space=vmem, size = 0x4000, scoped, tag = 'input window, operand 5']
    #allocation13 [shape = 's32[2]{0}', space=sflag, size = 0x8, scoped, tag = 'scoped memory for tpu_custom_call.1']
    #allocation14 [shape = 'u8[1024]{0}', space=vmem, size = 0x400, scoped, tag = 'input window, operand 6']
    #allocation15 [shape = 'u8[1024]{0}', space=vmem, size = 0x400, scoped, tag = 'input window, operand 7']
    #allocation16 [shape = 's32[2]{0}', space=sflag, size = 0x8, scoped, tag = 'scoped memory for tpu_custom_call.1']
    #allocation17 [shape = 'u8[1024]{0}', space=vmem, size = 0x400, scoped, tag = 'input window, operand 8']
    #allocation18 [shape = 'u8[16384]{0}', space=vmem, size = 0x4000, scoped, tag = 'input window, operand 9']
    #allocation19 [shape = 's32[2]{0}', space=sflag, size = 0x8, scoped, tag = 'scoped memory for tpu_custom_call.1']
    #allocation20 [shape = 'u8[1024]{0}', space=vmem, size = 0x400, scoped, tag = 'input window, operand 10']
    #allocation21 [shape = 'u8[65536]{0}', space=vmem, size = 0x10000, scoped, tag = 'input window, operand 11']
    #allocation22 [shape = 's32[2]{0}', space=sflag, size = 0x8, scoped, tag = 'scoped memory for tpu_custom_call.1']
    #allocation23 [shape = 'u8[1024]{0}', space=vmem, size = 0x400, scoped, tag = 'input window, operand 12']
    #allocation24 [shape = 'u8[24576]{0}', space=vmem, size = 0x6000, scoped, tag = 'output window, operand 0']
    %18 = vsyncpa [#allocation4], 0
    %s19 = scalar_lea.sflag [#allocation4], 1
    %20 = vsyncpa %s19, 0
    %21 = vsyncpa [#allocation7], 0
    %s22 = scalar_lea.sflag [#allocation7], 1
    %23 = vsyncpa %s22, 0
    %24 = vsyncpa [#allocation10], 0
    %s25 = scalar_lea.sflag [#allocation10], 1
    %26 = vsyncpa %s25, 0
    %27 = vsyncpa [#allocation13], 0
    %s28 = scalar_lea.sflag [#allocation13], 1
    %29 = vsyncpa %s28, 0
    %30 = vsyncpa [#allocation16], 0
    %s31 = scalar_lea.sflag [#allocation16], 1
    %32 = vsyncpa %s31, 0
    %33 = vsyncpa [#allocation19], 0
    %s34 = scalar_lea.sflag [#allocation19], 1
    %35 = vsyncpa %s34, 0
    %36 = vsyncpa [#allocation22], 0
    %s37 = scalar_lea.sflag [#allocation22], 1
    %38 = vsyncpa %s37, 0
    %39 = vsyncpa [#allocation5], 0
    %s40 = scalar_lea.sflag [#allocation5], 1
    %41 = vsyncpa %s40, 0
    loop: start=0, step=1, limit=6
    $region2: #{tpu_custom_call.1} parent=1 // loop_pre_header
      _
    $region3: #{tpu_custom_call.1} parent=1 // loop_header
      %s43 = sphi 0, %s47
      %p44 = scmp.ge.s32.totalorder %s43, 6
      %s50 = sphi 0, %s62
      %s51 = sphi 0, %s58
      %s52 = sphi 0, %s50
      %s53 = sphi 0, %s51
      %s54 = sphi 0, %s52
      %s55 = sphi 0, %s53
      %s65 = sphi 0, %s67
      %s68 = sphi 0, %s65
      %s69 = sphi 0, %s68
      %s85 = sphi 0, %s69
      %s91 = sphi 0, %s93
      %s94 = sphi 0, %s91
      %s95 = sphi 0, %s94
      %s111 = sphi 0, %s95
      %s117 = sphi 0, %s119
      %s120 = sphi 0, %s117
      %s121 = sphi 0, %s120
      %s137 = sphi 0, %s121
      %s143 = sphi 0, %s145
      %s146 = sphi 0, %s143
      %s147 = sphi 0, %s146
      %s163 = sphi 0, %s147
      %s169 = sphi 0, %s171
      %s172 = sphi 0, %s169
      %s173 = sphi 0, %s172
      %s189 = sphi 0, %s173
      %s195 = sphi 0, %s197
      %s198 = sphi 0, %s195
      %s199 = sphi 0, %s198
      %s215 = sphi 0, %s199
      %s221 = sphi 0, %s223
      %s224 = sphi 0, %s221
      %s225 = sphi 0, %s224
      %s241 = sphi 0, %s225
      %s247 = sphi 0, %s249
      %s250 = sphi 0, %s247
      %s251 = sphi 0, %s250
      %s267 = sphi 0, %s251
      %s273 = sphi 0, %s275
      %s276 = sphi 0, %s273
      %s277 = sphi 0, %s276
      %s293 = sphi 0, %s277
      %s299 = sphi 0, %s301
      %s302 = sphi 0, %s299
      %s303 = sphi 0, %s302
      %s319 = sphi 0, %s303
      %s325 = sphi 0, %s327
      %s328 = sphi 0, %s325
      %s329 = sphi 0, %s328
      %s345 = sphi 0, %s329
      %s351 = sphi 0, %s353
      %s354 = sphi 0, %s351
      %s355 = sphi 0, %s354
      %s371 = sphi 0, %s355
      %s377 = sphi 0, %s379
      %s380 = sphi 0, %s377
      %s381 = sphi 0, %s380
      %s397 = sphi 0, %s381
      %s403 = sphi 0, %s405
      %s406 = sphi 0, %s403
      %s407 = sphi 0, %s406
      %s423 = sphi 0, %s407
    $region4: #{tpu_custom_call.1} parent=1 // loop_header_branch
      %46 = sbr.rel (%p44) target = $region8
    $region5: #{tpu_custom_call.1} parent=1 // loop_body
      %s48 = ssub.s32 %s43, 1
      %s49 = ssub.s32 %s43, 2
      %s56 = sadd.s32 1, %s51
      %p57 = scmp.ge.s32.totalorder %s56, 2
      %s58 = scalar_select %p57, 0, %s56
      %s59 = sadd.s32 1, %s50
      %s60 = scalar_select %p57, %s59, %s50
      %p61 = scmp.ge.s32.totalorder %s60, 2
      %s62 = scalar_select %p61, 0, %s60
      %s63 = ssub.s32 %s50, %s62
      %p64 = scmp.eq.s32.totalorder %s63, 0
      %s66 = sadd.s32 %s65, 1
      %s67 = scalar_select %p64, %s65, %s66
      %p70 = pneg %p64
      %p71 = scmp.eq.s32.totalorder %s43, 3
      %p72 = por %p70, %p71
      %p73 = scmp.ne.s32.totalorder %s65, %s68
      %p74 = scmp.eq.s32.totalorder %s43, 0
      %p75 = por %p73, %p74
      %p76 = scmp.ne.s32.totalorder %s65, %s68
      %p77 = scmp.eq.s32.totalorder %s48, 3
      %p78 = por %p76, %p77
      %p79 = scmp.ne.s32.totalorder %s68, %s69
      %p80 = scmp.eq.s32.totalorder %s48, 0
      %p81 = por %p79, %p80
      %p82 = scmp.ne.s32.totalorder %s68, %s69
      %p83 = scmp.eq.s32.totalorder %s49, 3
      %p84 = por %p82, %p83
      %p86 = scmp.ne.s32.totalorder %s69, %s85
      %p87 = scmp.eq.s32.totalorder %s49, 0
      %p88 = por %p86, %p87
      %s89 = ssub.s32 %s51, %s58
      %p90 = scmp.eq.s32.totalorder %s89, 0
      %s92 = sadd.s32 %s91, 1
      %s93 = scalar_select %p90, %s91, %s92
      %p96 = pneg %p90
      %p97 = scmp.eq.s32.totalorder %s43, 3
      %p98 = por %p96, %p97
      %p99 = scmp.ne.s32.totalorder %s91, %s94
      %p100 = scmp.eq.s32.totalorder %s43, 0
      %p101 = por %p99, %p100
      %p102 = scmp.ne.s32.totalorder %s91, %s94
      %p103 = scmp.eq.s32.totalorder %s48, 3
      %p104 = por %p102, %p103
      %p105 = scmp.ne.s32.totalorder %s94, %s95
      %p106 = scmp.eq.s32.totalorder %s48, 0
      %p107 = por %p105, %p106
      %p108 = scmp.ne.s32.totalorder %s94, %s95
      %p109 = scmp.eq.s32.totalorder %s49, 3
      %p110 = por %p108, %p109
      %p112 = scmp.ne.s32.totalorder %s95, %s111
      %p113 = scmp.eq.s32.totalorder %s49, 0
      %p114 = por %p112, %p113
      %s115 = ssub.s32 %s51, %s58
      %p116 = scmp.eq.s32.totalorder %s115, 0
      %s118 = sadd.s32 %s117, 1
      %s119 = scalar_select %p116, %s117, %s118
      %p122 = pneg %p116
      %p123 = scmp.eq.s32.totalorder %s43, 3
      %p124 = por %p122, %p123
      %p125 = scmp.ne.s32.totalorder %s117, %s120
      %p126 = scmp.eq.s32.totalorder %s43, 0
      %p127 = por %p125, %p126
      %p128 = scmp.ne.s32.totalorder %s117, %s120
      %p129 = scmp.eq.s32.totalorder %s48, 3
      %p130 = por %p128, %p129
      %p131 = scmp.ne.s32.totalorder %s120, %s121
      %p132 = scmp.eq.s32.totalorder %s48, 0
      %p133 = por %p131, %p132
      %p134 = scmp.ne.s32.totalorder %s120, %s121
      %p135 = scmp.eq.s32.totalorder %s49, 3
      %p136 = por %p134, %p135
      %p138 = scmp.ne.s32.totalorder %s121, %s137
      %p139 = scmp.eq.s32.totalorder %s49, 0
      %p140 = por %p138, %p139
      %s141 = ssub.s32 %s51, %s58
      %p142 = scmp.eq.s32.totalorder %s141, 0
      %s144 = sadd.s32 %s143, 1
      %s145 = scalar_select %p142, %s143, %s144
      %p148 = pneg %p142
      %p149 = scmp.eq.s32.totalorder %s43, 3
      %p150 = por %p148, %p149
      %p151 = scmp.ne.s32.totalorder %s143, %s146
      %p152 = scmp.eq.s32.totalorder %s43, 0
      %p153 = por %p151, %p152
      %p154 = scmp.ne.s32.totalorder %s143, %s146
      %p155 = scmp.eq.s32.totalorder %s48, 3
      %p156 = por %p154, %p155
      %p157 = scmp.ne.s32.totalorder %s146, %s147
      %p158 = scmp.eq.s32.totalorder %s48, 0
      %p159 = por %p157, %p158
      %p160 = scmp.ne.s32.totalorder %s146, %s147
      %p161 = scmp.eq.s32.totalorder %s49, 3
      %p162 = por %p160, %p161
      %p164 = scmp.ne.s32.totalorder %s147, %s163
      %p165 = scmp.eq.s32.totalorder %s49, 0
      %p166 = por %p164, %p165
      %s167 = ssub.s32 %s51, %s58
      %p168 = scmp.eq.s32.totalorder %s167, 0
      %s170 = sadd.s32 %s169, 1
      %s171 = scalar_select %p168, %s169, %s170
      %p174 = pneg %p168
      %p175 = scmp.eq.s32.totalorder %s43, 3
      %p176 = por %p174, %p175
      %p177 = scmp.ne.s32.totalorder %s169, %s172
      %p178 = scmp.eq.s32.totalorder %s43, 0
      %p179 = por %p177, %p178
      %p180 = scmp.ne.s32.totalorder %s169, %s172
      %p181 = scmp.eq.s32.totalorder %s48, 3
      %p182 = por %p180, %p181
      %p183 = scmp.ne.s32.totalorder %s172, %s173
      %p184 = scmp.eq.s32.totalorder %s48, 0
      %p185 = por %p183, %p184
      %p186 = scmp.ne.s32.totalorder %s172, %s173
      %p187 = scmp.eq.s32.totalorder %s49, 3
      %p188 = por %p186, %p187
      %p190 = scmp.ne.s32.totalorder %s173, %s189
      %p191 = scmp.eq.s32.totalorder %s49, 0
      %p192 = por %p190, %p191
      %s193 = ssub.s32 %s51, %s58
      %p194 = scmp.eq.s32.totalorder %s193, 0
      %s196 = sadd.s32 %s195, 1
      %s197 = scalar_select %p194, %s195, %s196
      %p200 = pneg %p194
      %p201 = scmp.eq.s32.totalorder %s43, 3
      %p202 = por %p200, %p201
      %p203 = scmp.ne.s32.totalorder %s195, %s198
      %p204 = scmp.eq.s32.totalorder %s43, 0
      %p205 = por %p203, %p204
      %p206 = scmp.ne.s32.totalorder %s195, %s198
      %p207 = scmp.eq.s32.totalorder %s48, 3
      %p208 = por %p206, %p207
      %p209 = scmp.ne.s32.totalorder %s198, %s199
      %p210 = scmp.eq.s32.totalorder %s48, 0
      %p211 = por %p209, %p210
      %p212 = scmp.ne.s32.totalorder %s198, %s199
      %p213 = scmp.eq.s32.totalorder %s49, 3
      %p214 = por %p212, %p213
      %p216 = scmp.ne.s32.totalorder %s199, %s215
      %p217 = scmp.eq.s32.totalorder %s49, 0
      %p218 = por %p216, %p217
      %s219 = ssub.s32 %s51, %s58
      %p220 = scmp.eq.s32.totalorder %s219, 0
      %s222 = sadd.s32 %s221, 1
      %s223 = scalar_select %p220, %s221, %s222
      %p226 = pneg %p220
      %p227 = scmp.eq.s32.totalorder %s43, 3
      %p228 = por %p226, %p227
      %p229 = scmp.ne.s32.totalorder %s221, %s224
      %p230 = scmp.eq.s32.totalorder %s43, 0
      %p231 = por %p229, %p230
      %p232 = scmp.ne.s32.totalorder %s221, %s224
      %p233 = scmp.eq.s32.totalorder %s48, 3
      %p234 = por %p232, %p233
      %p235 = scmp.ne.s32.totalorder %s224, %s225
      %p236 = scmp.eq.s32.totalorder %s48, 0
      %p237 = por %p235, %p236
      %p238 = scmp.ne.s32.totalorder %s224, %s225
      %p239 = scmp.eq.s32.totalorder %s49, 3
      %p240 = por %p238, %p239
      %p242 = scmp.ne.s32.totalorder %s225, %s241
      %p243 = scmp.eq.s32.totalorder %s49, 0
      %p244 = por %p242, %p243
      %s245 = ssub.s32 %s51, %s58
      %p246 = scmp.eq.s32.totalorder %s245, 0
      %s248 = sadd.s32 %s247, 1
      %s249 = scalar_select %p246, %s247, %s248
      %p252 = pneg %p246
      %p253 = scmp.eq.s32.totalorder %s43, 3
      %p254 = por %p252, %p253
      %p255 = scmp.ne.s32.totalorder %s247, %s250
      %p256 = scmp.eq.s32.totalorder %s43, 0
      %p257 = por %p255, %p256
      %p258 = scmp.ne.s32.totalorder %s247, %s250
      %p259 = scmp.eq.s32.totalorder %s48, 3
      %p260 = por %p258, %p259
      %p261 = scmp.ne.s32.totalorder %s250, %s251
      %p262 = scmp.eq.s32.totalorder %s48, 0
      %p263 = por %p261, %p262
      %p264 = scmp.ne.s32.totalorder %s250, %s251
      %p265 = scmp.eq.s32.totalorder %s49, 3
      %p266 = por %p264, %p265
      %p268 = scmp.ne.s32.totalorder %s251, %s267
      %p269 = scmp.eq.s32.totalorder %s49, 0
      %p270 = por %p268, %p269
      %s271 = ssub.s32 %s51, %s58
      %p272 = scmp.eq.s32.totalorder %s271, 0
      %s274 = sadd.s32 %s273, 1
      %s275 = scalar_select %p272, %s273, %s274
      %p278 = pneg %p272
      %p279 = scmp.eq.s32.totalorder %s43, 3
      %p280 = por %p278, %p279
      %p281 = scmp.ne.s32.totalorder %s273, %s276
      %p282 = scmp.eq.s32.totalorder %s43, 0
      %p283 = por %p281, %p282
      %p284 = scmp.ne.s32.totalorder %s273, %s276
      %p285 = scmp.eq.s32.totalorder %s48, 3
      %p286 = por %p284, %p285
      %p287 = scmp.ne.s32.totalorder %s276, %s277
      %p288 = scmp.eq.s32.totalorder %s48, 0
      %p289 = por %p287, %p288
      %p290 = scmp.ne.s32.totalorder %s276, %s277
      %p291 = scmp.eq.s32.totalorder %s49, 3
      %p292 = por %p290, %p291
      %p294 = scmp.ne.s32.totalorder %s277, %s293
      %p295 = scmp.eq.s32.totalorder %s49, 0
      %p296 = por %p294, %p295
      %s297 = ssub.s32 %s51, %s58
      %p298 = scmp.eq.s32.totalorder %s297, 0
      %s300 = sadd.s32 %s299, 1
      %s301 = scalar_select %p298, %s299, %s300
      %p304 = pneg %p298
      %p305 = scmp.eq.s32.totalorder %s43, 3
      %p306 = por %p304, %p305
      %p307 = scmp.ne.s32.totalorder %s299, %s302
      %p308 = scmp.eq.s32.totalorder %s43, 0
      %p309 = por %p307, %p308
      %p310 = scmp.ne.s32.totalorder %s299, %s302
      %p311 = scmp.eq.s32.totalorder %s48, 3
      %p312 = por %p310, %p311
      %p313 = scmp.ne.s32.totalorder %s302, %s303
      %p314 = scmp.eq.s32.totalorder %s48, 0
      %p315 = por %p313, %p314
      %p316 = scmp.ne.s32.totalorder %s302, %s303
      %p317 = scmp.eq.s32.totalorder %s49, 3
      %p318 = por %p316, %p317
      %p320 = scmp.ne.s32.totalorder %s303, %s319
      %p321 = scmp.eq.s32.totalorder %s49, 0
      %p322 = por %p320, %p321
      %s323 = ssub.s32 %s51, %s58
      %p324 = scmp.eq.s32.totalorder %s323, 0
      %s326 = sadd.s32 %s325, 1
      %s327 = scalar_select %p324, %s325, %s326
      %p330 = pneg %p324
      %p331 = scmp.eq.s32.totalorder %s43, 3
      %p332 = por %p330, %p331
      %p333 = scmp.ne.s32.totalorder %s325, %s328
      %p334 = scmp.eq.s32.totalorder %s43, 0
      %p335 = por %p333, %p334
      %p336 = scmp.ne.s32.totalorder %s325, %s328
      %p337 = scmp.eq.s32.totalorder %s48, 3
      %p338 = por %p336, %p337
      %p339 = scmp.ne.s32.totalorder %s328, %s329
      %p340 = scmp.eq.s32.totalorder %s48, 0
      %p341 = por %p339, %p340
      %p342 = scmp.ne.s32.totalorder %s328, %s329
      %p343 = scmp.eq.s32.totalorder %s49, 3
      %p344 = por %p342, %p343
      %p346 = scmp.ne.s32.totalorder %s329, %s345
      %p347 = scmp.eq.s32.totalorder %s49, 0
      %p348 = por %p346, %p347
      %s349 = ssub.s32 %s51, %s58
      %p350 = scmp.eq.s32.totalorder %s349, 0
      %s352 = sadd.s32 %s351, 1
      %s353 = scalar_select %p350, %s351, %s352
      %p356 = pneg %p350
      %p357 = scmp.eq.s32.totalorder %s43, 3
      %p358 = por %p356, %p357
      %p359 = scmp.ne.s32.totalorder %s351, %s354
      %p360 = scmp.eq.s32.totalorder %s43, 0
      %p361 = por %p359, %p360
      %p362 = scmp.ne.s32.totalorder %s351, %s354
      %p363 = scmp.eq.s32.totalorder %s48, 3
      %p364 = por %p362, %p363
      %p365 = scmp.ne.s32.totalorder %s354, %s355
      %p366 = scmp.eq.s32.totalorder %s48, 0
      %p367 = por %p365, %p366
      %p368 = scmp.ne.s32.totalorder %s354, %s355
      %p369 = scmp.eq.s32.totalorder %s49, 3
      %p370 = por %p368, %p369
      %p372 = scmp.ne.s32.totalorder %s355, %s371
      %p373 = scmp.eq.s32.totalorder %s49, 0
      %p374 = por %p372, %p373
      %s375 = ssub.s32 %s51, %s58
      %p376 = scmp.eq.s32.totalorder %s375, 0
      %s378 = sadd.s32 %s377, 1
      %s379 = scalar_select %p376, %s377, %s378
      %p382 = pneg %p376
      %p383 = scmp.eq.s32.totalorder %s43, 3
      %p384 = por %p382, %p383
      %p385 = scmp.ne.s32.totalorder %s377, %s380
      %p386 = scmp.eq.s32.totalorder %s43, 0
      %p387 = por %p385, %p386
      %p388 = scmp.ne.s32.totalorder %s377, %s380
      %p389 = scmp.eq.s32.totalorder %s48, 3
      %p390 = por %p388, %p389
      %p391 = scmp.ne.s32.totalorder %s380, %s381
      %p392 = scmp.eq.s32.totalorder %s48, 0
      %p393 = por %p391, %p392
      %p394 = scmp.ne.s32.totalorder %s380, %s381
      %p395 = scmp.eq.s32.totalorder %s49, 3
      %p396 = por %p394, %p395
      %p398 = scmp.ne.s32.totalorder %s381, %s397
      %p399 = scmp.eq.s32.totalorder %s49, 0
      %p400 = por %p398, %p399
      %s401 = ssub.s32 %s50, %s62
      %p402 = scmp.eq.s32.totalorder %s401, 0
      %s404 = sadd.s32 %s403, 1
      %s405 = scalar_select %p402, %s403, %s404
      %p408 = pneg %p402
      %p409 = scmp.eq.s32.totalorder %s43, 3
      %p410 = por %p408, %p409
      %p411 = scmp.ne.s32.totalorder %s403, %s406
      %p412 = scmp.eq.s32.totalorder %s43, 0
      %p413 = por %p411, %p412
      %p414 = scmp.ne.s32.totalorder %s403, %s406
      %p415 = scmp.eq.s32.totalorder %s48, 3
      %p416 = por %p414, %p415
      %p417 = scmp.ne.s32.totalorder %s406, %s407
      %p418 = scmp.eq.s32.totalorder %s48, 0
      %p419 = por %p417, %p418
      %p420 = scmp.ne.s32.totalorder %s406, %s407
      %p421 = scmp.eq.s32.totalorder %s49, 3
      %p422 = por %p420, %p421
      %p424 = scmp.ne.s32.totalorder %s407, %s423
      %p425 = scmp.eq.s32.totalorder %s49, 0
      %p426 = por %p424, %p425
      %p427 = scmp.le.s32.totalorder 1, %s43
      %p428 = scmp.lt.s32.totalorder %s43, 5
      %p429 = pnand %p427, %p428
      %p430 = pneg %p429
      // Predicated region
      $region9: #{tpu_custom_call.1} parent=5 // pred_check
        _
      $region10: #{tpu_custom_call.1} parent=5 // pred_check_branch
        %432 = sbr.rel (%p429) target = $region12
      $region11: #{tpu_custom_call.1} parent=5 // pred_region
        %s433 = ssub.s32 %s43, 1
      $region12: #{tpu_custom_call.1} parent=5 // pred_fallthru
        _
      %p434 = scmp.lt.s32.totalorder %s43, 4
      // Predicated region
      $region13: #{tpu_custom_call.1} parent=5 // pred_check
        %p435 = pneg %p434
      $region14: #{tpu_custom_call.1} parent=5 // pred_check_branch
        %437 = sbr.rel (%p435) target = $region16
      $region15: #{tpu_custom_call.1} parent=5 // pred_region
        // Predicated region
        $region17: #{tpu_custom_call.1} parent=15 // pred_check
          %p438 = pneg %p75
        $region18: #{tpu_custom_call.1} parent=15 // pred_check_branch
          %440 = sbr.rel (%p438) target = $region20
        $region19: #{tpu_custom_call.1} parent=15 // pred_region
          %s441 = sand.u32 %s65, 1
          %s442 = scalar_lea.sflag [#allocation4], %s441
          %s443 = sand.u32 %s65, 1
          %s444 = smul.addr %s443, 24
          %s445 = scalar_lea.vmem [#allocation3], %s444
          %s447 = ssub.s32 384, 384
          %448 = vsyncadd %s442, %s447
          %s449 = smul.addr %s50, 3
          %s450 = smul.addr %s449, 128
          %s451 = scalar_lea.hbm %s0, %s450
          %s452 = sshll.u32 %s445, 4
          %s453 = int_to_ptr.vmem [resolvable:$true] %s452
          %458 = dma.hbm_to_vmem [thread:$0]  %s451, 384, %s453, %s442, 128, 128, 8
        $region20: #{tpu_custom_call.1} parent=15 // pred_fallthru
          _
        // Predicated region
        $region21: #{tpu_custom_call.1} parent=15 // pred_check
          %p459 = pneg %p101
        $region22: #{tpu_custom_call.1} parent=15 // pred_check_branch
          %461 = sbr.rel (%p459) target = $region24
        $region23: #{tpu_custom_call.1} parent=15 // pred_region
          %s462 = sand.u32 %s43, 1
          %s463 = scalar_lea.sflag [#allocation7], %s462
          %s464 = sand.u32 %s91, 1
          %s465 = scalar_lea.vmem [#allocation6], %s464
          %s467 = ssub.s32 16, 16
          %468 = vsyncadd %s463, %s467
          %s469 = smul.addr %s51, 16
          %s470 = scalar_lea.hbm %s1, %s469
          %s472 = sshll.u32 %s465, 4
          %s473 = int_to_ptr.vmem [resolvable:$true] %s472
          %475 = dma.hbm_to_vmem [thread:$0]  %s470, 16, %s473, %s463
        $region24: #{tpu_custom_call.1} parent=15 // pred_fallthru
          _
        // Predicated region
        $region25: #{tpu_custom_call.1} parent=15 // pred_check
          %p476 = pneg %p127
        $region26: #{tpu_custom_call.1} parent=15 // pred_check_branch
          %478 = sbr.rel (%p476) target = $region28
        $region27: #{tpu_custom_call.1} parent=15 // pred_region
          %s479 = sand.u32 %s43, 1
          %s480 = scalar_lea.sflag [#allocation7], %s479
          %s481 = sand.u32 %s117, 1
          %s482 = scalar_lea.vmem [#allocation8], %s481
          %s484 = ssub.s32 16, 16
          %485 = vsyncadd %s480, %s484
          %s486 = smul.addr %s51, 16
          %s487 = scalar_lea.hbm %s2, %s486
          %s489 = sshll.u32 %s482, 4
          %s490 = int_to_ptr.vmem [resolvable:$true] %s489
          %492 = dma.hbm_to_vmem [thread:$0]  %s487, 16, %s490, %s480
        $region28: #{tpu_custom_call.1} parent=15 // pred_fallthru
          _
        // Predicated region
        $region29: #{tpu_custom_call.1} parent=15 // pred_check
          %p493 = pneg %p153
        $region30: #{tpu_custom_call.1} parent=15 // pred_check_branch
          %495 = sbr.rel (%p493) target = $region32
        $region31: #{tpu_custom_call.1} parent=15 // pred_region
          %s496 = sand.u32 %s43, 1
          %s497 = scalar_lea.sflag [#allocation10], %s496
          %s498 = sand.u32 %s143, 1
          %s499 = smul.addr %s498, 16
          %s500 = scalar_lea.vmem [#allocation9], %s499
          %s502 = ssub.s32 256, 256
          %503 = vsyncadd %s497, %s502
          %s504 = smul.addr %s51, 4
          %s505 = smul.addr %s504, 64
          %s506 = scalar_lea.hbm %s3, %s505
          %s507 = sshll.u32 %s500, 4
          %s508 = int_to_ptr.vmem [resolvable:$true] %s507
          %513 = dma.hbm_to_vmem [thread:$0]  %s506, 256, %s508, %s497, 64, 64, 4
        $region32: #{tpu_custom_call.1} parent=15 // pred_fallthru
          _
        // Predicated region
        $region33: #{tpu_custom_call.1} parent=15 // pred_check
          %p514 = pneg %p179
        $region34: #{tpu_custom_call.1} parent=15 // pred_check_branch
          %516 = sbr.rel (%p514) target = $region36
        $region35: #{tpu_custom_call.1} parent=15 // pred_region
          %s517 = sand.u32 %s43, 1
          %s518 = scalar_lea.sflag [#allocation10], %s517
          %s519 = sand.u32 %s169, 1
          %s520 = scalar_lea.vmem [#allocation11], %s519
          %s522 = ssub.s32 16, 16
          %523 = vsyncadd %s518, %s522
          %s524 = smul.addr %s51, 16
          %s525 = scalar_lea.hbm %s4, %s524
          %s527 = sshll.u32 %s520, 4
          %s528 = int_to_ptr.vmem [resolvable:$true] %s527
          %530 = dma.hbm_to_vmem [thread:$0]  %s525, 16, %s528, %s518
        $region36: #{tpu_custom_call.1} parent=15 // pred_fallthru
          _
        // Predicated region
        $region37: #{tpu_custom_call.1} parent=15 // pred_check
          %p531 = pneg %p205
        $region38: #{tpu_custom_call.1} parent=15 // pred_check_branch
          %533 = sbr.rel (%p531) target = $region40
        $region39: #{tpu_custom_call.1} parent=15 // pred_region
          %s534 = sand.u32 %s43, 1
          %s535 = scalar_lea.sflag [#allocation13], %s534
          %s536 = sand.u32 %s195, 1
          %s537 = smul.addr %s536, 16
          %s538 = scalar_lea.vmem [#allocation12], %s537
          %s540 = ssub.s32 256, 256
          %541 = vsyncadd %s535, %s540
          %s542 = smul.addr %s51, 4
          %s543 = smul.addr %s542, 64
          %s544 = scalar_lea.hbm %s5, %s543
          %s545 = sshll.u32 %s538, 4
          %s546 = int_to_ptr.vmem [resolvable:$true] %s545
          %551 = dma.hbm_to_vmem [thread:$0]  %s544, 256, %s546, %s535, 64, 64, 4
        $region40: #{tpu_custom_call.1} parent=15 // pred_fallthru
          _
        // Predicated region
        $region41: #{tpu_custom_call.1} parent=15 // pred_check
          %p552 = pneg %p231
        $region42: #{tpu_custom_call.1} parent=15 // pred_check_branch
          %554 = sbr.rel (%p552) target = $region44
        $region43: #{tpu_custom_call.1} parent=15 // pred_region
          %s555 = sand.u32 %s43, 1
          %s556 = scalar_lea.sflag [#allocation13], %s555
          %s557 = sand.u32 %s221, 1
          %s558 = scalar_lea.vmem [#allocation14], %s557
          %s560 = ssub.s32 16, 16
          %561 = vsyncadd %s556, %s560
          %s562 = smul.addr %s51, 16
          %s563 = scalar_lea.hbm %s6, %s562
          %s565 = sshll.u32 %s558, 4
          %s566 = int_to_ptr.vmem [resolvable:$true] %s565
          %568 = dma.hbm_to_vmem [thread:$0]  %s563, 16, %s566, %s556
        $region44: #{tpu_custom_call.1} parent=15 // pred_fallthru
          _
        // Predicated region
        $region45: #{tpu_custom_call.1} parent=15 // pred_check
          %p569 = pneg %p257
        $region46: #{tpu_custom_call.1} parent=15 // pred_check_branch
          %571 = sbr.rel (%p569) target = $region48
        $region47: #{tpu_custom_call.1} parent=15 // pred_region
          %s572 = sand.u32 %s43, 1
          %s573 = scalar_lea.sflag [#allocation16], %s572
          %s574 = sand.u32 %s247, 1
          %s575 = scalar_lea.vmem [#allocation15], %s574
          %s577 = ssub.s32 16, 16
          %578 = vsyncadd %s573, %s577
          %s579 = smul.addr %s51, 16
          %s580 = scalar_lea.hbm %s7, %s579
          %s582 = sshll.u32 %s575, 4
          %s583 = int_to_ptr.vmem [resolvable:$true] %s582
          %585 = dma.hbm_to_vmem [thread:$0]  %s580, 16, %s583, %s573
        $region48: #{tpu_custom_call.1} parent=15 // pred_fallthru
          _
        // Predicated region
        $region49: #{tpu_custom_call.1} parent=15 // pred_check
          %p586 = pneg %p283
        $region50: #{tpu_custom_call.1} parent=15 // pred_check_branch
          %588 = sbr.rel (%p586) target = $region52
        $region51: #{tpu_custom_call.1} parent=15 // pred_region
          %s589 = sand.u32 %s43, 1
          %s590 = scalar_lea.sflag [#allocation16], %s589
          %s591 = sand.u32 %s273, 1
          %s592 = scalar_lea.vmem [#allocation17], %s591
          %s594 = ssub.s32 16, 16
          %595 = vsyncadd %s590, %s594
          %s596 = smul.addr %s51, 16
          %s597 = scalar_lea.hbm %s8, %s596
          %s599 = sshll.u32 %s592, 4
          %s600 = int_to_ptr.vmem [resolvable:$true] %s599
          %602 = dma.hbm_to_vmem [thread:$0]  %s597, 16, %s600, %s590
        $region52: #{tpu_custom_call.1} parent=15 // pred_fallthru
          _
        // Predicated region
        $region53: #{tpu_custom_call.1} parent=15 // pred_check
          %p603 = pneg %p309
        $region54: #{tpu_custom_call.1} parent=15 // pred_check_branch
          %605 = sbr.rel (%p603) target = $region56
        $region55: #{tpu_custom_call.1} parent=15 // pred_region
          %s606 = sand.u32 %s43, 1
          %s607 = scalar_lea.sflag [#allocation19], %s606
          %s608 = sand.u32 %s299, 1
          %s609 = smul.addr %s608, 16
          %s610 = scalar_lea.vmem [#allocation18], %s609
          %s612 = ssub.s32 256, 256
          %613 = vsyncadd %s607, %s612
          %s614 = smul.addr %s51, 4
          %s615 = smul.addr %s614, 64
          %s616 = scalar_lea.hbm %s9, %s615
          %s617 = sshll.u32 %s610, 4
          %s618 = int_to_ptr.vmem [resolvable:$true] %s617
          %623 = dma.hbm_to_vmem [thread:$0]  %s616, 256, %s618, %s607, 64, 64, 4
        $region56: #{tpu_custom_call.1} parent=15 // pred_fallthru
          _
        // Predicated region
        $region57: #{tpu_custom_call.1} parent=15 // pred_check
          %p624 = pneg %p335
        $region58: #{tpu_custom_call.1} parent=15 // pred_check_branch
          %626 = sbr.rel (%p624) target = $region60
        $region59: #{tpu_custom_call.1} parent=15 // pred_region
          %s627 = sand.u32 %s43, 1
          %s628 = scalar_lea.sflag [#allocation19], %s627
          %s629 = sand.u32 %s325, 1
          %s630 = scalar_lea.vmem [#allocation20], %s629
          %s632 = ssub.s32 16, 16
          %633 = vsyncadd %s628, %s632
          %s634 = smul.addr %s51, 16
          %s635 = scalar_lea.hbm %s10, %s634
          %s637 = sshll.u32 %s630, 4
          %s638 = int_to_ptr.vmem [resolvable:$true] %s637
          %640 = dma.hbm_to_vmem [thread:$0]  %s635, 16, %s638, %s628
        $region60: #{tpu_custom_call.1} parent=15 // pred_fallthru
          _
        // Predicated region
        $region61: #{tpu_custom_call.1} parent=15 // pred_check
          %p641 = pneg %p361
        $region62: #{tpu_custom_call.1} parent=15 // pred_check_branch
          %643 = sbr.rel (%p641) target = $region64
        $region63: #{tpu_custom_call.1} parent=15 // pred_region
          %s644 = sand.u32 %s43, 1
          %s645 = scalar_lea.sflag [#allocation22], %s644
          %s646 = sand.u32 %s351, 1
          %s647 = smul.addr %s646, 64
          %s648 = scalar_lea.vmem [#allocation21], %s647
          %s650 = ssub.s32 1024, 1024
          %651 = vsyncadd %s645, %s650
          %s652 = smul.addr %s51, 16
          %s653 = smul.addr %s652, 64
          %s654 = scalar_lea.hbm %s11, %s653
          %s655 = sshll.u32 %s648, 4
          %s656 = int_to_ptr.vmem [resolvable:$true] %s655
          %661 = dma.hbm_to_vmem [thread:$0]  %s654, 1024, %s656, %s645, 64, 64, 4
        $region64: #{tpu_custom_call.1} parent=15 // pred_fallthru
          _
        // Predicated region
        $region65: #{tpu_custom_call.1} parent=15 // pred_check
          %p662 = pneg %p387
        $region66: #{tpu_custom_call.1} parent=15 // pred_check_branch
          %664 = sbr.rel (%p662) target = $region68
        $region67: #{tpu_custom_call.1} parent=15 // pred_region
          %s665 = sand.u32 %s43, 1
          %s666 = scalar_lea.sflag [#allocation22], %s665
          %s667 = sand.u32 %s377, 1
          %s668 = scalar_lea.vmem [#allocation23], %s667
          %s670 = ssub.s32 16, 16
          %671 = vsyncadd %s666, %s670
          %s672 = smul.addr %s51, 16
          %s673 = scalar_lea.hbm %s12, %s672
          %s675 = sshll.u32 %s668, 4
          %s676 = int_to_ptr.vmem [resolvable:$true] %s675
          %678 = dma.hbm_to_vmem [thread:$0]  %s673, 16, %s676, %s666
        $region68: #{tpu_custom_call.1} parent=15 // pred_fallthru
          _
      $region16: #{tpu_custom_call.1} parent=5 // pred_fallthru
        _
      %p679 = scmp.le.s32.totalorder 1, %s43
      %p680 = scmp.lt.s32.totalorder %s43, 5
      %p681 = pnand %p679, %p680
      %p682 = pneg %p681
      // Predicated region
      $region69: #{tpu_custom_call.1} parent=5 // pred_check
        _
      $region70: #{tpu_custom_call.1} parent=5 // pred_check_branch
        %684 = sbr.rel (%p681) target = $region72
      $region71: #{tpu_custom_call.1} parent=5 // pred_region
        %s685 = ssub.s32 %s43, 1
        %s686 = sand.u32 %s68, 1
        %s687 = scalar_lea.sflag [#allocation4], %s686
        %s688 = sand.u32 %s68, 1
        %s689 = smul.addr %s688, 24
        %s690 = scalar_lea.vmem [#allocation3], %s689
        // Predicated region
        $region73: #{tpu_custom_call.1} parent=71 // pred_check
          %p691 = pneg %p81
        $region74: #{tpu_custom_call.1} parent=71 // pred_check_branch
          %693 = sbr.rel (%p691) target = $region76
        $region75: #{tpu_custom_call.1} parent=71 // pred_region
          %694 = dma.done %s687, 384
        $region76: #{tpu_custom_call.1} parent=71 // pred_fallthru
          _
        %s695 = sand.u32 %s48, 1
        %s696 = scalar_lea.sflag [#allocation7], %s695
        %s697 = sand.u32 %s94, 1
        %s698 = scalar_lea.vmem [#allocation6], %s697
        // Predicated region
        $region77: #{tpu_custom_call.1} parent=71 // pred_check
          %p699 = pneg %p107
        $region78: #{tpu_custom_call.1} parent=71 // pred_check_branch
          %701 = sbr.rel (%p699) target = $region80
        $region79: #{tpu_custom_call.1} parent=71 // pred_region
          %702 = dma.done %s696, 16
        $region80: #{tpu_custom_call.1} parent=71 // pred_fallthru
          _
        %s703 = sand.u32 %s48, 1
        %s704 = scalar_lea.sflag [#allocation7], %s703
        %s705 = sand.u32 %s120, 1
        %s706 = scalar_lea.vmem [#allocation8], %s705
        // Predicated region
        $region81: #{tpu_custom_call.1} parent=71 // pred_check
          %p707 = pneg %p133
        $region82: #{tpu_custom_call.1} parent=71 // pred_check_branch
          %709 = sbr.rel (%p707) target = $region84
        $region83: #{tpu_custom_call.1} parent=71 // pred_region
          %710 = dma.done %s704, 16
        $region84: #{tpu_custom_call.1} parent=71 // pred_fallthru
          _
        %s711 = sand.u32 %s48, 1
        %s712 = scalar_lea.sflag [#allocation10], %s711
        %s713 = sand.u32 %s146, 1
        %s714 = smul.addr %s713, 16
        %s715 = scalar_lea.vmem [#allocation9], %s714
        // Predicated region
        $region85: #{tpu_custom_call.1} parent=71 // pred_check
          %p716 = pneg %p159
        $region86: #{tpu_custom_call.1} parent=71 // pred_check_branch
          %718 = sbr.rel (%p716) target = $region88
        $region87: #{tpu_custom_call.1} parent=71 // pred_region
          %719 = dma.done %s712, 256
        $region88: #{tpu_custom_call.1} parent=71 // pred_fallthru
          _
        %s720 = sand.u32 %s48, 1
        %s721 = scalar_lea.sflag [#allocation10], %s720
        %s722 = sand.u32 %s172, 1
        %s723 = scalar_lea.vmem [#allocation11], %s722
        // Predicated region
        $region89: #{tpu_custom_call.1} parent=71 // pred_check
          %p724 = pneg %p185
        $region90: #{tpu_custom_call.1} parent=71 // pred_check_branch
          %726 = sbr.rel (%p724) target = $region92
        $region91: #{tpu_custom_call.1} parent=71 // pred_region
          %727 = dma.done %s721, 16
        $region92: #{tpu_custom_call.1} parent=71 // pred_fallthru
          _
        %s728 = sand.u32 %s48, 1
        %s729 = scalar_lea.sflag [#allocation13], %s728
        %s730 = sand.u32 %s198, 1
        %s731 = smul.addr %s730, 16
        %s732 = scalar_lea.vmem [#allocation12], %s731
        // Predicated region
        $region93: #{tpu_custom_call.1} parent=71 // pred_check
          %p733 = pneg %p211
        $region94: #{tpu_custom_call.1} parent=71 // pred_check_branch
          %735 = sbr.rel (%p733) target = $region96
        $region95: #{tpu_custom_call.1} parent=71 // pred_region
          %736 = dma.done %s729, 256
        $region96: #{tpu_custom_call.1} parent=71 // pred_fallthru
          _
        %s737 = sand.u32 %s48, 1
        %s738 = scalar_lea.sflag [#allocation13], %s737
        %s739 = sand.u32 %s224, 1
        %s740 = scalar_lea.vmem [#allocation14], %s739
        // Predicated region
        $region97: #{tpu_custom_call.1} parent=71 // pred_check
          %p741 = pneg %p237
        $region98: #{tpu_custom_call.1} parent=71 // pred_check_branch
          %743 = sbr.rel (%p741) target = $region100
        $region99: #{tpu_custom_call.1} parent=71 // pred_region
          %744 = dma.done %s738, 16
        $region100: #{tpu_custom_call.1} parent=71 // pred_fallthru
          _
        %s745 = sand.u32 %s48, 1
        %s746 = scalar_lea.sflag [#allocation16], %s745
        %s747 = sand.u32 %s250, 1
        %s748 = scalar_lea.vmem [#allocation15], %s747
        // Predicated region
        $region101: #{tpu_custom_call.1} parent=71 // pred_check
          %p749 = pneg %p263
        $region102: #{tpu_custom_call.1} parent=71 // pred_check_branch
          %751 = sbr.rel (%p749) target = $region104
        $region103: #{tpu_custom_call.1} parent=71 // pred_region
          %752 = dma.done %s746, 16
        $region104: #{tpu_custom_call.1} parent=71 // pred_fallthru
          _
        %s753 = sand.u32 %s48, 1
        %s754 = scalar_lea.sflag [#allocation16], %s753
        %s755 = sand.u32 %s276, 1
        %s756 = scalar_lea.vmem [#allocation17], %s755
        // Predicated region
        $region105: #{tpu_custom_call.1} parent=71 // pred_check
          %p757 = pneg %p289
        $region106: #{tpu_custom_call.1} parent=71 // pred_check_branch
          %759 = sbr.rel (%p757) target = $region108
        $region107: #{tpu_custom_call.1} parent=71 // pred_region
          %760 = dma.done %s754, 16
        $region108: #{tpu_custom_call.1} parent=71 // pred_fallthru
          _
        %s761 = sand.u32 %s48, 1
        %s762 = scalar_lea.sflag [#allocation19], %s761
        %s763 = sand.u32 %s302, 1
        %s764 = smul.addr %s763, 16
        %s765 = scalar_lea.vmem [#allocation18], %s764
        // Predicated region
        $region109: #{tpu_custom_call.1} parent=71 // pred_check
          %p766 = pneg %p315
        $region110: #{tpu_custom_call.1} parent=71 // pred_check_branch
          %768 = sbr.rel (%p766) target = $region112
        $region111: #{tpu_custom_call.1} parent=71 // pred_region
          %769 = dma.done %s762, 256
        $region112: #{tpu_custom_call.1} parent=71 // pred_fallthru
          _
        %s770 = sand.u32 %s48, 1
        %s771 = scalar_lea.sflag [#allocation19], %s770
        %s772 = sand.u32 %s328, 1
        %s773 = scalar_lea.vmem [#allocation20], %s772
        // Predicated region
        $region113: #{tpu_custom_call.1} parent=71 // pred_check
          %p774 = pneg %p341
        $region114: #{tpu_custom_call.1} parent=71 // pred_check_branch
          %776 = sbr.rel (%p774) target = $region116
        $region115: #{tpu_custom_call.1} parent=71 // pred_region
          %777 = dma.done %s771, 16
        $region116: #{tpu_custom_call.1} parent=71 // pred_fallthru
          _
        %s778 = sand.u32 %s48, 1
        %s779 = scalar_lea.sflag [#allocation22], %s778
        %s780 = sand.u32 %s354, 1
        %s781 = smul.addr %s780, 64
        %s782 = scalar_lea.vmem [#allocation21], %s781
        // Predicated region
        $region117: #{tpu_custom_call.1} parent=71 // pred_check
          %p783 = pneg %p367
        $region118: #{tpu_custom_call.1} parent=71 // pred_check_branch
          %785 = sbr.rel (%p783) target = $region120
        $region119: #{tpu_custom_call.1} parent=71 // pred_region
          %786 = dma.done %s779, 1024
        $region120: #{tpu_custom_call.1} parent=71 // pred_fallthru
          _
        %s787 = sand.u32 %s48, 1
        %s788 = scalar_lea.sflag [#allocation22], %s787
        %s789 = sand.u32 %s380, 1
        %s790 = scalar_lea.vmem [#allocation23], %s789
        // Predicated region
        $region121: #{tpu_custom_call.1} parent=71 // pred_check
          %p791 = pneg %p393
        $region122: #{tpu_custom_call.1} parent=71 // pred_check_branch
          %793 = sbr.rel (%p791) target = $region124
        $region123: #{tpu_custom_call.1} parent=71 // pred_region
          %794 = dma.done %s788, 16
        $region124: #{tpu_custom_call.1} parent=71 // pred_fallthru
          _
        %s795 = sand.u32 %s68, 1
        %s796 = scalar_lea.sflag [#allocation4], %s795
        %s797 = sand.u32 %s68, 1
        %s798 = smul.addr %s797, 24
        %s799 = scalar_lea.vmem [#allocation3], %s798
        %p800 = pneg %p81
        %p801 = pneg %p78
        %s802 = sand.u32 %s48, 1
        %s803 = scalar_lea.sflag [#allocation7], %s802
        %s804 = sand.u32 %s94, 1
        %s805 = scalar_lea.vmem [#allocation6], %s804
        %p806 = pneg %p107
        %p807 = pneg %p104
        %s808 = sand.u32 %s48, 1
        %s809 = scalar_lea.sflag [#allocation7], %s808
        %s810 = sand.u32 %s120, 1
        %s811 = scalar_lea.vmem [#allocation8], %s810
        %p812 = pneg %p133
        %p813 = pneg %p130
        %s814 = sand.u32 %s48, 1
        %s815 = scalar_lea.sflag [#allocation10], %s814
        %s816 = sand.u32 %s146, 1
        %s817 = smul.addr %s816, 16
        %s818 = scalar_lea.vmem [#allocation9], %s817
        %p819 = pneg %p159
        %p820 = pneg %p156
        %s821 = sand.u32 %s48, 1
        %s822 = scalar_lea.sflag [#allocation10], %s821
        %s823 = sand.u32 %s172, 1
        %s824 = scalar_lea.vmem [#allocation11], %s823
        %p825 = pneg %p185
        %p826 = pneg %p182
        %s827 = sand.u32 %s48, 1
        %s828 = scalar_lea.sflag [#allocation13], %s827
        %s829 = sand.u32 %s198, 1
        %s830 = smul.addr %s829, 16
        %s831 = scalar_lea.vmem [#allocation12], %s830
        %p832 = pneg %p211
        %p833 = pneg %p208
        %s834 = sand.u32 %s48, 1
        %s835 = scalar_lea.sflag [#allocation13], %s834
        %s836 = sand.u32 %s224, 1
        %s837 = scalar_lea.vmem [#allocation14], %s836
        %p838 = pneg %p237
        %p839 = pneg %p234
        %s840 = sand.u32 %s48, 1
        %s841 = scalar_lea.sflag [#allocation16], %s840
        %s842 = sand.u32 %s250, 1
        %s843 = scalar_lea.vmem [#allocation15], %s842
        %p844 = pneg %p263
        %p845 = pneg %p260
        %s846 = sand.u32 %s48, 1
        %s847 = scalar_lea.sflag [#allocation16], %s846
        %s848 = sand.u32 %s276, 1
        %s849 = scalar_lea.vmem [#allocation17], %s848
        %p850 = pneg %p289
        %p851 = pneg %p286
        %s852 = sand.u32 %s48, 1
        %s853 = scalar_lea.sflag [#allocation19], %s852
        %s854 = sand.u32 %s302, 1
        %s855 = smul.addr %s854, 16
        %s856 = scalar_lea.vmem [#allocation18], %s855
        %p857 = pneg %p315
        %p858 = pneg %p312
        %s859 = sand.u32 %s48, 1
        %s860 = scalar_lea.sflag [#allocation19], %s859
        %s861 = sand.u32 %s328, 1
        %s862 = scalar_lea.vmem [#allocation20], %s861
        %p863 = pneg %p341
        %p864 = pneg %p338
        %s865 = sand.u32 %s48, 1
        %s866 = scalar_lea.sflag [#allocation22], %s865
        %s867 = sand.u32 %s354, 1
        %s868 = smul.addr %s867, 64
        %s869 = scalar_lea.vmem [#allocation21], %s868
        %p870 = pneg %p367
        %p871 = pneg %p364
        %s872 = sand.u32 %s48, 1
        %s873 = scalar_lea.sflag [#allocation22], %s872
        %s874 = sand.u32 %s380, 1
        %s875 = scalar_lea.vmem [#allocation23], %s874
        %p876 = pneg %p393
        %p877 = pneg %p390
        %p878 = pneg %p419
        %p879 = pneg %p416
        %s880 = sand.u32 %s406, 1
        %s881 = scalar_lea.sflag [#allocation5], %s880
        %s882 = sand.u32 %s406, 1
        %s883 = smul.addr %s882, 24
        %s884 = scalar_lea.vmem [#allocation24], %s883
        %p886 = scmp.eq.s32.totalorder %s53, 0
        // Predicated region
        $region125: #{tpu_custom_call.1} parent=71 // pred_check
          %p887 = pneg %p886
        $region126: #{tpu_custom_call.1} parent=71 // pred_check_branch
          %889 = sbr.rel (%p887) target = $region128
        $region127: #{tpu_custom_call.1} parent=71 // pred_region
          %v890 = vld [vmem:[%s690] sm:$0xff]
          %v891 = vld [vmem:[%s690 + $0x8] sm:$0xff]
          %v892 = vld [vmem:[%s690 + $0x10] sm:$0xff]
          %vm893 = vcmask 261120
          %894 = vst.msk [vmem:[#allocation2] sm:$0xff] %vm893, %v890
          %895 = vst.msk [vmem:[#allocation2 + $0x8] sm:$0xff] %vm893, %v891
          %896 = vst.msk [vmem:[#allocation2 + $0x10] sm:$0xff] %vm893, %v892
        $region128: #{tpu_custom_call.1} parent=71 // pred_fallthru
          _
        %v897 = vld [vmem:[#allocation2] sm:$0xff]
        %v898 = vld [vmem:[#allocation2 + $0x8] sm:$0xff]
        %v899 = vld [vmem:[#allocation2 + $0x10] sm:$0xff]
        %v900 = vld [vmem:[%s698] sm:$0x1]
        %v901 = vld [vmem:[%s706] sm:$0x1]
        %vm902 = vcmask 261120
        %v903 = vsel %vm902, %v897, 0.0
        %904 = vadd.xlane.f32.xlu0 %v903
        %v905 = vpop.xlane.xlu0 %904
        %v906 = vsel %vm902, %v898, 0.0
        %907 = vadd.xlane.f32.xlu0 %v906
        %v908 = vpop.xlane.xlu0 %907
        %v909 = vsel %vm902, %v899, 0.0
        %910 = vadd.xlane.f32.xlu0 %v909
        %v911 = vpop.xlane.xlu0 %910
        %v912 = vmul.f32 %v897, %v897
        %v913 = vmul.f32 %v898, %v898
        %v914 = vmul.f32 %v899, %v899
        %v915 = vsel %vm902, %v912, 0.0
        %916 = vadd.xlane.f32.xlu0 %v915
        %v917 = vpop.xlane.xlu0 %916
        %v918 = vsel %vm902, %v913, 0.0
        %919 = vadd.xlane.f32.xlu0 %v918
        %v920 = vpop.xlane.xlu0 %919
        %v921 = vsel %vm902, %v914, 0.0
        %922 = vadd.xlane.f32.xlu0 %v921
        %v923 = vpop.xlane.xlu0 %922
        %v924 = vmul.f32 %v905, 0.03125
        %v925 = vmul.f32 %v908, 0.03125
        %v926 = vmul.f32 %v911, 0.03125
        %v927 = vmul.f32 %v917, 0.03125
        %v928 = vmul.f32 %v920, 0.03125
        %v929 = vmul.f32 %v923, 0.03125
        %v930 = vmul.f32 %v924, %v924
        %v931 = vmul.f32 %v925, %v925
        %v932 = vmul.f32 %v926, %v926
        %v933 = vsub.f32 %v927, %v930
        %v934 = vsub.f32 %v928, %v931
        %v935 = vsub.f32 %v929, %v932
        %v936 = vmax.f32 %v933, 0.0
        %v937 = vmax.f32 %v934, 0.0
        %v938 = vmax.f32 %v935, 0.0
        %v939 = vsub.f32 %v897, %v924
        %v940 = vsub.f32 %v898, %v925
        %v941 = vsub.f32 %v899, %v926
        %v942 = vadd.f32 %v936, 1e-05
        %v943 = vadd.f32 %v937, 1e-05
        %v944 = vadd.f32 %v938, 1e-05
        %v945 = vrsqrt.pop %v942
        %v946 = vrsqrt.pop %v943
        %v947 = vrsqrt.pop %v944
        %v948 = vmul.f32 %v939, %v945
        %v949 = vmul.f32 %v940, %v946
        %v950 = vmul.f32 %v941, %v947
        %v952 = vlaneseq
        %v953 = vshrl.u32 %v952, 7
        %v954 = vsub.s32 0, %v953
        %v955 = vrot.slane %v900, %v954
        %v957 = vmul.f32 %v948, %v955
        %v958 = vmul.f32 %v949, %v955
        %v959 = vmul.f32 %v950, %v955
        %v961 = vlaneseq
        %v962 = vshrl.u32 %v961, 7
        %v963 = vsub.s32 0, %v962
        %v964 = vrot.slane %v901, %v963
        %v966 = vadd.f32 %v957, %v964
        %v967 = vadd.f32 %v958, %v964
        %v968 = vadd.f32 %v959, %v964
        %v969 = vpack.c.bf16 %v967, %v966
        %v970 = vpack.c.bf16 %v968, %v968
        %v971 = vld [vmem:[%s715] sm:$0xf]
        %v972 = vld [vmem:[%s715 + $0x4] sm:$0xf]
        %v973 = vld [vmem:[%s715 + $0x8] sm:$0xf]
        %v974 = vld [vmem:[%s715 + $0xc] sm:$0xf]
        %v975 = vld [vmem:[%s723] sm:$0x1]
        %v977 = vlaneseq
        %v978 = vshrl.u32 %v977, 7
        %v979 = vsub.s32 0, %v978
        %v980 = vrot.slane %v975, %v979
        %v986 = vunpack.c.l.b16 %v971
        %v987 = vunpack.c.l.b16 %v972
        %v988 = vunpack.c.l.b16 %v973
        %v989 = vunpack.c.l.b16 %v974
        %v990 = vpack.c.b16 %v987, %v986
        %v991 = vpack.c.b16 %v989, %v988
        %v995 = vsel %vm902, %v969, 0
        %v998 = vsel %vm902, %v970, 0
        %1000 = vmatprep.subr.bf16.mxu0 0
        %1001 = vmatpush1.bf16.msra.mxu0 %v990
        %1002 = vmatprep.subr.bf16.mxu0 0
        %1003 = vmatpush1.bf16.msra.mxu0 %v991
        %1004 = vmatprep.subr.bf16.mxu0 0
        %1005 = vmatpush1.bf16.msra.mxu0 0
        %1006 = vmatprep.subr.bf16.mxu0 0
        %1007 = vmatpush1.bf16.msra.mxu0 0
        %1008 = vmatprep.subr.bf16.mxu0 0
        %1009 = vmatpush1.bf16.msra.mxu0 0
        %1010 = vmatprep.subr.bf16.mxu0 0
        %1011 = vmatpush1.bf16.msra.mxu0 0
        %1012 = vmatprep.subr.bf16.mxu0 0
        %1013 = vmatpush1.bf16.msra.mxu0 0
        %1014 = vmatprep.subr.bf16.mxu0 0
        %1015 = vmatpush1.bf16.msra.mxu0 0
        %1016 = vmatprep.subr.bf16.mxu0 0
        %1017 = vmatpush1.bf16.msra.mxu0 0
        %1018 = vmatprep.subr.bf16.mxu0 0
        %1019 = vmatpush1.bf16.msra.mxu0 0
        %1020 = vmatprep.subr.bf16.mxu0 0
        %1021 = vmatpush1.bf16.msra.mxu0 0
        %1022 = vmatprep.subr.bf16.mxu0 0
        %1023 = vmatpush1.bf16.msra.mxu0 0
        %1024 = vmatprep.subr.bf16.mxu0 0
        %1025 = vmatpush1.bf16.msra.mxu0 0
        %1026 = vmatprep.subr.bf16.mxu0 0
        %1027 = vmatpush1.bf16.msra.mxu0 0
        %1028 = vmatprep.subr.bf16.mxu0 0
        %1029 = vmatpush1.bf16.msra.mxu0 0
        %1030 = vmatprep.subr.bf16.mxu0 0
        %1031 = vmatpush1.bf16.msra.mxu0 0
        %1032 = vmatprep.mubr.bf16.mxu0 0
        %1033 = vmatmul.mubr.bf16.gmra.mrb[0].mxu0 %v995
        %v1034 = vpop.f32.mrb[0].mxu0
        %v1035 = vadd.f32 %v980, %v1034
        %v1036 = vpop.f32.mrb[0].mxu0
        %v1037 = vpop.f32.mrb[0].mxu0
        %v1038 = vadd.f32 %v980, %v1037
        %v1039 = vpop.f32.mrb[0].mxu0
        %1040 = vmatprep.mubr.bf16.mxu0 0
        %1041 = vmatmul.mubr.bf16.gmra.mrb[0].mxu0 %v998
        %v1042 = vpop.f32.mrb[0].mxu0
        %v1043 = vadd.f32 %v980, %v1042
        %v1044 = vpop.f32.mrb[0].mxu0
        %v1045 = vpop.f32.mrb[0].mxu0
        %v1046 = vpop.f32.mrb[0].mxu0
        %1047 = vdwg.mxu0
        %v1048 = vlaneseq
        %v1049 = vshrl.u32 %v1048, 7
        %v1050 = vadd.s32 %v1049, 8
        %v1051 = vadd.s32 %v1049, 16
        %v1052 = vlaneseq
        %v1053 = vand.u32 %v1052, 127
        %vm1054 = vcmp.lt.s32.totalorder %v1053, 0
        %v1055 = vsub.s32 0, %v1053
        %v1056 = vsel %vm1054, %v1055, %v1053
        %v1057 = vshrl.u32 %v1056, 3
        %v1058 = vand.u32 %v1056, 7
        %v1059 = vsub.s32 0, %v1058
        %v1060 = vsel %vm1054, %v1059, %v1058
        %vm1061 = vcmp.ne.s32.totalorder %v1060, 0
        %vm1062 = vcmp.lt.s32.totalorder %v1060, 0
        %vm1063 = vmand %vm1062, %vm1061
        %v1064 = vadd.s32 %v1060, 8
        %v1065 = vsel %vm1063, %v1064, %v1060
        %vm1066 = vcmp.lt.s32.totalorder %v1049, 0
        %v1067 = vsub.s32 0, %v1049
        %v1068 = vsel %vm1066, %v1067, %v1049
        %v1069 = vshrl.u32 %v1068, 3
        %v1070 = vand.u32 %v1068, 7
        %v1071 = vsub.s32 0, %v1070
        %v1072 = vsel %vm1066, %v1071, %v1070
        %vm1073 = vcmp.lt.s32.totalorder %v1050, 0
        %v1074 = vsub.s32 0, %v1050
        %v1075 = vsel %vm1073, %v1074, %v1050
        %v1076 = vshrl.u32 %v1075, 3
        %v1077 = vand.u32 %v1075, 7
        %v1078 = vsub.s32 0, %v1077
        %v1079 = vsel %vm1073, %v1078, %v1077
        %vm1080 = vcmp.lt.s32.totalorder %v1051, 0
        %v1081 = vsub.s32 0, %v1051
        %v1082 = vsel %vm1080, %v1081, %v1051
        %v1083 = vshrl.u32 %v1082, 3
        %v1084 = vand.u32 %v1082, 7
        %v1085 = vsub.s32 0, %v1084
        %v1086 = vsel %vm1080, %v1085, %v1084
        %vm1087 = vcmp.ne.s32.totalorder %v1072, 0
        %vm1088 = vcmp.ne.s32.totalorder %v1079, 0
        %vm1089 = vcmp.ne.s32.totalorder %v1086, 0
        %vm1090 = vcmp.lt.s32.totalorder %v1072, 0
        %vm1091 = vcmp.lt.s32.totalorder %v1079, 0
        %vm1092 = vcmp.lt.s32.totalorder %v1086, 0
        %vm1093 = vmand %vm1090, %vm1087
        %vm1094 = vmand %vm1091, %vm1088
        %vm1095 = vmand %vm1092, %vm1089
        %v1096 = vadd.s32 %v1072, 8
        %v1097 = vadd.s32 %v1079, 8
        %v1098 = vadd.s32 %v1086, 8
        %v1099 = vsel %vm1093, %v1096, %v1072
        %v1100 = vsel %vm1094, %v1097, %v1079
        %v1101 = vsel %vm1095, %v1098, %v1086
        %vm1102 = vcmp.le.s32.totalorder %v1065, %v1099
        %vm1103 = vcmp.le.s32.totalorder %v1065, %v1100
        %vm1104 = vcmp.le.s32.totalorder %v1065, %v1101
        %v1105 = vpack.c.bf16 %v1038, %v1035
        %v1106 = vpack.c.bf16 %v1043, %v1043
        %1109 = vrot.lane.b32.xlu0 %v1105, 96
        %v1110 = vpop.permute.xlu0 %1109
        %1111 = vrot.lane.b32.xlu0 %v1106, 96
        %v1112 = vpop.permute.xlu0 %1111
        %vm1113 = vcmask 64512
        %v1115 = vsel %vm1113, %v1105, 0
        %v1118 = vsel %vm1113, %v1106, 0
        %v1121 = vsel %vm1113, %v1110, 0
        %v1124 = vsel %vm1113, %v1112, 0
        %1126 = vmatprep.subr.bf16.mxu0 0
        %1127 = vmatpush1.bf16.xpose.msra.mxu0 %v1121
        %1128 = vmatprep.subr.bf16.mxu0 0
        %1129 = vmatpush1.bf16.xpose.msra.mxu0 %v1124
        %1130 = vmatprep.subr.bf16.mxu0 0
        %1131 = vmatpush1.bf16.xpose.msra.mxu0 0
        %1132 = vmatprep.subr.bf16.mxu0 0
        %1133 = vmatpush1.bf16.xpose.msra.mxu0 0
        %1134 = vmatprep.subr.bf16.mxu0 0
        %1135 = vmatpush1.bf16.xpose.msra.mxu0 0
        %1136 = vmatprep.subr.bf16.mxu0 0
        %1137 = vmatpush1.bf16.xpose.msra.mxu0 0
        %1138 = vmatprep.subr.bf16.mxu0 0
        %1139 = vmatpush1.bf16.xpose.msra.mxu0 0
        %1140 = vmatprep.subr.bf16.mxu0 0
        %1141 = vmatpush1.bf16.xpose.msra.mxu0 0
        %1142 = vmatprep.subr.bf16.mxu0 0
        %1143 = vmatpush1.bf16.xpose.msra.mxu0 0
        %1144 = vmatprep.subr.bf16.mxu0 0
        %1145 = vmatpush1.bf16.xpose.msra.mxu0 0
        %1146 = vmatprep.subr.bf16.mxu0 0
        %1147 = vmatpush1.bf16.xpose.msra.mxu0 0
        %1148 = vmatprep.subr.bf16.mxu0 0
        %1149 = vmatpush1.bf16.xpose.msra.mxu0 0
        %1150 = vmatprep.subr.bf16.mxu0 0
        %1151 = vmatpush1.bf16.xpose.msra.mxu0 0
        %1152 = vmatprep.subr.bf16.mxu0 0
        %1153 = vmatpush1.bf16.xpose.msra.mxu0 0
        %1154 = vmatprep.subr.bf16.mxu0 0
        %1155 = vmatpush1.bf16.xpose.msra.mxu0 0
        %1156 = vmatprep.subr.bf16.mxu0 0
        %1157 = vmatpush1.bf16.xpose.msra.mxu0 0
        %1158 = vmatprep.mubr.bf16.mxu0 0
        %1159 = vmatmul.mubr.bf16.gmra.mrb[0].mxu0 %v1115
        %v1160 = vpop.f32.mrb[0].mxu0
        %v1161 = vadd.f32 0.0, %v1160
        %v1162 = vpop.f32.mrb[0].mxu0
        %v1163 = vpop.f32.mrb[0].mxu0
        %v1164 = vadd.f32 0.0, %v1163
        %v1165 = vpop.f32.mrb[0].mxu0
        %1166 = vmatprep.mubr.bf16.mxu0 0
        %1167 = vmatmul.mubr.bf16.gmra.mrb[0].mxu0 %v1118
        %v1168 = vpop.f32.mrb[0].mxu0
        %v1169 = vadd.f32 0.0, %v1168
        %v1170 = vpop.f32.mrb[0].mxu0
        %v1171 = vpop.f32.mrb[0].mxu0
        %v1172 = vpop.f32.mrb[0].mxu0
        %1173 = vdwg.mxu0
        %v1174 = vmul.f32 %v1161, 0.35355338
        %v1175 = vmul.f32 %v1164, 0.35355338
        %v1176 = vmul.f32 %v1169, 0.35355338
        %v1177 = vsel %vm1102, %v1174, -inf
        %v1178 = vsel %vm1103, %v1175, -inf
        %v1179 = vsel %vm1104, %v1176, -inf
        %vm1180 = vcmask 195584
        %v1181 = vsel %vm1180, %v1177, -inf
        %1182 = vmax.xlane.f32.xlu0 %v1181
        %v1183 = vpop.xlane.xlu0 %1182
        %v1184 = vsel %vm1180, %v1178, -inf
        %1185 = vmax.xlane.f32.xlu0 %v1184
        %v1186 = vpop.xlane.xlu0 %1185
        %v1187 = vsel %vm1180, %v1179, -inf
        %1188 = vmax.xlane.f32.xlu0 %v1187
        %v1189 = vpop.xlane.xlu0 %1188
        %v1190 = vsub.f32 %v1177, %v1183
        %v1191 = vsub.f32 %v1178, %v1186
        %v1192 = vsub.f32 %v1179, %v1189
        %v1193 = vmul.f32 %v1190, 1.442695
        %v1194 = vpow.pop %v1193
        %v1195 = vmul.f32 %v1191, 1.442695
        %v1196 = vpow.pop %v1195
        %v1197 = vmul.f32 %v1192, 1.442695
        %v1198 = vpow.pop %v1197
        %v1199 = vsel %vm1180, %v1194, 0.0
        %1200 = vadd.xlane.f32.xlu0 %v1199
        %v1201 = vpop.xlane.xlu0 %1200
        %v1202 = vsel %vm1180, %v1196, 0.0
        %1203 = vadd.xlane.f32.xlu0 %v1202
        %v1204 = vpop.xlane.xlu0 %1203
        %v1205 = vsel %vm1180, %v1198, 0.0
        %1206 = vadd.xlane.f32.xlu0 %v1205
        %v1207 = vpop.xlane.xlu0 %1206
        %v1208 = vrcp.pop %v1201
        %v1209 = vrcp.pop %v1204
        %v1210 = vrcp.pop %v1207
        %v1211 = vmul.f32 %v1194, %v1208
        %v1212 = vmul.f32 %v1196, %v1209
        %v1213 = vmul.f32 %v1198, %v1210
        %v1214 = vpack.c.bf16 %v1212, %v1211
        %v1215 = vpack.c.bf16 %v1213, %v1213
        %1216 = vrot.lane.b32.xlu0 %v1105, 64
        %v1217 = vpop.permute.xlu0 %1216
        %1218 = vrot.lane.b32.xlu0 %v1106, 64
        %v1219 = vpop.permute.xlu0 %1218
        %v1222 = vsel %vm1180, %v1214, 0
        %v1225 = vsel %vm1180, %v1215, 0
        %vm1227 = vcmask 1043456
        %v1229 = vsel %vm1227, %v1219, 0
        %1231 = vmatprep.subr.bf16.mxu0 0
        %1232 = vmatpush1.bf16.msra.mxu0 %v1217
        %1233 = vmatprep.subr.bf16.mxu0 0
        %1234 = vmatpush1.bf16.msra.mxu0 %v1229
        %1235 = vmatprep.subr.bf16.mxu0 0
        %1236 = vmatpush1.bf16.msra.mxu0 0
        %1237 = vmatprep.subr.bf16.mxu0 0
        %1238 = vmatpush1.bf16.msra.mxu0 0
        %1239 = vmatprep.subr.bf16.mxu0 0
        %1240 = vmatpush1.bf16.msra.mxu0 0
        %1241 = vmatprep.subr.bf16.mxu0 0
        %1242 = vmatpush1.bf16.msra.mxu0 0
        %1243 = vmatprep.subr.bf16.mxu0 0
        %1244 = vmatpush1.bf16.msra.mxu0 0
        %1245 = vmatprep.subr.bf16.mxu0 0
        %1246 = vmatpush1.bf16.msra.mxu0 0
        %1247 = vmatprep.subr.bf16.mxu0 0
        %1248 = vmatpush1.bf16.msra.mxu0 0
        %1249 = vmatprep.subr.bf16.mxu0 0
        %1250 = vmatpush1.bf16.msra.mxu0 0
        %1251 = vmatprep.subr.bf16.mxu0 0
        %1252 = vmatpush1.bf16.msra.mxu0 0
        %1253 = vmatprep.subr.bf16.mxu0 0
        %1254 = vmatpush1.bf16.msra.mxu0 0
        %1255 = vmatprep.subr.bf16.mxu0 0
        %1256 = vmatpush1.bf16.msra.mxu0 0
        %1257 = vmatprep.subr.bf16.mxu0 0
        %1258 = vmatpush1.bf16.msra.mxu0 0
        %1259 = vmatprep.subr.bf16.mxu0 0
        %1260 = vmatpush1.bf16.msra.mxu0 0
        %1261 = vmatprep.subr.bf16.mxu0 0
        %1262 = vmatpush1.bf16.msra.mxu0 0
        %1263 = vmatprep.mubr.bf16.mxu0 0
        %1264 = vmatmul.mubr.bf16.gmra.mrb[0].mxu0 %v1222
        %v1265 = vpop.f32.mrb[0].mxu0
        %v1266 = vadd.f32 0.0, %v1265
        %v1267 = vpop.f32.mrb[0].mxu0
        %v1268 = vpop.f32.mrb[0].mxu0
        %v1269 = vadd.f32 0.0, %v1268
        %v1270 = vpop.f32.mrb[0].mxu0
        %1271 = vmatprep.mubr.bf16.mxu0 0
        %1272 = vmatmul.mubr.bf16.gmra.mrb[0].mxu0 %v1225
        %v1273 = vpop.f32.mrb[0].mxu0
        %v1274 = vadd.f32 0.0, %v1273
        %v1275 = vpop.f32.mrb[0].mxu0
        %v1276 = vpop.f32.mrb[0].mxu0
        %v1277 = vpop.f32.mrb[0].mxu0
        %1278 = vdwg.mxu0
        %v1279 = vpack.c.bf16 %v1269, %v1266
        %v1280 = vpack.c.bf16 %v1274, %v1274
        %v1281 = vld [vmem:[%s732] sm:$0xf]
        %1282 = vrot.lane.b32.xlu0 %v1105, 120
        %v1283 = vpop.permute.xlu0 %1282
        %1284 = vrot.lane.b32.xlu0 %v1106, 120
        %v1285 = vpop.permute.xlu0 %1284
        %1286 = vrot.lane.b32.xlu0 %v1105, 88
        %v1287 = vpop.permute.xlu0 %1286
        %1288 = vrot.lane.b32.xlu0 %v1106, 88
        %v1289 = vpop.permute.xlu0 %1288
        %v1291 = vsel %vm1113, %v1283, 0
        %v1294 = vsel %vm1113, %v1285, 0
        %v1297 = vsel %vm1113, %v1287, 0
        %v1300 = vsel %vm1113, %v1289, 0
        %1302 = vmatprep.subr.bf16.mxu0 0
        %1303 = vmatpush1.bf16.xpose.msra.mxu0 %v1297
        %1304 = vmatprep.subr.bf16.mxu0 0
        %1305 = vmatpush1.bf16.xpose.msra.mxu0 %v1300
        %1306 = vmatprep.subr.bf16.mxu0 0
        %1307 = vmatpush1.bf16.xpose.msra.mxu0 0
        %1308 = vmatprep.subr.bf16.mxu0 0
        %1309 = vmatpush1.bf16.xpose.msra.mxu0 0
        %1310 = vmatprep.subr.bf16.mxu0 0
        %1311 = vmatpush1.bf16.xpose.msra.mxu0 0
        %1312 = vmatprep.subr.bf16.mxu0 0
        %1313 = vmatpush1.bf16.xpose.msra.mxu0 0
        %1314 = vmatprep.subr.bf16.mxu0 0
        %1315 = vmatpush1.bf16.xpose.msra.mxu0 0
        %1316 = vmatprep.subr.bf16.mxu0 0
        %1317 = vmatpush1.bf16.xpose.msra.mxu0 0
        %1318 = vmatprep.subr.bf16.mxu0 0
        %1319 = vmatpush1.bf16.xpose.msra.mxu0 0
        %1320 = vmatprep.subr.bf16.mxu0 0
        %1321 = vmatpush1.bf16.xpose.msra.mxu0 0
        %1322 = vmatprep.subr.bf16.mxu0 0
        %1323 = vmatpush1.bf16.xpose.msra.mxu0 0
        %1324 = vmatprep.subr.bf16.mxu0 0
        %1325 = vmatpush1.bf16.xpose.msra.mxu0 0
        %1326 = vmatprep.subr.bf16.mxu0 0
        %1327 = vmatpush1.bf16.xpose.msra.mxu0 0
        %1328 = vmatprep.subr.bf16.mxu0 0
        %1329 = vmatpush1.bf16.xpose.msra.mxu0 0
        %1330 = vmatprep.subr.bf16.mxu0 0
        %1331 = vmatpush1.bf16.xpose.msra.mxu0 0
        %1332 = vmatprep.subr.bf16.mxu0 0
        %1333 = vmatpush1.bf16.xpose.msra.mxu0 0
        %1334 = vmatprep.mubr.bf16.mxu0 0
        %1335 = vmatmul.mubr.bf16.gmra.mrb[0].mxu0 %v1291
        %v1336 = vpop.f32.mrb[0].mxu0
        %v1337 = vadd.f32 0.0, %v1336
        %v1338 = vpop.f32.mrb[0].mxu0
        %v1339 = vpop.f32.mrb[0].mxu0
        %v1340 = vadd.f32 0.0, %v1339
        %v1341 = vpop.f32.mrb[0].mxu0
        %1342 = vmatprep.mubr.bf16.mxu0 0
        %1343 = vmatmul.mubr.bf16.gmra.mrb[0].mxu0 %v1294
        %v1344 = vpop.f32.mrb[0].mxu0
        %v1345 = vadd.f32 0.0, %v1344
        %v1346 = vpop.f32.mrb[0].mxu0
        %v1347 = vpop.f32.mrb[0].mxu0
        %v1348 = vpop.f32.mrb[0].mxu0
        %1349 = vdwg.mxu0
        %v1350 = vmul.f32 %v1337, 0.35355338
        %v1351 = vmul.f32 %v1340, 0.35355338
        %v1352 = vmul.f32 %v1345, 0.35355338
        %v1353 = vsel %vm1102, %v1350, -inf
        %v1354 = vsel %vm1103, %v1351, -inf
        %v1355 = vsel %vm1104, %v1352, -inf
        %v1356 = vsel %vm1180, %v1353, -inf
        %1357 = vmax.xlane.f32.xlu0 %v1356
        %v1358 = vpop.xlane.xlu0 %1357
        %v1359 = vsel %vm1180, %v1354, -inf
        %1360 = vmax.xlane.f32.xlu0 %v1359
        %v1361 = vpop.xlane.xlu0 %1360
        %v1362 = vsel %vm1180, %v1355, -inf
        %1363 = vmax.xlane.f32.xlu0 %v1362
        %v1364 = vpop.xlane.xlu0 %1363
        %v1365 = vsub.f32 %v1353, %v1358
        %v1366 = vsub.f32 %v1354, %v1361
        %v1367 = vsub.f32 %v1355, %v1364
        %v1368 = vmul.f32 %v1365, 1.442695
        %v1369 = vpow.pop %v1368
        %v1370 = vmul.f32 %v1366, 1.442695
        %v1371 = vpow.pop %v1370
        %v1372 = vmul.f32 %v1367, 1.442695
        %v1373 = vpow.pop %v1372
        %v1374 = vsel %vm1180, %v1369, 0.0
        %1375 = vadd.xlane.f32.xlu0 %v1374
        %v1376 = vpop.xlane.xlu0 %1375
        %v1377 = vsel %vm1180, %v1371, 0.0
        %1378 = vadd.xlane.f32.xlu0 %v1377
        %v1379 = vpop.xlane.xlu0 %1378
        %v1380 = vsel %vm1180, %v1373, 0.0
        %1381 = vadd.xlane.f32.xlu0 %v1380
        %v1382 = vpop.xlane.xlu0 %1381
        %v1383 = vrcp.pop %v1376
        %v1384 = vrcp.pop %v1379
        %v1385 = vrcp.pop %v1382
        %v1386 = vmul.f32 %v1369, %v1383
        %v1387 = vmul.f32 %v1371, %v1384
        %v1388 = vmul.f32 %v1373, %v1385
        %v1389 = vpack.c.bf16 %v1387, %v1386
        %v1390 = vpack.c.bf16 %v1388, %v1388
        %1391 = vrot.lane.b32.xlu0 %v1105, 56
        %v1392 = vpop.permute.xlu0 %1391
        %1393 = vrot.lane.b32.xlu0 %v1106, 56
        %v1394 = vpop.permute.xlu0 %1393
        %v1397 = vsel %vm1180, %v1389, 0
        %v1400 = vsel %vm1180, %v1390, 0
        %v1403 = vsel %vm1227, %v1394, 0
        %1405 = vmatprep.subr.bf16.mxu0 0
        %1406 = vmatpush1.bf16.msra.mxu0 %v1392
        %1407 = vmatprep.subr.bf16.mxu0 0
        %1408 = vmatpush1.bf16.msra.mxu0 %v1403
        %1409 = vmatprep.subr.bf16.mxu0 0
        %1410 = vmatpush1.bf16.msra.mxu0 0
        %1411 = vmatprep.subr.bf16.mxu0 0
        %1412 = vmatpush1.bf16.msra.mxu0 0
        %1413 = vmatprep.subr.bf16.mxu0 0
        %1414 = vmatpush1.bf16.msra.mxu0 0
        %1415 = vmatprep.subr.bf16.mxu0 0
        %1416 = vmatpush1.bf16.msra.mxu0 0
        %1417 = vmatprep.subr.bf16.mxu0 0
        %1418 = vmatpush1.bf16.msra.mxu0 0
        %1419 = vmatprep.subr.bf16.mxu0 0
        %1420 = vmatpush1.bf16.msra.mxu0 0
        %1421 = vmatprep.subr.bf16.mxu0 0
        %1422 = vmatpush1.bf16.msra.mxu0 0
        %1423 = vmatprep.subr.bf16.mxu0 0
        %1424 = vmatpush1.bf16.msra.mxu0 0
        %1425 = vmatprep.subr.bf16.mxu0 0
        %1426 = vmatpush1.bf16.msra.mxu0 0
        %1427 = vmatprep.subr.bf16.mxu0 0
        %1428 = vmatpush1.bf16.msra.mxu0 0
        %1429 = vmatprep.subr.bf16.mxu0 0
        %1430 = vmatpush1.bf16.msra.mxu0 0
        %1431 = vmatprep.subr.bf16.mxu0 0
        %1432 = vmatpush1.bf16.msra.mxu0 0
        %1433 = vmatprep.subr.bf16.mxu0 0
        %1434 = vmatpush1.bf16.msra.mxu0 0
        %1435 = vmatprep.subr.bf16.mxu0 0
        %1436 = vmatpush1.bf16.msra.mxu0 0
        %1437 = vmatprep.mubr.bf16.mxu0 0
        %1438 = vmatmul.mubr.bf16.gmra.mrb[0].mxu0 %v1397
        %v1439 = vpop.f32.mrb[0].mxu0
        %v1440 = vadd.f32 0.0, %v1439
        %v1441 = vpop.f32.mrb[0].mxu0
        %v1442 = vpop.f32.mrb[0].mxu0
        %v1443 = vadd.f32 0.0, %v1442
        %v1444 = vpop.f32.mrb[0].mxu0
        %1445 = vmatprep.mubr.bf16.mxu0 0
        %1446 = vmatmul.mubr.bf16.gmra.mrb[0].mxu0 %v1400
        %v1447 = vpop.f32.mrb[0].mxu0
        %v1448 = vadd.f32 0.0, %v1447
        %v1449 = vpop.f32.mrb[0].mxu0
        %v1450 = vpop.f32.mrb[0].mxu0
        %v1451 = vpop.f32.mrb[0].mxu0
        %1452 = vdwg.mxu0
        %v1453 = vpack.c.bf16 %v1443, %v1440
        %v1454 = vpack.c.bf16 %v1448, %v1448
        %s1455 = scalar_lea.vmem %s732, 4 [#allocation12]
        %v1456 = vld [vmem:[%s1455] sm:$0xf]
        %v1458 = vsel %vm1113, %v1453, 0
        %v1461 = vsel %vm1113, %v1454, 0
        %v1464 = vsel %vm1227, %v1456, 0
        %1466 = vmatprep.subr.bf16.mxu0 0
        %1467 = vmatpush1.bf16.msra.mxu0 %v1464
        %1468 = vmatprep.subr.bf16.mxu0 0
        %1469 = vmatpush1.bf16.msra.mxu0 0
        %1470 = vmatprep.subr.bf16.mxu0 0
        %1471 = vmatpush1.bf16.msra.mxu0 0
        %1472 = vmatprep.subr.bf16.mxu0 0
        %1473 = vmatpush1.bf16.msra.mxu0 0
        %1474 = vmatprep.subr.bf16.mxu0 0
        %1475 = vmatpush1.bf16.msra.mxu0 0
        %1476 = vmatprep.subr.bf16.mxu0 0
        %1477 = vmatpush1.bf16.msra.mxu0 0
        %1478 = vmatprep.subr.bf16.mxu0 0
        %1479 = vmatpush1.bf16.msra.mxu0 0
        %1480 = vmatprep.subr.bf16.mxu0 0
        %1481 = vmatpush1.bf16.msra.mxu0 0
        %1482 = vmatprep.subr.bf16.mxu0 0
        %1483 = vmatpush1.bf16.msra.mxu0 0
        %1484 = vmatprep.subr.bf16.mxu0 0
        %1485 = vmatpush1.bf16.msra.mxu0 0
        %1486 = vmatprep.subr.bf16.mxu0 0
        %1487 = vmatpush1.bf16.msra.mxu0 0
        %1488 = vmatprep.subr.bf16.mxu0 0
        %1489 = vmatpush1.bf16.msra.mxu0 0
        %1490 = vmatprep.subr.bf16.mxu0 0
        %1491 = vmatpush1.bf16.msra.mxu0 0
        %1492 = vmatprep.subr.bf16.mxu0 0
        %1493 = vmatpush1.bf16.msra.mxu0 0
        %1494 = vmatprep.subr.bf16.mxu0 0
        %1495 = vmatpush1.bf16.msra.mxu0 0
        %1496 = vmatprep.subr.bf16.mxu0 0
        %1497 = vmatpush1.bf16.msra.mxu0 0
        %1498 = vmatprep.mubr.bf16.mxu0 0
        %1499 = vmatmul.mubr.bf16.gmra.mrb[0].mxu0 %v1458
        %v1500 = vpop.f32.mrb[0].mxu0
        %v1501 = vadd.f32 0.0, %v1500
        %v1502 = vpop.f32.mrb[0].mxu0
        %v1503 = vpop.f32.mrb[0].mxu0
        %v1504 = vadd.f32 0.0, %v1503
        %v1505 = vpop.f32.mrb[0].mxu0
        %1506 = vmatprep.mubr.bf16.mxu0 0
        %1507 = vmatmul.mubr.bf16.gmra.mrb[0].mxu0 %v1461
        %v1508 = vpop.f32.mrb[0].mxu0
        %v1509 = vadd.f32 0.0, %v1508
        %v1510 = vpop.f32.mrb[0].mxu0
        %v1511 = vpop.f32.mrb[0].mxu0
        %v1512 = vpop.f32.mrb[0].mxu0
        %1513 = vdwg.mxu0
        %v1515 = vsel %vm1113, %v1279, 0
        %v1518 = vsel %vm1113, %v1280, 0
        %v1521 = vsel %vm1227, %v1281, 0
        %1523 = vmatprep.subr.bf16.mxu0 0
        %1524 = vmatpush1.bf16.msra.mxu0 %v1521
        %1525 = vmatprep.subr.bf16.mxu0 0
        %1526 = vmatpush1.bf16.msra.mxu0 0
        %1527 = vmatprep.subr.bf16.mxu0 0
        %1528 = vmatpush1.bf16.msra.mxu0 0
        %1529 = vmatprep.subr.bf16.mxu0 0
        %1530 = vmatpush1.bf16.msra.mxu0 0
        %1531 = vmatprep.subr.bf16.mxu0 0
        %1532 = vmatpush1.bf16.msra.mxu0 0
        %1533 = vmatprep.subr.bf16.mxu0 0
        %1534 = vmatpush1.bf16.msra.mxu0 0
        %1535 = vmatprep.subr.bf16.mxu0 0
        %1536 = vmatpush1.bf16.msra.mxu0 0
        %1537 = vmatprep.subr.bf16.mxu0 0
        %1538 = vmatpush1.bf16.msra.mxu0 0
        %1539 = vmatprep.subr.bf16.mxu0 0
        %1540 = vmatpush1.bf16.msra.mxu0 0
        %1541 = vmatprep.subr.bf16.mxu0 0
        %1542 = vmatpush1.bf16.msra.mxu0 0
        %1543 = vmatprep.subr.bf16.mxu0 0
        %1544 = vmatpush1.bf16.msra.mxu0 0
        %1545 = vmatprep.subr.bf16.mxu0 0
        %1546 = vmatpush1.bf16.msra.mxu0 0
        %1547 = vmatprep.subr.bf16.mxu0 0
        %1548 = vmatpush1.bf16.msra.mxu0 0
        %1549 = vmatprep.subr.bf16.mxu0 0
        %1550 = vmatpush1.bf16.msra.mxu0 0
        %1551 = vmatprep.subr.bf16.mxu0 0
        %1552 = vmatpush1.bf16.msra.mxu0 0
        %1553 = vmatprep.subr.bf16.mxu0 0
        %1554 = vmatpush1.bf16.msra.mxu0 0
        %1555 = vmatprep.mubr.bf16.mxu0 0
        %1556 = vmatmul.mubr.bf16.gmra.mrb[0].mxu0 %v1515
        %v1557 = vpop.f32.mrb[0].mxu0
        %v1558 = vadd.f32 %v1501, %v1557
        %v1559 = vpop.f32.mrb[0].mxu0
        %v1560 = vpop.f32.mrb[0].mxu0
        %v1561 = vadd.f32 %v1504, %v1560
        %v1562 = vpop.f32.mrb[0].mxu0
        %1563 = vmatprep.mubr.bf16.mxu0 0
        %1564 = vmatmul.mubr.bf16.gmra.mrb[0].mxu0 %v1518
        %v1565 = vpop.f32.mrb[0].mxu0
        %v1566 = vadd.f32 %v1509, %v1565
        %v1567 = vpop.f32.mrb[0].mxu0
        %v1568 = vpop.f32.mrb[0].mxu0
        %v1569 = vpop.f32.mrb[0].mxu0
        %1570 = vdwg.mxu0
        %1571 = vrot.lane.b32.xlu0 %v1105, 112
        %v1572 = vpop.permute.xlu0 %1571
        %1573 = vrot.lane.b32.xlu0 %v1106, 112
        %v1574 = vpop.permute.xlu0 %1573
        %1575 = vrot.lane.b32.xlu0 %v1105, 80
        %v1576 = vpop.permute.xlu0 %1575
        %1577 = vrot.lane.b32.xlu0 %v1106, 80
        %v1578 = vpop.permute.xlu0 %1577
        %v1580 = vsel %vm1113, %v1572, 0
        %v1583 = vsel %vm1113, %v1574, 0
        %v1586 = vsel %vm1113, %v1576, 0
        %v1589 = vsel %vm1113, %v1578, 0
        %1591 = vmatprep.subr.bf16.mxu0 0
        %1592 = vmatpush1.bf16.xpose.msra.mxu0 %v1586
        %1593 = vmatprep.subr.bf16.mxu0 0
        %1594 = vmatpush1.bf16.xpose.msra.mxu0 %v1589
        %1595 = vmatprep.subr.bf16.mxu0 0
        %1596 = vmatpush1.bf16.xpose.msra.mxu0 0
        %1597 = vmatprep.subr.bf16.mxu0 0
        %1598 = vmatpush1.bf16.xpose.msra.mxu0 0
        %1599 = vmatprep.subr.bf16.mxu0 0
        %1600 = vmatpush1.bf16.xpose.msra.mxu0 0
        %1601 = vmatprep.subr.bf16.mxu0 0
        %1602 = vmatpush1.bf16.xpose.msra.mxu0 0
        %1603 = vmatprep.subr.bf16.mxu0 0
        %1604 = vmatpush1.bf16.xpose.msra.mxu0 0
        %1605 = vmatprep.subr.bf16.mxu0 0
        %1606 = vmatpush1.bf16.xpose.msra.mxu0 0
        %1607 = vmatprep.subr.bf16.mxu0 0
        %1608 = vmatpush1.bf16.xpose.msra.mxu0 0
        %1609 = vmatprep.subr.bf16.mxu0 0
        %1610 = vmatpush1.bf16.xpose.msra.mxu0 0
        %1611 = vmatprep.subr.bf16.mxu0 0
        %1612 = vmatpush1.bf16.xpose.msra.mxu0 0
        %1613 = vmatprep.subr.bf16.mxu0 0
        %1614 = vmatpush1.bf16.xpose.msra.mxu0 0
        %1615 = vmatprep.subr.bf16.mxu0 0
        %1616 = vmatpush1.bf16.xpose.msra.mxu0 0
        %1617 = vmatprep.subr.bf16.mxu0 0
        %1618 = vmatpush1.bf16.xpose.msra.mxu0 0
        %1619 = vmatprep.subr.bf16.mxu0 0
        %1620 = vmatpush1.bf16.xpose.msra.mxu0 0
        %1621 = vmatprep.subr.bf16.mxu0 0
        %1622 = vmatpush1.bf16.xpose.msra.mxu0 0
        %1623 = vmatprep.mubr.bf16.mxu0 0
        %1624 = vmatmul.mubr.bf16.gmra.mrb[0].mxu0 %v1580
        %v1625 = vpop.f32.mrb[0].mxu0
        %v1626 = vadd.f32 0.0, %v1625
        %v1627 = vpop.f32.mrb[0].mxu0
        %v1628 = vpop.f32.mrb[0].mxu0
        %v1629 = vadd.f32 0.0, %v1628
        %v1630 = vpop.f32.mrb[0].mxu0
        %1631 = vmatprep.mubr.bf16.mxu0 0
        %1632 = vmatmul.mubr.bf16.gmra.mrb[0].mxu0 %v1583
        %v1633 = vpop.f32.mrb[0].mxu0
        %v1634 = vadd.f32 0.0, %v1633
        %v1635 = vpop.f32.mrb[0].mxu0
        %v1636 = vpop.f32.mrb[0].mxu0
        %v1637 = vpop.f32.mrb[0].mxu0
        %1638 = vdwg.mxu0
        %v1639 = vmul.f32 %v1626, 0.35355338
        %v1640 = vmul.f32 %v1629, 0.35355338
        %v1641 = vmul.f32 %v1634, 0.35355338
        %v1642 = vsel %vm1102, %v1639, -inf
        %v1643 = vsel %vm1103, %v1640, -inf
        %v1644 = vsel %vm1104, %v1641, -inf
        %v1645 = vsel %vm1180, %v1642, -inf
        %1646 = vmax.xlane.f32.xlu0 %v1645
        %v1647 = vpop.xlane.xlu0 %1646
        %v1648 = vsel %vm1180, %v1643, -inf
        %1649 = vmax.xlane.f32.xlu0 %v1648
        %v1650 = vpop.xlane.xlu0 %1649
        %v1651 = vsel %vm1180, %v1644, -inf
        %1652 = vmax.xlane.f32.xlu0 %v1651
        %v1653 = vpop.xlane.xlu0 %1652
        %v1654 = vsub.f32 %v1642, %v1647
        %v1655 = vsub.f32 %v1643, %v1650
        %v1656 = vsub.f32 %v1644, %v1653
        %v1657 = vmul.f32 %v1654, 1.442695
        %v1658 = vpow.pop %v1657
        %v1659 = vmul.f32 %v1655, 1.442695
        %v1660 = vpow.pop %v1659
        %v1661 = vmul.f32 %v1656, 1.442695
        %v1662 = vpow.pop %v1661
        %v1663 = vsel %vm1180, %v1658, 0.0
        %1664 = vadd.xlane.f32.xlu0 %v1663
        %v1665 = vpop.xlane.xlu0 %1664
        %v1666 = vsel %vm1180, %v1660, 0.0
        %1667 = vadd.xlane.f32.xlu0 %v1666
        %v1668 = vpop.xlane.xlu0 %1667
        %v1669 = vsel %vm1180, %v1662, 0.0
        %1670 = vadd.xlane.f32.xlu0 %v1669
        %v1671 = vpop.xlane.xlu0 %1670
        %v1672 = vrcp.pop %v1665
        %v1673 = vrcp.pop %v1668
        %v1674 = vrcp.pop %v1671
        %v1675 = vmul.f32 %v1658, %v1672
        %v1676 = vmul.f32 %v1660, %v1673
        %v1677 = vmul.f32 %v1662, %v1674
        %v1678 = vpack.c.bf16 %v1676, %v1675
        %v1679 = vpack.c.bf16 %v1677, %v1677
        %1680 = vrot.lane.b32.xlu0 %v1105, 48
        %v1681 = vpop.permute.xlu0 %1680
        %1682 = vrot.lane.b32.xlu0 %v1106, 48
        %v1683 = vpop.permute.xlu0 %1682
        %v1686 = vsel %vm1180, %v1678, 0
        %v1689 = vsel %vm1180, %v1679, 0
        %v1692 = vsel %vm1227, %v1683, 0
        %1694 = vmatprep.subr.bf16.mxu0 0
        %1695 = vmatpush1.bf16.msra.mxu0 %v1681
        %1696 = vmatprep.subr.bf16.mxu0 0
        %1697 = vmatpush1.bf16.msra.mxu0 %v1692
        %1698 = vmatprep.subr.bf16.mxu0 0
        %1699 = vmatpush1.bf16.msra.mxu0 0
        %1700 = vmatprep.subr.bf16.mxu0 0
        %1701 = vmatpush1.bf16.msra.mxu0 0
        %1702 = vmatprep.subr.bf16.mxu0 0
        %1703 = vmatpush1.bf16.msra.mxu0 0
        %1704 = vmatprep.subr.bf16.mxu0 0
        %1705 = vmatpush1.bf16.msra.mxu0 0
        %1706 = vmatprep.subr.bf16.mxu0 0
        %1707 = vmatpush1.bf16.msra.mxu0 0
        %1708 = vmatprep.subr.bf16.mxu0 0
        %1709 = vmatpush1.bf16.msra.mxu0 0
        %1710 = vmatprep.subr.bf16.mxu0 0
        %1711 = vmatpush1.bf16.msra.mxu0 0
        %1712 = vmatprep.subr.bf16.mxu0 0
        %1713 = vmatpush1.bf16.msra.mxu0 0
        %1714 = vmatprep.subr.bf16.mxu0 0
        %1715 = vmatpush1.bf16.msra.mxu0 0
        %1716 = vmatprep.subr.bf16.mxu0 0
        %1717 = vmatpush1.bf16.msra.mxu0 0
        %1718 = vmatprep.subr.bf16.mxu0 0
        %1719 = vmatpush1.bf16.msra.mxu0 0
        %1720 = vmatprep.subr.bf16.mxu0 0
        %1721 = vmatpush1.bf16.msra.mxu0 0
        %1722 = vmatprep.subr.bf16.mxu0 0
        %1723 = vmatpush1.bf16.msra.mxu0 0
        %1724 = vmatprep.subr.bf16.mxu0 0
        %1725 = vmatpush1.bf16.msra.mxu0 0
        %1726 = vmatprep.mubr.bf16.mxu0 0
        %1727 = vmatmul.mubr.bf16.gmra.mrb[0].mxu0 %v1686
        %v1728 = vpop.f32.mrb[0].mxu0
        %v1729 = vadd.f32 0.0, %v1728
        %v1730 = vpop.f32.mrb[0].mxu0
        %v1731 = vpop.f32.mrb[0].mxu0
        %v1732 = vadd.f32 0.0, %v1731
        %v1733 = vpop.f32.mrb[0].mxu0
        %1734 = vmatprep.mubr.bf16.mxu0 0
        %1735 = vmatmul.mubr.bf16.gmra.mrb[0].mxu0 %v1689
        %v1736 = vpop.f32.mrb[0].mxu0
        %v1737 = vadd.f32 0.0, %v1736
        %v1738 = vpop.f32.mrb[0].mxu0
        %v1739 = vpop.f32.mrb[0].mxu0
        %v1740 = vpop.f32.mrb[0].mxu0
        %1741 = vdwg.mxu0
        %v1742 = vpack.c.bf16 %v1732, %v1729
        %v1743 = vpack.c.bf16 %v1737, %v1737
        %s1744 = scalar_lea.vmem %s732, 8 [#allocation12]
        %v1745 = vld [vmem:[%s1744] sm:$0xf]
        %v1747 = vsel %vm1113, %v1742, 0
        %v1750 = vsel %vm1113, %v1743, 0
        %v1753 = vsel %vm1227, %v1745, 0
        %1755 = vmatprep.subr.bf16.mxu0 0
        %1756 = vmatpush1.bf16.msra.mxu0 %v1753
        %1757 = vmatprep.subr.bf16.mxu0 0
        %1758 = vmatpush1.bf16.msra.mxu0 0
        %1759 = vmatprep.subr.bf16.mxu0 0
        %1760 = vmatpush1.bf16.msra.mxu0 0
        %1761 = vmatprep.subr.bf16.mxu0 0
        %1762 = vmatpush1.bf16.msra.mxu0 0
        %1763 = vmatprep.subr.bf16.mxu0 0
        %1764 = vmatpush1.bf16.msra.mxu0 0
        %1765 = vmatprep.subr.bf16.mxu0 0
        %1766 = vmatpush1.bf16.msra.mxu0 0
        %1767 = vmatprep.subr.bf16.mxu0 0
        %1768 = vmatpush1.bf16.msra.mxu0 0
        %1769 = vmatprep.subr.bf16.mxu0 0
        %1770 = vmatpush1.bf16.msra.mxu0 0
        %1771 = vmatprep.subr.bf16.mxu0 0
        %1772 = vmatpush1.bf16.msra.mxu0 0
        %1773 = vmatprep.subr.bf16.mxu0 0
        %1774 = vmatpush1.bf16.msra.mxu0 0
        %1775 = vmatprep.subr.bf16.mxu0 0
        %1776 = vmatpush1.bf16.msra.mxu0 0
        %1777 = vmatprep.subr.bf16.mxu0 0
        %1778 = vmatpush1.bf16.msra.mxu0 0
        %1779 = vmatprep.subr.bf16.mxu0 0
        %1780 = vmatpush1.bf16.msra.mxu0 0
        %1781 = vmatprep.subr.bf16.mxu0 0
        %1782 = vmatpush1.bf16.msra.mxu0 0
        %1783 = vmatprep.subr.bf16.mxu0 0
        %1784 = vmatpush1.bf16.msra.mxu0 0
        %1785 = vmatprep.subr.bf16.mxu0 0
        %1786 = vmatpush1.bf16.msra.mxu0 0
        %1787 = vmatprep.mubr.bf16.mxu0 0
        %1788 = vmatmul.mubr.bf16.gmra.mrb[0].mxu0 %v1747
        %v1789 = vpop.f32.mrb[0].mxu0
        %v1790 = vadd.f32 0.0, %v1789
        %v1791 = vpop.f32.mrb[0].mxu0
        %v1792 = vpop.f32.mrb[0].mxu0
        %v1793 = vadd.f32 0.0, %v1792
        %v1794 = vpop.f32.mrb[0].mxu0
        %1795 = vmatprep.mubr.bf16.mxu0 0
        %1796 = vmatmul.mubr.bf16.gmra.mrb[0].mxu0 %v1750
        %v1797 = vpop.f32.mrb[0].mxu0
        %v1798 = vadd.f32 0.0, %v1797
        %v1799 = vpop.f32.mrb[0].mxu0
        %v1800 = vpop.f32.mrb[0].mxu0
        %v1801 = vpop.f32.mrb[0].mxu0
        %1802 = vdwg.mxu0
        %v1803 = vadd.f32 %v1558, %v1790
        %v1804 = vadd.f32 %v1561, %v1793
        %v1805 = vadd.f32 %v1566, %v1798
        %1806 = vrot.lane.b32.xlu0 %v1105, 104
        %v1807 = vpop.permute.xlu0 %1806
        %1808 = vrot.lane.b32.xlu0 %v1106, 104
        %v1809 = vpop.permute.xlu0 %1808
        %1810 = vrot.lane.b32.xlu0 %v1105, 72
        %v1811 = vpop.permute.xlu0 %1810
        %1812 = vrot.lane.b32.xlu0 %v1106, 72
        %v1813 = vpop.permute.xlu0 %1812
        %v1815 = vsel %vm1113, %v1807, 0
        %v1818 = vsel %vm1113, %v1809, 0
        %v1821 = vsel %vm1113, %v1811, 0
        %v1824 = vsel %vm1113, %v1813, 0
        %1826 = vmatprep.subr.bf16.mxu0 0
        %1827 = vmatpush1.bf16.xpose.msra.mxu0 %v1821
        %1828 = vmatprep.subr.bf16.mxu0 0
        %1829 = vmatpush1.bf16.xpose.msra.mxu0 %v1824
        %1830 = vmatprep.subr.bf16.mxu0 0
        %1831 = vmatpush1.bf16.xpose.msra.mxu0 0
        %1832 = vmatprep.subr.bf16.mxu0 0
        %1833 = vmatpush1.bf16.xpose.msra.mxu0 0
        %1834 = vmatprep.subr.bf16.mxu0 0
        %1835 = vmatpush1.bf16.xpose.msra.mxu0 0
        %1836 = vmatprep.subr.bf16.mxu0 0
        %1837 = vmatpush1.bf16.xpose.msra.mxu0 0
        %1838 = vmatprep.subr.bf16.mxu0 0
        %1839 = vmatpush1.bf16.xpose.msra.mxu0 0
        %1840 = vmatprep.subr.bf16.mxu0 0
        %1841 = vmatpush1.bf16.xpose.msra.mxu0 0
        %1842 = vmatprep.subr.bf16.mxu0 0
        %1843 = vmatpush1.bf16.xpose.msra.mxu0 0
        %1844 = vmatprep.subr.bf16.mxu0 0
        %1845 = vmatpush1.bf16.xpose.msra.mxu0 0
        %1846 = vmatprep.subr.bf16.mxu0 0
        %1847 = vmatpush1.bf16.xpose.msra.mxu0 0
        %1848 = vmatprep.subr.bf16.mxu0 0
        %1849 = vmatpush1.bf16.xpose.msra.mxu0 0
        %1850 = vmatprep.subr.bf16.mxu0 0
        %1851 = vmatpush1.bf16.xpose.msra.mxu0 0
        %1852 = vmatprep.subr.bf16.mxu0 0
        %1853 = vmatpush1.bf16.xpose.msra.mxu0 0
        %1854 = vmatprep.subr.bf16.mxu0 0
        %1855 = vmatpush1.bf16.xpose.msra.mxu0 0
        %1856 = vmatprep.subr.bf16.mxu0 0
        %1857 = vmatpush1.bf16.xpose.msra.mxu0 0
        %1858 = vmatprep.mubr.bf16.mxu0 0
        %1859 = vmatmul.mubr.bf16.gmra.mrb[0].mxu0 %v1815
        %v1860 = vpop.f32.mrb[0].mxu0
        %v1861 = vadd.f32 0.0, %v1860
        %v1862 = vpop.f32.mrb[0].mxu0
        %v1863 = vpop.f32.mrb[0].mxu0
        %v1864 = vadd.f32 0.0, %v1863
        %v1865 = vpop.f32.mrb[0].mxu0
        %1866 = vmatprep.mubr.bf16.mxu0 0
        %1867 = vmatmul.mubr.bf16.gmra.mrb[0].mxu0 %v1818
        %v1868 = vpop.f32.mrb[0].mxu0
        %v1869 = vadd.f32 0.0, %v1868
        %v1870 = vpop.f32.mrb[0].mxu0
        %v1871 = vpop.f32.mrb[0].mxu0
        %v1872 = vpop.f32.mrb[0].mxu0
        %1873 = vdwg.mxu0
        %v1874 = vmul.f32 %v1861, 0.35355338
        %v1875 = vmul.f32 %v1864, 0.35355338
        %v1876 = vmul.f32 %v1869, 0.35355338
        %v1877 = vsel %vm1102, %v1874, -inf
        %v1878 = vsel %vm1103, %v1875, -inf
        %v1879 = vsel %vm1104, %v1876, -inf
        %v1880 = vsel %vm1180, %v1877, -inf
        %1881 = vmax.xlane.f32.xlu0 %v1880
        %v1882 = vpop.xlane.xlu0 %1881
        %v1883 = vsel %vm1180, %v1878, -inf
        %1884 = vmax.xlane.f32.xlu0 %v1883
        %v1885 = vpop.xlane.xlu0 %1884
        %v1886 = vsel %vm1180, %v1879, -inf
        %1887 = vmax.xlane.f32.xlu0 %v1886
        %v1888 = vpop.xlane.xlu0 %1887
        %v1889 = vsub.f32 %v1877, %v1882
        %v1890 = vsub.f32 %v1878, %v1885
        %v1891 = vsub.f32 %v1879, %v1888
        %v1892 = vmul.f32 %v1889, 1.442695
        %v1893 = vpow.pop %v1892
        %v1894 = vmul.f32 %v1890, 1.442695
        %v1895 = vpow.pop %v1894
        %v1896 = vmul.f32 %v1891, 1.442695
        %v1897 = vpow.pop %v1896
        %v1898 = vsel %vm1180, %v1893, 0.0
        %1899 = vadd.xlane.f32.xlu0 %v1898
        %v1900 = vpop.xlane.xlu0 %1899
        %v1901 = vsel %vm1180, %v1895, 0.0
        %1902 = vadd.xlane.f32.xlu0 %v1901
        %v1903 = vpop.xlane.xlu0 %1902
        %v1904 = vsel %vm1180, %v1897, 0.0
        %1905 = vadd.xlane.f32.xlu0 %v1904
        %v1906 = vpop.xlane.xlu0 %1905
        %v1907 = vrcp.pop %v1900
        %v1908 = vrcp.pop %v1903
        %v1909 = vrcp.pop %v1906
        %v1910 = vmul.f32 %v1893, %v1907
        %v1911 = vmul.f32 %v1895, %v1908
        %v1912 = vmul.f32 %v1897, %v1909
        %v1913 = vpack.c.bf16 %v1911, %v1910
        %v1914 = vpack.c.bf16 %v1912, %v1912
        %1915 = vrot.lane.b32.xlu0 %v1105, 40
        %v1916 = vpop.permute.xlu0 %1915
        %1917 = vrot.lane.b32.xlu0 %v1106, 40
        %v1918 = vpop.permute.xlu0 %1917
        %v1921 = vsel %vm1180, %v1913, 0
        %v1924 = vsel %vm1180, %v1914, 0
        %v1927 = vsel %vm1227, %v1918, 0
        %1929 = vmatprep.subr.bf16.mxu0 0
        %1930 = vmatpush1.bf16.msra.mxu0 %v1916
        %1931 = vmatprep.subr.bf16.mxu0 0
        %1932 = vmatpush1.bf16.msra.mxu0 %v1927
        %1933 = vmatprep.subr.bf16.mxu0 0
        %1934 = vmatpush1.bf16.msra.mxu0 0
        %1935 = vmatprep.subr.bf16.mxu0 0
        %1936 = vmatpush1.bf16.msra.mxu0 0
        %1937 = vmatprep.subr.bf16.mxu0 0
        %1938 = vmatpush1.bf16.msra.mxu0 0
        %1939 = vmatprep.subr.bf16.mxu0 0
        %1940 = vmatpush1.bf16.msra.mxu0 0
        %1941 = vmatprep.subr.bf16.mxu0 0
        %1942 = vmatpush1.bf16.msra.mxu0 0
        %1943 = vmatprep.subr.bf16.mxu0 0
        %1944 = vmatpush1.bf16.msra.mxu0 0
        %1945 = vmatprep.subr.bf16.mxu0 0
        %1946 = vmatpush1.bf16.msra.mxu0 0
        %1947 = vmatprep.subr.bf16.mxu0 0
        %1948 = vmatpush1.bf16.msra.mxu0 0
        %1949 = vmatprep.subr.bf16.mxu0 0
        %1950 = vmatpush1.bf16.msra.mxu0 0
        %1951 = vmatprep.subr.bf16.mxu0 0
        %1952 = vmatpush1.bf16.msra.mxu0 0
        %1953 = vmatprep.subr.bf16.mxu0 0
        %1954 = vmatpush1.bf16.msra.mxu0 0
        %1955 = vmatprep.subr.bf16.mxu0 0
        %1956 = vmatpush1.bf16.msra.mxu0 0
        %1957 = vmatprep.subr.bf16.mxu0 0
        %1958 = vmatpush1.bf16.msra.mxu0 0
        %1959 = vmatprep.subr.bf16.mxu0 0
        %1960 = vmatpush1.bf16.msra.mxu0 0
        %1961 = vmatprep.mubr.bf16.mxu0 0
        %1962 = vmatmul.mubr.bf16.gmra.mrb[0].mxu0 %v1921
        %v1963 = vpop.f32.mrb[0].mxu0
        %v1964 = vadd.f32 0.0, %v1963
        %v1965 = vpop.f32.mrb[0].mxu0
        %v1966 = vpop.f32.mrb[0].mxu0
        %v1967 = vadd.f32 0.0, %v1966
        %v1968 = vpop.f32.mrb[0].mxu0
        %1969 = vmatprep.mubr.bf16.mxu0 0
        %1970 = vmatmul.mubr.bf16.gmra.mrb[0].mxu0 %v1924
        %v1971 = vpop.f32.mrb[0].mxu0
        %v1972 = vadd.f32 0.0, %v1971
        %v1973 = vpop.f32.mrb[0].mxu0
        %v1974 = vpop.f32.mrb[0].mxu0
        %v1975 = vpop.f32.mrb[0].mxu0
        %1976 = vdwg.mxu0
        %v1977 = vpack.c.bf16 %v1967, %v1964
        %v1978 = vpack.c.bf16 %v1972, %v1972
        %s1979 = scalar_lea.vmem %s732, 12 [#allocation12]
        %v1980 = vld [vmem:[%s1979] sm:$0xf]
        %v1982 = vsel %vm1113, %v1977, 0
        %v1985 = vsel %vm1113, %v1978, 0
        %v1988 = vsel %vm1227, %v1980, 0
        %1990 = vmatprep.subr.bf16.mxu0 0
        %1991 = vmatpush1.bf16.msra.mxu0 %v1988
        %1992 = vmatprep.subr.bf16.mxu0 0
        %1993 = vmatpush1.bf16.msra.mxu0 0
        %1994 = vmatprep.subr.bf16.mxu0 0
        %1995 = vmatpush1.bf16.msra.mxu0 0
        %1996 = vmatprep.subr.bf16.mxu0 0
        %1997 = vmatpush1.bf16.msra.mxu0 0
        %1998 = vmatprep.subr.bf16.mxu0 0
        %1999 = vmatpush1.bf16.msra.mxu0 0
        %2000 = vmatprep.subr.bf16.mxu0 0
        %2001 = vmatpush1.bf16.msra.mxu0 0
        %2002 = vmatprep.subr.bf16.mxu0 0
        %2003 = vmatpush1.bf16.msra.mxu0 0
        %2004 = vmatprep.subr.bf16.mxu0 0
        %2005 = vmatpush1.bf16.msra.mxu0 0
        %2006 = vmatprep.subr.bf16.mxu0 0
        %2007 = vmatpush1.bf16.msra.mxu0 0
        %2008 = vmatprep.subr.bf16.mxu0 0
        %2009 = vmatpush1.bf16.msra.mxu0 0
        %2010 = vmatprep.subr.bf16.mxu0 0
        %2011 = vmatpush1.bf16.msra.mxu0 0
        %2012 = vmatprep.subr.bf16.mxu0 0
        %2013 = vmatpush1.bf16.msra.mxu0 0
        %2014 = vmatprep.subr.bf16.mxu0 0
        %2015 = vmatpush1.bf16.msra.mxu0 0
        %2016 = vmatprep.subr.bf16.mxu0 0
        %2017 = vmatpush1.bf16.msra.mxu0 0
        %2018 = vmatprep.subr.bf16.mxu0 0
        %2019 = vmatpush1.bf16.msra.mxu0 0
        %2020 = vmatprep.subr.bf16.mxu0 0
        %2021 = vmatpush1.bf16.msra.mxu0 0
        %2022 = vmatprep.mubr.bf16.mxu0 0
        %2023 = vmatmul.mubr.bf16.gmra.mrb[0].mxu0 %v1982
        %v2024 = vpop.f32.mrb[0].mxu0
        %v2025 = vadd.f32 0.0, %v2024
        %v2026 = vpop.f32.mrb[0].mxu0
        %v2027 = vpop.f32.mrb[0].mxu0
        %v2028 = vadd.f32 0.0, %v2027
        %v2029 = vpop.f32.mrb[0].mxu0
        %2030 = vmatprep.mubr.bf16.mxu0 0
        %2031 = vmatmul.mubr.bf16.gmra.mrb[0].mxu0 %v1985
        %v2032 = vpop.f32.mrb[0].mxu0
        %v2033 = vadd.f32 0.0, %v2032
        %v2034 = vpop.f32.mrb[0].mxu0
        %v2035 = vpop.f32.mrb[0].mxu0
        %v2036 = vpop.f32.mrb[0].mxu0
        %2037 = vdwg.mxu0
        %v2038 = vadd.f32 %v1803, %v2025
        %v2039 = vadd.f32 %v1804, %v2028
        %v2040 = vadd.f32 %v1805, %v2033
        %v2041 = vadd.f32 %v897, %v2038
        %v2042 = vadd.f32 %v898, %v2039
        %v2043 = vadd.f32 %v899, %v2040
        %v2044 = vld [vmem:[%s740] sm:$0x1]
        %v2046 = vlaneseq
        %v2047 = vshrl.u32 %v2046, 7
        %v2048 = vsub.s32 0, %v2047
        %v2049 = vrot.slane %v2044, %v2048
        %v2051 = vadd.f32 %v2041, %v2049
        %v2052 = vadd.f32 %v2042, %v2049
        %v2053 = vadd.f32 %v2043, %v2049
        %v2054 = vld [vmem:[%s748] sm:$0x1]
        %v2055 = vld [vmem:[%s756] sm:$0x1]
        %v2056 = vsel %vm902, %v2051, 0.0
        %2057 = vadd.xlane.f32.xlu0 %v2056
        %v2058 = vpop.xlane.xlu0 %2057
        %v2059 = vsel %vm902, %v2052, 0.0
        %2060 = vadd.xlane.f32.xlu0 %v2059
        %v2061 = vpop.xlane.xlu0 %2060
        %v2062 = vsel %vm902, %v2053, 0.0
        %2063 = vadd.xlane.f32.xlu0 %v2062
        %v2064 = vpop.xlane.xlu0 %2063
        %v2065 = vmul.f32 %v2051, %v2051
        %v2066 = vmul.f32 %v2052, %v2052
        %v2067 = vmul.f32 %v2053, %v2053
        %v2068 = vsel %vm902, %v2065, 0.0
        %2069 = vadd.xlane.f32.xlu0 %v2068
        %v2070 = vpop.xlane.xlu0 %2069
        %v2071 = vsel %vm902, %v2066, 0.0
        %2072 = vadd.xlane.f32.xlu0 %v2071
        %v2073 = vpop.xlane.xlu0 %2072
        %v2074 = vsel %vm902, %v2067, 0.0
        %2075 = vadd.xlane.f32.xlu0 %v2074
        %v2076 = vpop.xlane.xlu0 %2075
        %v2077 = vmul.f32 %v2058, 0.03125
        %v2078 = vmul.f32 %v2061, 0.03125
        %v2079 = vmul.f32 %v2064, 0.03125
        %v2080 = vmul.f32 %v2070, 0.03125
        %v2081 = vmul.f32 %v2073, 0.03125
        %v2082 = vmul.f32 %v2076, 0.03125
        %v2083 = vmul.f32 %v2077, %v2077
        %v2084 = vmul.f32 %v2078, %v2078
        %v2085 = vmul.f32 %v2079, %v2079
        %v2086 = vsub.f32 %v2080, %v2083
        %v2087 = vsub.f32 %v2081, %v2084
        %v2088 = vsub.f32 %v2082, %v2085
        %v2089 = vmax.f32 %v2086, 0.0
        %v2090 = vmax.f32 %v2087, 0.0
        %v2091 = vmax.f32 %v2088, 0.0
        %v2092 = vsub.f32 %v2051, %v2077
        %v2093 = vsub.f32 %v2052, %v2078
        %v2094 = vsub.f32 %v2053, %v2079
        %v2095 = vadd.f32 %v2089, 1e-05
        %v2096 = vadd.f32 %v2090, 1e-05
        %v2097 = vadd.f32 %v2091, 1e-05
        %v2098 = vrsqrt.pop %v2095
        %v2099 = vrsqrt.pop %v2096
        %v2100 = vrsqrt.pop %v2097
        %v2101 = vmul.f32 %v2092, %v2098
        %v2102 = vmul.f32 %v2093, %v2099
        %v2103 = vmul.f32 %v2094, %v2100
        %v2105 = vlaneseq
        %v2106 = vshrl.u32 %v2105, 7
        %v2107 = vsub.s32 0, %v2106
        %v2108 = vrot.slane %v2054, %v2107
        %v2110 = vmul.f32 %v2101, %v2108
        %v2111 = vmul.f32 %v2102, %v2108
        %v2112 = vmul.f32 %v2103, %v2108
        %v2114 = vlaneseq
        %v2115 = vshrl.u32 %v2114, 7
        %v2116 = vsub.s32 0, %v2115
        %v2117 = vrot.slane %v2055, %v2116
        %v2119 = vadd.f32 %v2110, %v2117
        %v2120 = vadd.f32 %v2111, %v2117
        %v2121 = vadd.f32 %v2112, %v2117
        %v2122 = vpack.c.bf16 %v2120, %v2119
        %v2123 = vpack.c.bf16 %v2121, %v2121
        %v2124 = vld [vmem:[%s765] sm:$0xf]
        %v2125 = vld [vmem:[%s765 + $0x4] sm:$0xf]
        %v2126 = vld [vmem:[%s765 + $0x8] sm:$0xf]
        %v2127 = vld [vmem:[%s765 + $0xc] sm:$0xf]
        %v2128 = vld [vmem:[%s773] sm:$0x1]
        %v2130 = vlaneseq
        %v2131 = vshrl.u32 %v2130, 7
        %v2132 = vsub.s32 0, %v2131
        %v2133 = vrot.slane %v2128, %v2132
        %v2139 = vunpack.c.l.b16 %v2124
        %v2140 = vunpack.c.l.b16 %v2125
        %v2141 = vunpack.c.l.b16 %v2126
        %v2142 = vunpack.c.l.b16 %v2127
        %v2143 = vpack.c.b16 %v2140, %v2139
        %v2144 = vpack.c.b16 %v2142, %v2141
        %v2148 = vsel %vm902, %v2122, 0
        %v2151 = vsel %vm902, %v2123, 0
        %2153 = vmatprep.subr.bf16.mxu0 0
        %2154 = vmatpush1.bf16.msra.mxu0 %v2143
        %2155 = vmatprep.subr.bf16.mxu0 0
        %2156 = vmatpush1.bf16.msra.mxu0 %v2144
        %2157 = vmatprep.subr.bf16.mxu0 0
        %2158 = vmatpush1.bf16.msra.mxu0 0
        %2159 = vmatprep.subr.bf16.mxu0 0
        %2160 = vmatpush1.bf16.msra.mxu0 0
        %2161 = vmatprep.subr.bf16.mxu0 0
        %2162 = vmatpush1.bf16.msra.mxu0 0
        %2163 = vmatprep.subr.bf16.mxu0 0
        %2164 = vmatpush1.bf16.msra.mxu0 0
        %2165 = vmatprep.subr.bf16.mxu0 0
        %2166 = vmatpush1.bf16.msra.mxu0 0
        %2167 = vmatprep.subr.bf16.mxu0 0
        %2168 = vmatpush1.bf16.msra.mxu0 0
        %2169 = vmatprep.subr.bf16.mxu0 0
        %2170 = vmatpush1.bf16.msra.mxu0 0
        %2171 = vmatprep.subr.bf16.mxu0 0
        %2172 = vmatpush1.bf16.msra.mxu0 0
        %2173 = vmatprep.subr.bf16.mxu0 0
        %2174 = vmatpush1.bf16.msra.mxu0 0
        %2175 = vmatprep.subr.bf16.mxu0 0
        %2176 = vmatpush1.bf16.msra.mxu0 0
        %2177 = vmatprep.subr.bf16.mxu0 0
        %2178 = vmatpush1.bf16.msra.mxu0 0
        %2179 = vmatprep.subr.bf16.mxu0 0
        %2180 = vmatpush1.bf16.msra.mxu0 0
        %2181 = vmatprep.subr.bf16.mxu0 0
        %2182 = vmatpush1.bf16.msra.mxu0 0
        %2183 = vmatprep.subr.bf16.mxu0 0
        %2184 = vmatpush1.bf16.msra.mxu0 0
        %2185 = vmatprep.mubr.bf16.mxu0 0
        %2186 = vmatmul.mubr.bf16.gmra.mrb[0].mxu0 %v2148
        %v2187 = vpop.f32.mrb[0].mxu0
        %v2188 = vadd.f32 %v2133, %v2187
        %v2189 = vpop.f32.mrb[0].mxu0
        %v2190 = vpop.f32.mrb[0].mxu0
        %v2191 = vadd.f32 %v2133, %v2190
        %v2192 = vpop.f32.mrb[0].mxu0
        %2193 = vmatprep.mubr.bf16.mxu0 0
        %2194 = vmatmul.mubr.bf16.gmra.mrb[0].mxu0 %v2151
        %v2195 = vpop.f32.mrb[0].mxu0
        %v2196 = vadd.f32 %v2133, %v2195
        %v2197 = vpop.f32.mrb[0].mxu0
        %v2198 = vpop.f32.mrb[0].mxu0
        %v2199 = vpop.f32.mrb[0].mxu0
        %2200 = vdwg.mxu0
        %v2201 = vmul.f32 %v2188, 0.5
        %v2202 = vmul.f32 %v2191, 0.5
        %v2203 = vmul.f32 %v2196, 0.5
        %v2204 = vmul.f32 %v2188, 0.70710677
        %v2205 = vmul.f32 %v2191, 0.70710677
        %v2206 = vmul.f32 %v2196, 0.70710677
        %vm2207 = vcmp.lt.f32.partialorder %v2204, 0.0
        %vm2208 = vcmp.lt.f32.partialorder %v2205, 0.0
        %vm2209 = vcmp.lt.f32.partialorder %v2206, 0.0
        %v2210 = vsel %vm2207, -1.0, 1.0
        %v2211 = vsel %vm2208, -1.0, 1.0
        %v2212 = vsel %vm2209, -1.0, 1.0
        %v2213 = vand.u32 2147483647, %v2204
        %v2214 = vand.u32 2147483647, %v2205
        %v2215 = vand.u32 2147483647, %v2206
        %v2216 = vmul.f32 %v2213, 0.3275911
        %v2217 = vmul.f32 %v2214, 0.3275911
        %v2218 = vmul.f32 %v2215, 0.3275911
        %v2219 = vadd.f32 %v2216, 1.0
        %v2220 = vadd.f32 %v2217, 1.0
        %v2221 = vadd.f32 %v2218, 1.0
        %v2222 = vrcp.pop %v2219
        %v2223 = vrcp.pop %v2220
        %v2224 = vrcp.pop %v2221
        %v2225 = vmul.f32 %v2222, 1.0614054
        %v2226 = vmul.f32 %v2223, 1.0614054
        %v2227 = vmul.f32 %v2224, 1.0614054
        %v2228 = vadd.f32 %v2225, -1.4531521
        %v2229 = vadd.f32 %v2226, -1.4531521
        %v2230 = vadd.f32 %v2227, -1.4531521
        %v2231 = vmul.f32 %v2228, %v2222
        %v2232 = vmul.f32 %v2229, %v2223
        %v2233 = vmul.f32 %v2230, %v2224
        %v2234 = vadd.f32 %v2231, 1.4214138
        %v2235 = vadd.f32 %v2232, 1.4214138
        %v2236 = vadd.f32 %v2233, 1.4214138
        %v2237 = vmul.f32 %v2234, %v2222
        %v2238 = vmul.f32 %v2235, %v2223
        %v2239 = vmul.f32 %v2236, %v2224
        %v2240 = vadd.f32 %v2237, -0.28449672
        %v2241 = vadd.f32 %v2238, -0.28449672
        %v2242 = vadd.f32 %v2239, -0.28449672
        %v2243 = vmul.f32 %v2240, %v2222
        %v2244 = vmul.f32 %v2241, %v2223
        %v2245 = vmul.f32 %v2242, %v2224
        %v2246 = vadd.f32 %v2243, 0.2548296
        %v2247 = vadd.f32 %v2244, 0.2548296
        %v2248 = vadd.f32 %v2245, 0.2548296
        %v2249 = vmul.f32 %v2246, %v2222
        %v2250 = vmul.f32 %v2247, %v2223
        %v2251 = vmul.f32 %v2248, %v2224
        %v2252 = vsub.f32 0.0, %v2213
        %v2253 = vsub.f32 0.0, %v2214
        %v2254 = vsub.f32 0.0, %v2215
        %v2255 = vmul.f32 %v2252, %v2213
        %v2256 = vmul.f32 %v2253, %v2214
        %v2257 = vmul.f32 %v2254, %v2215
        %v2258 = vmul.f32 %v2255, 1.442695
        %v2259 = vpow.pop %v2258
        %v2260 = vmul.f32 %v2256, 1.442695
        %v2261 = vpow.pop %v2260
        %v2262 = vmul.f32 %v2257, 1.442695
        %v2263 = vpow.pop %v2262
        %v2264 = vmul.f32 %v2249, %v2259
        %v2265 = vmul.f32 %v2250, %v2261
        %v2266 = vmul.f32 %v2251, %v2263
        %v2267 = vsub.f32 1.0, %v2264
        %v2268 = vsub.f32 1.0, %v2265
        %v2269 = vsub.f32 1.0, %v2266
        %v2270 = vmul.f32 %v2210, %v2267
        %v2271 = vmul.f32 %v2211, %v2268
        %v2272 = vmul.f32 %v2212, %v2269
        %v2273 = vadd.f32 %v2270, 1.0
        %v2274 = vadd.f32 %v2271, 1.0
        %v2275 = vadd.f32 %v2272, 1.0
        %v2276 = vmul.f32 %v2201, %v2273
        %v2277 = vmul.f32 %v2202, %v2274
        %v2278 = vmul.f32 %v2203, %v2275
        %v2279 = vpack.c.bf16 %v2277, %v2276
        %v2280 = vpack.c.bf16 %v2278, %v2278
        %v2281 = vld [vmem:[%s782] sm:$0xf]
        %v2282 = vld [vmem:[%s782 + $0x4] sm:$0xf]
        %v2283 = vld [vmem:[%s782 + $0x8] sm:$0xf]
        %v2284 = vld [vmem:[%s782 + $0xc] sm:$0xf]
        %v2285 = vld [vmem:[%s782 + $0x10] sm:$0xf]
        %v2286 = vld [vmem:[%s782 + $0x14] sm:$0xf]
        %v2287 = vld [vmem:[%s782 + $0x18] sm:$0xf]
        %v2288 = vld [vmem:[%s782 + $0x1c] sm:$0xf]
        %v2289 = vld [vmem:[%s782 + $0x20] sm:$0xf]
        %v2290 = vld [vmem:[%s782 + $0x24] sm:$0xf]
        %v2291 = vld [vmem:[%s782 + $0x28] sm:$0xf]
        %v2292 = vld [vmem:[%s782 + $0x2c] sm:$0xf]
        %v2293 = vld [vmem:[%s782 + $0x30] sm:$0xf]
        %v2294 = vld [vmem:[%s782 + $0x34] sm:$0xf]
        %v2295 = vld [vmem:[%s782 + $0x38] sm:$0xf]
        %v2296 = vld [vmem:[%s782 + $0x3c] sm:$0xf]
        %v2297 = vld [vmem:[%s790] sm:$0x1]
        %v2299 = vlaneseq
        %v2300 = vshrl.u32 %v2299, 7
        %v2301 = vsub.s32 0, %v2300
        %v2302 = vrot.slane %v2297, %v2301
        %v2320 = vunpack.c.l.b16 %v2281
        %v2321 = vunpack.c.l.b16 %v2282
        %v2322 = vunpack.c.l.b16 %v2283
        %v2323 = vunpack.c.l.b16 %v2284
        %v2324 = vunpack.c.l.b16 %v2285
        %v2325 = vunpack.c.l.b16 %v2286
        %v2326 = vunpack.c.l.b16 %v2287
        %v2327 = vunpack.c.l.b16 %v2288
        %v2328 = vunpack.c.l.b16 %v2289
        %v2329 = vunpack.c.l.b16 %v2290
        %v2330 = vunpack.c.l.b16 %v2291
        %v2331 = vunpack.c.l.b16 %v2292
        %v2332 = vunpack.c.l.b16 %v2293
        %v2333 = vunpack.c.l.b16 %v2294
        %v2334 = vunpack.c.l.b16 %v2295
        %v2335 = vunpack.c.l.b16 %v2296
        %v2336 = vpack.c.b16 %v2321, %v2320
        %v2337 = vpack.c.b16 %v2323, %v2322
        %v2338 = vpack.c.b16 %v2325, %v2324
        %v2339 = vpack.c.b16 %v2327, %v2326
        %v2340 = vpack.c.b16 %v2329, %v2328
        %v2341 = vpack.c.b16 %v2331, %v2330
        %v2342 = vpack.c.b16 %v2333, %v2332
        %v2343 = vpack.c.b16 %v2335, %v2334
        %2352 = vmatprep.subr.bf16.mxu0 0
        %2353 = vmatpush1.bf16.msra.mxu0 %v2336
        %2354 = vmatprep.subr.bf16.mxu0 0
        %2355 = vmatpush1.bf16.msra.mxu0 %v2337
        %2356 = vmatprep.subr.bf16.mxu0 0
        %2357 = vmatpush1.bf16.msra.mxu0 %v2338
        %2358 = vmatprep.subr.bf16.mxu0 0
        %2359 = vmatpush1.bf16.msra.mxu0 %v2339
        %2360 = vmatprep.subr.bf16.mxu0 0
        %2361 = vmatpush1.bf16.msra.mxu0 %v2340
        %2362 = vmatprep.subr.bf16.mxu0 0
        %2363 = vmatpush1.bf16.msra.mxu0 %v2341
        %2364 = vmatprep.subr.bf16.mxu0 0
        %2365 = vmatpush1.bf16.msra.mxu0 %v2342
        %2366 = vmatprep.subr.bf16.mxu0 0
        %2367 = vmatpush1.bf16.msra.mxu0 %v2343
        %2368 = vmatprep.subr.bf16.mxu0 0
        %2369 = vmatpush1.bf16.msra.mxu0 0
        %2370 = vmatprep.subr.bf16.mxu0 0
        %2371 = vmatpush1.bf16.msra.mxu0 0
        %2372 = vmatprep.subr.bf16.mxu0 0
        %2373 = vmatpush1.bf16.msra.mxu0 0
        %2374 = vmatprep.subr.bf16.mxu0 0
        %2375 = vmatpush1.bf16.msra.mxu0 0
        %2376 = vmatprep.subr.bf16.mxu0 0
        %2377 = vmatpush1.bf16.msra.mxu0 0
        %2378 = vmatprep.subr.bf16.mxu0 0
        %2379 = vmatpush1.bf16.msra.mxu0 0
        %2380 = vmatprep.subr.bf16.mxu0 0
        %2381 = vmatpush1.bf16.msra.mxu0 0
        %2382 = vmatprep.subr.bf16.mxu0 0
        %2383 = vmatpush1.bf16.msra.mxu0 0
        %2384 = vmatprep.mubr.bf16.mxu0 0
        %2385 = vmatmul.mubr.bf16.gmra.mrb[0].mxu0 %v2279
        %v2386 = vpop.f32.mrb[0].mxu0
        %v2387 = vadd.f32 %v2302, %v2386
        %v2388 = vpop.f32.mrb[0].mxu0
        %v2389 = vpop.f32.mrb[0].mxu0
        %v2390 = vadd.f32 %v2302, %v2389
        %v2391 = vpop.f32.mrb[0].mxu0
        %2392 = vmatprep.mubr.bf16.mxu0 0
        %2393 = vmatmul.mubr.bf16.gmra.mrb[0].mxu0 %v2280
        %v2394 = vpop.f32.mrb[0].mxu0
        %v2395 = vadd.f32 %v2302, %v2394
        %v2396 = vpop.f32.mrb[0].mxu0
        %v2397 = vpop.f32.mrb[0].mxu0
        %v2398 = vpop.f32.mrb[0].mxu0
        %2399 = vdwg.mxu0
        %v2400 = vadd.f32 %v2051, %v2387
        %v2401 = vadd.f32 %v2052, %v2390
        %v2402 = vadd.f32 %v2053, %v2395
        %2403 = vst.msk [vmem:[#allocation2] sm:$0xff] %vm902, %v2400
        %2404 = vst.msk [vmem:[#allocation2 + $0x8] sm:$0xff] %vm902, %v2401
        %2405 = vst.msk [vmem:[#allocation2 + $0x10] sm:$0xff] %vm902, %v2402
        %p2406 = scmp.eq.s32.totalorder %s53, 1
        // Predicated region
        $region129: #{tpu_custom_call.1} parent=71 // pred_check
          %p2407 = pneg %p2406
        $region130: #{tpu_custom_call.1} parent=71 // pred_check_branch
          %2409 = sbr.rel (%p2407) target = $region132
        $region131: #{tpu_custom_call.1} parent=71 // pred_region
          %2410 = vst.msk [vmem:[%s884] sm:$0xff] %vm902, %v2400
          %2411 = vst.msk [vmem:[%s884 + $0x8] sm:$0xff] %vm902, %v2401
          %2412 = vst.msk [vmem:[%s884 + $0x10] sm:$0xff] %vm902, %v2402
        $region132: #{tpu_custom_call.1} parent=71 // pred_fallthru
          _
        %s2413 = sand.u32 %s406, 1
        %s2414 = scalar_lea.sflag [#allocation5], %s2413
        %s2415 = sand.u32 %s406, 1
        %s2416 = smul.addr %s2415, 24
        %s2417 = scalar_lea.vmem [#allocation24], %s2416
        // Predicated region
        $region133: #{tpu_custom_call.1} parent=71 // pred_check
          %p2418 = pneg %p416
        $region134: #{tpu_custom_call.1} parent=71 // pred_check_branch
          %2420 = sbr.rel (%p2418) target = $region136
        $region135: #{tpu_custom_call.1} parent=71 // pred_region
          %s2422 = ssub.s32 384, 384
          %2423 = vsyncadd %s2414, %s2422
          %s2424 = smul.addr %s52, 3
          %s2425 = smul.addr %s2424, 128
          %s2426 = scalar_lea.hbm %s13, %s2425
          %s2427 = sshll.u32 %s2417, 4
          %s2428 = int_to_ptr.vmem [resolvable:$true] %s2427
          %2433 = dma.vmem_to_hbm [thread:$0]  %s2428, 384, %s2426, %s2414, 128, 128, 8
        $region136: #{tpu_custom_call.1} parent=71 // pred_fallthru
          _
      $region72: #{tpu_custom_call.1} parent=5 // pred_fallthru
        _
      %p2434 = scmp.le.s32.totalorder 2, %s43
      // Predicated region
      $region137: #{tpu_custom_call.1} parent=5 // pred_check
        %p2435 = pneg %p2434
      $region138: #{tpu_custom_call.1} parent=5 // pred_check_branch
        %2437 = sbr.rel (%p2435) target = $region140
      $region139: #{tpu_custom_call.1} parent=5 // pred_region
        %s2438 = ssub.s32 %s43, 2
        // Predicated region
        $region141: #{tpu_custom_call.1} parent=139 // pred_check
          %p2439 = pneg %p422
        $region142: #{tpu_custom_call.1} parent=139 // pred_check_branch
          %2441 = sbr.rel (%p2439) target = $region144
        $region143: #{tpu_custom_call.1} parent=139 // pred_region
          %s2442 = sand.u32 %s407, 1
          %s2443 = scalar_lea.sflag [#allocation5], %s2442
          %s2444 = sand.u32 %s407, 1
          %s2445 = smul.addr %s2444, 24
          %s2446 = scalar_lea.vmem [#allocation24], %s2445
          %2447 = dma.done %s2443, 384
        $region144: #{tpu_custom_call.1} parent=139 // pred_fallthru
          _
      $region140: #{tpu_custom_call.1} parent=5 // pred_fallthru
        _
    $region6: #{tpu_custom_call.1} parent=1 // loop_footer
      %s47 = sadd.s32 1, %s43
    $region7: #{tpu_custom_call.1} parent=1 // loop_footer_branch
      %42 = sbr.rel target = $region3
    $region8: #{tpu_custom_call.1} parent=1 // loop_exit
      _
    %2448 = vsyncpa [#allocation4], 1
    %s2449 = scalar_lea.sflag [#allocation4], 1
    %2450 = vsyncpa %s2449, 1
    %2451 = vsyncpa [#allocation7], 1
    %s2452 = scalar_lea.sflag [#allocation7], 1
    %2453 = vsyncpa %s2452, 1
    %2454 = vsyncpa [#allocation10], 1
    %s2455 = scalar_lea.sflag [#allocation10], 1
    %2456 = vsyncpa %s2455, 1
    %2457 = vsyncpa [#allocation13], 1
    %s2458 = scalar_lea.sflag [#allocation13], 1
    %2459 = vsyncpa %s2458, 1
    %2460 = vsyncpa [#allocation16], 1
    %s2461 = scalar_lea.sflag [#allocation16], 1
    %2462 = vsyncpa %s2461, 1
    %2463 = vsyncpa [#allocation19], 1
    %s2464 = scalar_lea.sflag [#allocation19], 1
    %2465 = vsyncpa %s2464, 1
    %2466 = vsyncpa [#allocation22], 1
    %s2467 = scalar_lea.sflag [#allocation22], 1
    %2468 = vsyncpa %s2467, 1
    %2469 = vsyncpa [#allocation5], 1
    %s2470 = scalar_lea.sflag [#allocation5], 1
    %2471 = vsyncpa %s2470, 1

</llo_original>
